<compile_context>
chip_gen: v7x
topology: tpu7x:2x2x1
jax: 0.10.0
libtpu: 0.0.40
codegen_flags: <defaults>
</compile_context>

<pallas_src>
import jax
import jax.numpy as jnp
from jax import lax
from jax.experimental import pallas as pl
from jax.experimental.pallas import tpu as pltpu

LANE = 128


def _round_up(n, m):
    return ((n + m - 1) // m) * m


# ---------------------------------------------------------------------------
# Fused kernel: one grid step == one image (full NHWC plane).
# ---------------------------------------------------------------------------
def _bottleneck_kernel(x_ref, w1_ref, s1_ref, b1_ref,
                       w2_ref, s2_ref, b2_ref,
                       w3_ref, s3_ref, b3_ref,
                       o_ref, im2, acc):
    # Shapes (channel dims pre-padded to multiples of 128 on the host):
    #   x_ref : (1, H, W, Cp) f32          o_ref : (1, H, W, Cp) f32
    #   w1_ref: (Cp, Wp)      bf16         s1/b1 : (1, Wp) f32
    #   w2_ref: (3, 3*Wp, Wp) bf16         s2/b2 : (1, Wp) f32
    #   w3_ref: (Wp, Cp)      bf16         s3/b3 : (1, Cp) f32
    #   im2   : (H+2, W, 3*Wp) bf16 scratch (conv2 input, kx folded into lanes)
    #   acc   : (H*W, Wp)      f32  scratch (conv2 accumulator)
    _, H, W, Cp = x_ref.shape
    Wp = w1_ref.shape[1]
    cdt = w1_ref.dtype

    x2d = x_ref[0].reshape(H * W, Cp)               # f32, reused for residual

    # ---- conv1 (1x1) + bn1 + relu -----------------------------------------
    y1 = jnp.dot(x2d.astype(cdt), w1_ref[...],
                 preferred_element_type=jnp.float32)
    y1 = jnp.maximum(y1 * s1_ref[...] + b1_ref[...], 0.0)
    y1b = y1.reshape(H, W, Wp).astype(cdt)          # single f32 -> bf16 cast

    # ---- stage conv2 input: kx taps folded into the lane dim ----------------
    # im2[r, w, kx*Wp:(kx+1)*Wp] == zero-padded y1 at (row r-1, col w+kx-1).
    # Only the halo (2 rows + 2 column strips) is zeroed, every grid step.
    zrow = jnp.zeros((1, W, 3 * Wp), cdt)
    zcol = jnp.zeros((H, 1, Wp), cdt)
    im2[0:1, :, :] = zrow                           # top halo row
    im2[H + 1:H + 2, :, :] = zrow                   # bottom halo row
    im2[1:H + 1, :, Wp:2 * Wp] = y1b                # kx=1 (center), aligned
    im2[1:H + 1, 0:1, 0:Wp] = zcol                  # kx=0 halo column (w=0)
    im2[1:H + 1, 1:W, 0:Wp] = y1b[:, 0:W - 1, :]    # kx=0 (left neighbour)
    im2[1:H + 1, W - 1:W, 2 * Wp:3 * Wp] = zcol     # kx=2 halo column (w=W-1)
    im2[1:H + 1, 0:W - 1, 2 * Wp:3 * Wp] = y1b[:, 1:W, :]   # kx=2 (right)

    # ---- conv2 (3x3, stride 1) + bn2 + relu --------------------------------
    # Three lane-dense K=3*Wp MXU matmuls; 3 accumulator writes total.
    def win(ky):
        return im2[ky:ky + H, :, :].reshape(H * W, 3 * Wp)

    acc[...] = jnp.dot(win(0), w2_ref[0], preferred_element_type=jnp.float32)
    acc[...] += jnp.dot(win(1), w2_ref[1], preferred_element_type=jnp.float32)
    acc[...] += jnp.dot(win(2), w2_ref[2], preferred_element_type=jnp.float32)
    y2 = jnp.maximum(acc[...] * s2_ref[...] + b2_ref[...], 0.0)

    # ---- conv3 (1x1) + bn3 + residual add + relu (all lane-dense) ----------
    y3 = jnp.dot(y2.astype(cdt), w3_ref[...],
                 preferred_element_type=jnp.float32)
    out = jnp.maximum(y3 * s3_ref[...] + b3_ref[...] + x2d, 0.0)
    o_ref[...] = out.reshape(1, H, W, Cp).astype(o_ref.dtype)


# ---------------------------------------------------------------------------
# pallas_call wrapper (NHWC core + NCHW PyTorch-parity wrapper)
# ---------------------------------------------------------------------------
def bottleneck_forward_nhwc(x_nhwc, params):
    """Fused Bottleneck forward. x_nhwc: (N, H, W, Cin) float32.

    Returns NHWC with the channel dim padded to a multiple of 128; caller
    slices back to the logical channel count.
    """
    N, H, W, Cin = x_nhwc.shape
    cp = params["w1"].shape[0]          # padded in/out channels (== for stride-1)
    wp = params["w1"].shape[1]          # padded bottleneck width
    cdt = params["w1"].dtype
    assert cp % LANE == 0 and wp % LANE == 0
    assert params["w3"].shape == (wp, cp), "residual add needs out_ch == inplanes"
    assert Cin <= cp

    if Cin < cp:                        # lane-dense input (padded channels are 0)
        x_nhwc = jnp.pad(x_nhwc, ((0, 0), (0, 0), (0, 0), (0, cp - Cin)))

    def full(*shape):                   # whole-array block, resident across grid
        return pl.BlockSpec(shape, lambda n: (0,) * len(shape))

    grid_spec = pltpu.PrefetchScalarGridSpec(
        num_scalar_prefetch=0,
        grid=(N,),
        in_specs=[
            pl.BlockSpec((1, H, W, cp), lambda n: (n, 0, 0, 0)),    # x (per image)
            full(cp, wp),                                           # w1
            full(1, wp), full(1, wp),                               # s1, b1
            full(3, 3 * wp, wp),                                    # w2 (ky, kx*in, out)
            full(1, wp), full(1, wp),                               # s2, b2
            full(wp, cp),                                           # w3
            full(1, cp), full(1, cp),                               # s3, b3
        ],
        out_specs=pl.BlockSpec((1, H, W, cp), lambda n: (n, 0, 0, 0)),
        scratch_shapes=[
            pltpu.VMEM((H + 2, W, 3 * wp), cdt),                    # conv2 im2col (bf16)
            pltpu.VMEM((H * W, wp), jnp.float32),                   # conv2 accumulator
        ],
    )

    # VMEM budget: actual footprint + headroom, capped well under v7x's 64 MiB.
    bpc = jnp.dtype(cdt).itemsize
    est = (2 * 2 * (H * W * cp * 4)                                  # x/out blocks, 2x buffered
           + 2 * ((cp * wp + 3 * 3 * wp * wp + wp * cp) * bpc        # weights, 2x buffered
                  + (4 * wp + 2 * cp) * 4)                           # scales/biases
           + (H + 2) * W * 3 * wp * bpc                              # im2col scratch
           + H * W * wp * 4)                                         # acc scratch
    vmem_limit = int(min(max(est + (8 << 20), 16 << 20), 48 << 20))
    if est + (2 << 20) > vmem_limit:
        # TODO(synk): at this size an H-stripe grid axis is needed instead.
        vmem_limit = int(est + (2 << 20))

    return pl.pallas_call(
        _bottleneck_kernel,
        out_shape=jax.ShapeDtypeStruct((N, H, W, cp), x_nhwc.dtype),
        grid_spec=grid_spec,
        compiler_params=pltpu.CompilerParams(
            dimension_semantics=("parallel",),       # shard images across TCs (v7x)
            vmem_limit_bytes=vmem_limit),
    )(x_nhwc, params["w1"], params["s1"], params["b1"],
      params["w2"], params["s2"], params["b2"],
      params["w3"], params["s3"], params["b3"])


@jax.jit
def bottleneck_forward(x_nchw, params):
    # PyTorch-parity wrapper (NCHW in/out). In a full ResNet stack, keep the
    # activations NHWC (and channel-padded) end-to-end and call
    # bottleneck_forward_nhwc directly.
    cin = x_nchw.shape[1]
    x = jnp.transpose(x_nchw, (0, 2, 3, 1)).astype(jnp.float32)
    y = bottleneck_forward_nhwc(x, params)
    return jnp.transpose(y[..., :cin], (0, 3, 1, 2))


# ---------------------------------------------------------------------------
# Parameter construction (deterministic, synthetic) with folded eval-mode BN
# and lane-padded (multiples of 128) layouts.
# ---------------------------------------------------------------------------
def _fold_bn(gamma, beta, mean, var, eps=1e-5):
    scale = gamma / jnp.sqrt(var + eps)
    bias = beta - mean * scale
    return scale.astype(jnp.float32), bias.astype(jnp.float32)


def _pad_axis(a, axis, size):
    pad = [(0, 0)] * a.ndim
    pad[axis] = (0, size - a.shape[axis])
    return jnp.pad(a, pad)


def init_bottleneck_params(key, inplanes, planes, base_width=64, groups=1,
                           compute_dtype=jnp.bfloat16):
    width = int(planes * (base_width / 64.0)) * groups
    out_ch = planes * 4                                  # expansion = 4
    assert inplanes == out_ch, (
        "stride=1 / downsample=None Bottleneck needs inplanes == planes*4 "
        "(residual add requires out_ch == inplanes)")
    wp = _round_up(width, LANE)
    cp = _round_up(out_ch, LANE)                         # == padded inplanes

    ks = jax.random.split(key, 6)
    w1_t = 0.1 * jax.random.normal(ks[0], (width, inplanes, 1, 1), jnp.float32)
    w2_t = 0.1 * jax.random.normal(ks[1], (width, width, 3, 3), jnp.float32)
    w3_t = 0.1 * jax.random.normal(ks[2], (out_ch, width, 1, 1), jnp.float32)

    def bn(k, c):
        kg, kb, km, kv = jax.random.split(k, 4)
        gamma = 1.0 + 0.1 * jax.random.normal(kg, (c,), jnp.float32)
        beta = 0.1 * jax.random.normal(kb, (c,), jnp.float32)
        mean = 0.1 * jax.random.normal(km, (c,), jnp.float32)
        var = jnp.abs(0.1 * jax.random.normal(kv, (c,), jnp.float32)) + 0.9
        return _fold_bn(gamma, beta, mean, var)

    s1, b1 = bn(ks[3], width)
    s2, b2 = bn(ks[4], width)
    s3, b3 = bn(ks[5], out_ch)

    # torch (out,in,kh,kw) -> matmul layouts, zero-padded, bf16.
    w1 = jnp.transpose(w1_t[:, :, 0, 0], (1, 0))                 # (Cin, width)
    w1 = _pad_axis(_pad_axis(w1, 0, cp), 1, wp).astype(compute_dtype)

    w2 = jnp.transpose(w2_t, (2, 3, 1, 0))                       # (ky, kx, in, out)
    w2 = _pad_axis(_pad_axis(w2, 2, wp), 3, wp)                  # (3, 3, wp, wp)
    w2 = w2.reshape(3, 3 * wp, wp).astype(compute_dtype)         # kx folded into K

    w3 = jnp.transpose(w3_t[:, :, 0, 0], (1, 0))                 # (width, out_ch)
    w3 = _pad_axis(_pad_axis(w3, 0, wp), 1, cp).astype(compute_dtype)

    def pad_vec(v, n):  # zero scale/bias on padded channels -> they stay exactly 0
        return _pad_axis(v.reshape(1, -1), 1, n)

    return dict(w1=w1, s1=pad_vec(s1, wp), b1=pad_vec(b1, wp),
                w2=w2, s2=pad_vec(s2, wp), b2=pad_vec(b2, wp),
                w3=w3, s3=pad_vec(s3, cp), b3=pad_vec(b3, cp))


# ---------------------------------------------------------------------------
# Pure-JAX f32 reference (same folded/padded params) for validation.
# ---------------------------------------------------------------------------
def bottleneck_reference(x_nchw, params):
    x = jnp.transpose(x_nchw, (0, 2, 3, 1)).astype(jnp.float32)   # NHWC
    cin = x.shape[-1]
    w1 = params["w1"].astype(jnp.float32)                         # (cp, wp)
    cp, wp = w1.shape
    w2 = params["w2"].astype(jnp.float32).reshape(3, 3, wp, wp)   # HWIO
    w3 = params["w3"].astype(jnp.float32)

    xp = jnp.pad(x, ((0, 0), (0, 0), (0, 0), (0, cp - cin))) if cin < cp else x
    y = jnp.einsum("nhwc,cd->nhwd", xp, w1) * params["s1"][0] + params["b1"][0]
    y = jnp.maximum(y, 0.0)
    y = lax.conv_general_dilated(y, w2, window_strides=(1, 1), padding="SAME",
                                 dimension_numbers=("NHWC", "HWIO", "NHWC"))
    y = jnp.maximum(y * params["s2"][0] + params["b2"][0], 0.0)
    y = jnp.einsum("nhwc,cd->nhwd", y, w3) * params["s3"][0] + params["b3"][0]
    y = jnp.maximum(y[..., :cin] + x, 0.0)
    return jnp.transpose(y, (0, 3, 1, 2))


# ---------------------------------------------------------------------------
if __name__ == "__main__":
    key = jax.random.PRNGKey(0)
    k_x, k_p = jax.random.split(key)

    # Bottleneck(inplanes=16, planes=4): width=4, out_ch=16, stride=1, no downsample.
    inplanes, planes = 16, 4
    N, H, W = 2, 16, 16

    x = jax.random.normal(k_x, (N, inplanes, H, W), jnp.float32)   # NCHW (PyTorch)
    params = init_bottleneck_params(k_p, inplanes, planes)

    y = bottleneck_forward(x, params)
    jax.block_until_ready(y)

    assert y.shape == (N, planes * 4, H, W)
    assert bool(jnp.all(y >= 0.0))                                  # final ReLU

    # Correctness vs pure-JAX f32 reference (kernel uses bf16 matmuls, f32 acc).
    y_ref = bottleneck_reference(x, params)
    err = float(jnp.max(jnp.abs(y - y_ref)))
    assert err < 5e-2, f"max abs error vs reference too large: {err}"

    print("KERNEL_OK")
</pallas_src>

<mosaic_0001>
module attributes {stable_mosaic.version = 11 : i64} {
  func.func @_bottleneck_kernel(%arg0: i32, %arg1: memref<1x16x16x128xf32, #tpu.memory_space<vmem>>, %arg2: memref<128x128xbf16, #tpu.memory_space<vmem>>, %arg3: memref<1x128xf32, #tpu.memory_space<vmem>>, %arg4: memref<1x128xf32, #tpu.memory_space<vmem>>, %arg5: memref<3x384x128xbf16, #tpu.memory_space<vmem>>, %arg6: memref<1x128xf32, #tpu.memory_space<vmem>>, %arg7: memref<1x128xf32, #tpu.memory_space<vmem>>, %arg8: memref<128x128xbf16, #tpu.memory_space<vmem>>, %arg9: memref<1x128xf32, #tpu.memory_space<vmem>>, %arg10: memref<1x128xf32, #tpu.memory_space<vmem>>, %arg11: memref<1x16x16x128xf32, #tpu.memory_space<vmem>>, %arg12: memref<18x16x384xbf16, #tpu.memory_space<vmem>>, %arg13: memref<256x128xf32, #tpu.memory_space<vmem>>) attributes {dimension_semantics = [#tpu.dimension_semantics<parallel>], iteration_bounds = array<i64: 2>, scalar_prefetch = 0 : i64, scratch_operands = 2 : i64, tpu.core_type = #tpu.core_type<tc>, window_params = [{transform_indices = @transform_0, window_bounds = array<i64: 1, 16, 16, 128>}, {pipeline_mode = #tpu.pipeline_mode<synchronous>, transform_indices = @transform_1, window_bounds = array<i64: 128, 128>}, {pipeline_mode = #tpu.pipeline_mode<synchronous>, transform_indices = @transform_2, window_bounds = array<i64: 1, 128>}, {pipeline_mode = #tpu.pipeline_mode<synchronous>, transform_indices = @transform_3, window_bounds = array<i64: 1, 128>}, {pipeline_mode = #tpu.pipeline_mode<synchronous>, transform_indices = @transform_4, window_bounds = array<i64: 3, 384, 128>}, {pipeline_mode = #tpu.pipeline_mode<synchronous>, transform_indices = @transform_5, window_bounds = array<i64: 1, 128>}, {pipeline_mode = #tpu.pipeline_mode<synchronous>, transform_indices = @transform_6, window_bounds = array<i64: 1, 128>}, {pipeline_mode = #tpu.pipeline_mode<synchronous>, transform_indices = @transform_7, window_bounds = array<i64: 128, 128>}, {pipeline_mode = #tpu.pipeline_mode<synchronous>, transform_indices = @transform_8, window_bounds = array<i64: 1, 128>}, {pipeline_mode = #tpu.pipeline_mode<synchronous>, transform_indices = @transform_9, window_bounds = array<i64: 1, 128>}, {transform_indices = @transform_10, window_bounds = array<i64: 1, 16, 16, 128>}]} {
    %c0 = arith.constant 0 : index
    %c0_0 = arith.constant 0 : index
    %c0_1 = arith.constant 0 : index
    %c0_2 = arith.constant 0 : index
    %0 = vector.load %arg1[%c0, %c0_0, %c0_1, %c0_2] : memref<1x16x16x128xf32, #tpu.memory_space<vmem>>, vector<1x16x16x128xf32>
    %1 = vector.shape_cast %0 : vector<1x16x16x128xf32> to vector<16x16x128xf32>
    %2 = vector.shape_cast %1 : vector<16x16x128xf32> to vector<256x128xf32>
    %3 = arith.truncf %2 : vector<256x128xf32> to vector<256x128xbf16>
    %c0_3 = arith.constant 0 : index
    %c0_4 = arith.constant 0 : index
    %4 = vector.load %arg2[%c0_3, %c0_4] : memref<128x128xbf16, #tpu.memory_space<vmem>>, vector<128x128xbf16>
    %cst = arith.constant dense<0.000000e+00> : vector<256x128xf32>
    %5 = tpu.matmul %3, %4, %cst {dimension_numbers = #tpu.dot_dimension_numbers<[1], [0], [0], [1], [0, 0, 1, 1], [], []>} : vector<256x128xbf16>, vector<128x128xbf16>, vector<256x128xf32> -> vector<256x128xf32>
    %c0_5 = arith.constant 0 : index
    %c0_6 = arith.constant 0 : index
    %6 = vector.load %arg3[%c0_5, %c0_6] : memref<1x128xf32, #tpu.memory_space<vmem>>, vector<1x128xf32>
    %7 = vector.broadcast %6 : vector<1x128xf32> to vector<256x128xf32>
    %8 = arith.mulf %5, %7 : vector<256x128xf32>
    %c0_7 = arith.constant 0 : index
    %c0_8 = arith.constant 0 : index
    %9 = vector.load %arg4[%c0_7, %c0_8] : memref<1x128xf32, #tpu.memory_space<vmem>>, vector<1x128xf32>
    %10 = vector.broadcast %9 : vector<1x128xf32> to vector<256x128xf32>
    %11 = arith.addf %8, %10 : vector<256x128xf32>
    %cst_9 = arith.constant 0.000000e+00 : f32
    %12 = vector.broadcast %cst_9 : f32 to vector<256x128xf32>
    %13 = arith.maximumf %11, %12 : vector<256x128xf32>
    %14 = vector.shape_cast %13 : vector<256x128xf32> to vector<16x16x128xf32>
    %15 = arith.truncf %14 : vector<16x16x128xf32> to vector<16x16x128xbf16>
    %cst_10 = arith.constant 0.000000e+00 : bf16
    %16 = vector.broadcast %cst_10 : bf16 to vector<1x16x384xbf16>
    %cst_11 = arith.constant 0.000000e+00 : bf16
    %17 = vector.broadcast %cst_11 : bf16 to vector<16x1x128xbf16>
    %c0_12 = arith.constant 0 : index
    %c0_13 = arith.constant 0 : index
    %c0_14 = arith.constant 0 : index
    %18 = vector.load %arg12[%c0_12, %c0_13, %c0_14] : memref<18x16x384xbf16, #tpu.memory_space<vmem>>, vector<1x16x384xbf16>
    tpu.vector_store %arg12[%c0_12, %c0_13, %c0_14], %16 {strides = array<i32>} : memref<18x16x384xbf16, #tpu.memory_space<vmem>>, vector<1x16x384xbf16>,
    %c17 = arith.constant 17 : index
    %c0_15 = arith.constant 0 : index
    %c0_16 = arith.constant 0 : index
    %19 = vector.load %arg12[%c17, %c0_15, %c0_16] : memref<18x16x384xbf16, #tpu.memory_space<vmem>>, vector<1x16x384xbf16>
    tpu.vector_store %arg12[%c17, %c0_15, %c0_16], %16 {strides = array<i32>} : memref<18x16x384xbf16, #tpu.memory_space<vmem>>, vector<1x16x384xbf16>,
    %c1 = arith.constant 1 : index
    %c0_17 = arith.constant 0 : index
    %c128 = arith.constant 128 : index
    %20 = vector.load %arg12[%c1, %c0_17, %c128] : memref<18x16x384xbf16, #tpu.memory_space<vmem>>, vector<16x16x128xbf16>
    tpu.vector_store %arg12[%c1, %c0_17, %c128], %15 {strides = array<i32>} : memref<18x16x384xbf16, #tpu.memory_space<vmem>>, vector<16x16x128xbf16>,
    %c1_18 = arith.constant 1 : index
    %c0_19 = arith.constant 0 : index
    %c0_20 = arith.constant 0 : index
    %21 = vector.load %arg12[%c1_18, %c0_19, %c0_20] : memref<18x16x384xbf16, #tpu.memory_space<vmem>>, vector<16x1x128xbf16>
    tpu.vector_store %arg12[%c1_18, %c0_19, %c0_20], %17 {strides = array<i32>} : memref<18x16x384xbf16, #tpu.memory_space<vmem>>, vector<16x1x128xbf16>,
    %22 = vector.extract_strided_slice %15 {offsets = [0, 0, 0], sizes = [16, 15, 128], strides = [1, 1, 1]} : vector<16x16x128xbf16> to vector<16x15x128xbf16>
    %c1_21 = arith.constant 1 : index
    %c1_22 = arith.constant 1 : index
    %c0_23 = arith.constant 0 : index
    %23 = vector.load %arg12[%c1_21, %c1_22, %c0_23] : memref<18x16x384xbf16, #tpu.memory_space<vmem>>, vector<16x15x128xbf16>
    tpu.vector_store %arg12[%c1_21, %c1_22, %c0_23], %22 {strides = array<i32>} : memref<18x16x384xbf16, #tpu.memory_space<vmem>>, vector<16x15x128xbf16>,
    %c1_24 = arith.constant 1 : index
    %c15 = arith.constant 15 : index
    %c256 = arith.constant 256 : index
    %24 = vector.load %arg12[%c1_24, %c15, %c256] : memref<18x16x384xbf16, #tpu.memory_space<vmem>>, vector<16x1x128xbf16>
    tpu.vector_store %arg12[%c1_24, %c15, %c256], %17 {strides = array<i32>} : memref<18x16x384xbf16, #tpu.memory_space<vmem>>, vector<16x1x128xbf16>,
    %25 = vector.extract_strided_slice %15 {offsets = [0, 1, 0], sizes = [16, 15, 128], strides = [1, 1, 1]} : vector<16x16x128xbf16> to vector<16x15x128xbf16>
    %c1_25 = arith.constant 1 : index
    %c0_26 = arith.constant 0 : index
    %c256_27 = arith.constant 256 : index
    %26 = vector.load %arg12[%c1_25, %c0_26, %c256_27] : memref<18x16x384xbf16, #tpu.memory_space<vmem>>, vector<16x15x128xbf16>
    tpu.vector_store %arg12[%c1_25, %c0_26, %c256_27], %25 {strides = array<i32>} : memref<18x16x384xbf16, #tpu.memory_space<vmem>>, vector<16x15x128xbf16>,
    %c0_28 = arith.constant 0 : index
    %c0_29 = arith.constant 0 : index
    %c0_30 = arith.constant 0 : index
    %27 = vector.load %arg12[%c0_28, %c0_29, %c0_30] : memref<18x16x384xbf16, #tpu.memory_space<vmem>>, vector<16x16x384xbf16>
    %28 = vector.shape_cast %27 : vector<16x16x384xbf16> to vector<256x384xbf16>
    %c0_31 = arith.constant 0 : index
    %c0_32 = arith.constant 0 : index
    %c0_33 = arith.constant 0 : index
    %29 = vector.load %arg5[%c0_31, %c0_32, %c0_33] : memref<3x384x128xbf16, #tpu.memory_space<vmem>>, vector<1x384x128xbf16>
    %30 = vector.shape_cast %29 : vector<1x384x128xbf16> to vector<384x128xbf16>
    %cst_34 = arith.constant dense<0.000000e+00> : vector<256x128xf32>
    %31 = tpu.matmul %28, %30, %cst_34 {dimension_numbers = #tpu.dot_dimension_numbers<[1], [0], [0], [1], [0, 0, 1, 1], [], []>} : vector<256x384xbf16>, vector<384x128xbf16>, vector<256x128xf32> -> vector<256x128xf32>
    %c0_35 = arith.constant 0 : index
    %c0_36 = arith.constant 0 : index
    %32 = vector.load %arg13[%c0_35, %c0_36] : memref<256x128xf32, #tpu.memory_space<vmem>>, vector<256x128xf32>
    tpu.vector_store %arg13[%c0_35, %c0_36], %31 {strides = array<i32>} : memref<256x128xf32, #tpu.memory_space<vmem>>, vector<256x128xf32>,
    %c0_37 = arith.constant 0 : index
    %c0_38 = arith.constant 0 : index
    %33 = vector.load %arg13[%c0_37, %c0_38] : memref<256x128xf32, #tpu.memory_space<vmem>>, vector<256x128xf32>
    %c1_39 = arith.constant 1 : index
    %c0_40 = arith.constant 0 : index
    %c0_41 = arith.constant 0 : index
    %34 = vector.load %arg12[%c1_39, %c0_40, %c0_41] : memref<18x16x384xbf16, #tpu.memory_space<vmem>>, vector<16x16x384xbf16>
    %35 = vector.shape_cast %34 : vector<16x16x384xbf16> to vector<256x384xbf16>
    %c1_42 = arith.constant 1 : index
    %c0_43 = arith.constant 0 : index
    %c0_44 = arith.constant 0 : index
    %36 = vector.load %arg5[%c1_42, %c0_43, %c0_44] : memref<3x384x128xbf16, #tpu.memory_space<vmem>>, vector<1x384x128xbf16>
    %37 = vector.shape_cast %36 : vector<1x384x128xbf16> to vector<384x128xbf16>
    %cst_45 = arith.constant dense<0.000000e+00> : vector<256x128xf32>
    %38 = tpu.matmul %35, %37, %cst_45 {dimension_numbers = #tpu.dot_dimension_numbers<[1], [0], [0], [1], [0, 0, 1, 1], [], []>} : vector<256x384xbf16>, vector<384x128xbf16>, vector<256x128xf32> -> vector<256x128xf32>
    %39 = arith.addf %33, %38 : vector<256x128xf32>
    %c0_46 = arith.constant 0 : index
    %c0_47 = arith.constant 0 : index
    %40 = vector.load %arg13[%c0_46, %c0_47] : memref<256x128xf32, #tpu.memory_space<vmem>>, vector<256x128xf32>
    tpu.vector_store %arg13[%c0_46, %c0_47], %39 {strides = array<i32>} : memref<256x128xf32, #tpu.memory_space<vmem>>, vector<256x128xf32>,
    %c0_48 = arith.constant 0 : index
    %c0_49 = arith.constant 0 : index
    %41 = vector.load %arg13[%c0_48, %c0_49] : memref<256x128xf32, #tpu.memory_space<vmem>>, vector<256x128xf32>
    %c2 = arith.constant 2 : index
    %c0_50 = arith.constant 0 : index
    %c0_51 = arith.constant 0 : index
    %42 = vector.load %arg12[%c2, %c0_50, %c0_51] : memref<18x16x384xbf16, #tpu.memory_space<vmem>>, vector<16x16x384xbf16>
    %43 = vector.shape_cast %42 : vector<16x16x384xbf16> to vector<256x384xbf16>
    %c2_52 = arith.constant 2 : index
    %c0_53 = arith.constant 0 : index
    %c0_54 = arith.constant 0 : index
    %44 = vector.load %arg5[%c2_52, %c0_53, %c0_54] : memref<3x384x128xbf16, #tpu.memory_space<vmem>>, vector<1x384x128xbf16>
    %45 = vector.shape_cast %44 : vector<1x384x128xbf16> to vector<384x128xbf16>
    %cst_55 = arith.constant dense<0.000000e+00> : vector<256x128xf32>
    %46 = tpu.matmul %43, %45, %cst_55 {dimension_numbers = #tpu.dot_dimension_numbers<[1], [0], [0], [1], [0, 0, 1, 1], [], []>} : vector<256x384xbf16>, vector<384x128xbf16>, vector<256x128xf32> -> vector<256x128xf32>
    %47 = arith.addf %41, %46 : vector<256x128xf32>
    %c0_56 = arith.constant 0 : index
    %c0_57 = arith.constant 0 : index
    %48 = vector.load %arg13[%c0_56, %c0_57] : memref<256x128xf32, #tpu.memory_space<vmem>>, vector<256x128xf32>
    tpu.vector_store %arg13[%c0_56, %c0_57], %47 {strides = array<i32>} : memref<256x128xf32, #tpu.memory_space<vmem>>, vector<256x128xf32>,
    %c0_58 = arith.constant 0 : index
    %c0_59 = arith.constant 0 : index
    %49 = vector.load %arg13[%c0_58, %c0_59] : memref<256x128xf32, #tpu.memory_space<vmem>>, vector<256x128xf32>
    %c0_60 = arith.constant 0 : index
    %c0_61 = arith.constant 0 : index
    %50 = vector.load %arg6[%c0_60, %c0_61] : memref<1x128xf32, #tpu.memory_space<vmem>>, vector<1x128xf32>
    %51 = vector.broadcast %50 : vector<1x128xf32> to vector<256x128xf32>
    %52 = arith.mulf %49, %51 : vector<256x128xf32>
    %c0_62 = arith.constant 0 : index
    %c0_63 = arith.constant 0 : index
    %53 = vector.load %arg7[%c0_62, %c0_63] : memref<1x128xf32, #tpu.memory_space<vmem>>, vector<1x128xf32>
    %54 = vector.broadcast %53 : vector<1x128xf32> to vector<256x128xf32>
    %55 = arith.addf %52, %54 : vector<256x128xf32>
    %cst_64 = arith.constant 0.000000e+00 : f32
    %56 = vector.broadcast %cst_64 : f32 to vector<256x128xf32>
    %57 = arith.maximumf %55, %56 : vector<256x128xf32>
    %58 = arith.truncf %57 : vector<256x128xf32> to vector<256x128xbf16>
    %c0_65 = arith.constant 0 : index
    %c0_66 = arith.constant 0 : index
    %59 = vector.load %arg8[%c0_65, %c0_66] : memref<128x128xbf16, #tpu.memory_space<vmem>>, vector<128x128xbf16>
    %cst_67 = arith.constant dense<0.000000e+00> : vector<256x128xf32>
    %60 = tpu.matmul %58, %59, %cst_67 {dimension_numbers = #tpu.dot_dimension_numbers<[1], [0], [0], [1], [0, 0, 1, 1], [], []>} : vector<256x128xbf16>, vector<128x128xbf16>, vector<256x128xf32> -> vector<256x128xf32>
    %c0_68 = arith.constant 0 : index
    %c0_69 = arith.constant 0 : index
    %61 = vector.load %arg9[%c0_68, %c0_69] : memref<1x128xf32, #tpu.memory_space<vmem>>, vector<1x128xf32>
    %62 = vector.broadcast %61 : vector<1x128xf32> to vector<256x128xf32>
    %63 = arith.mulf %60, %62 : vector<256x128xf32>
    %c0_70 = arith.constant 0 : index
    %c0_71 = arith.constant 0 : index
    %64 = vector.load %arg10[%c0_70, %c0_71] : memref<1x128xf32, #tpu.memory_space<vmem>>, vector<1x128xf32>
    %65 = vector.broadcast %64 : vector<1x128xf32> to vector<256x128xf32>
    %66 = arith.addf %63, %65 : vector<256x128xf32>
    %67 = arith.addf %66, %2 : vector<256x128xf32>
    %cst_72 = arith.constant 0.000000e+00 : f32
    %68 = vector.broadcast %cst_72 : f32 to vector<256x128xf32>
    %69 = arith.maximumf %67, %68 : vector<256x128xf32>
    %70 = vector.shape_cast %69 : vector<256x128xf32> to vector<1x16x16x128xf32>
    %c0_73 = arith.constant 0 : index
    %c0_74 = arith.constant 0 : index
    %c0_75 = arith.constant 0 : index
    %c0_76 = arith.constant 0 : index
    %71 = vector.load %arg11[%c0_73, %c0_74, %c0_75, %c0_76] : memref<1x16x16x128xf32, #tpu.memory_space<vmem>>, vector<1x16x16x128xf32>
    tpu.vector_store %arg11[%c0_73, %c0_74, %c0_75, %c0_76], %70 {strides = array<i32>} : memref<1x16x16x128xf32, #tpu.memory_space<vmem>>, vector<1x16x16x128xf32>,
    return
  }
  func.func @transform_0(%arg0: i32) -> (i32, i32, i32, i32) {
    %c0_i32 = arith.constant 0 : i32
    %c0_i32_0 = arith.constant 0 : i32
    %c0_i32_1 = arith.constant 0 : i32
    %c0_i32_2 = arith.constant 0 : i32
    return %arg0, %c0_i32, %c0_i32_0, %c0_i32_1 : i32, i32, i32, i32
  }
  func.func @transform_1(%arg0: i32) -> (i32, i32) {
    %c0_i32 = arith.constant 0 : i32
    %c0_i32_0 = arith.constant 0 : i32
    %c0_i32_1 = arith.constant 0 : i32
    return %c0_i32, %c0_i32_0 : i32, i32
  }
  func.func @transform_2(%arg0: i32) -> (i32, i32) {
    %c0_i32 = arith.constant 0 : i32
    %c0_i32_0 = arith.constant 0 : i32
    %c0_i32_1 = arith.constant 0 : i32
    return %c0_i32, %c0_i32_0 : i32, i32
  }
  func.func @transform_3(%arg0: i32) -> (i32, i32) {
    %c0_i32 = arith.constant 0 : i32
    %c0_i32_0 = arith.constant 0 : i32
    %c0_i32_1 = arith.constant 0 : i32
    return %c0_i32, %c0_i32_0 : i32, i32
  }
  func.func @transform_4(%arg0: i32) -> (i32, i32, i32) {
    %c0_i32 = arith.constant 0 : i32
    %c0_i32_0 = arith.constant 0 : i32
    %c0_i32_1 = arith.constant 0 : i32
    %c0_i32_2 = arith.constant 0 : i32
    return %c0_i32, %c0_i32_0, %c0_i32_1 : i32, i32, i32
  }
  func.func @transform_5(%arg0: i32) -> (i32, i32) {
    %c0_i32 = arith.constant 0 : i32
    %c0_i32_0 = arith.constant 0 : i32
    %c0_i32_1 = arith.constant 0 : i32
    return %c0_i32, %c0_i32_0 : i32, i32
  }
  func.func @transform_6(%arg0: i32) -> (i32, i32) {
    %c0_i32 = arith.constant 0 : i32
    %c0_i32_0 = arith.constant 0 : i32
    %c0_i32_1 = arith.constant 0 : i32
    return %c0_i32, %c0_i32_0 : i32, i32
  }
  func.func @transform_7(%arg0: i32) -> (i32, i32) {
    %c0_i32 = arith.constant 0 : i32
    %c0_i32_0 = arith.constant 0 : i32
    %c0_i32_1 = arith.constant 0 : i32
    return %c0_i32, %c0_i32_0 : i32, i32
  }
  func.func @transform_8(%arg0: i32) -> (i32, i32) {
    %c0_i32 = arith.constant 0 : i32
    %c0_i32_0 = arith.constant 0 : i32
    %c0_i32_1 = arith.constant 0 : i32
    return %c0_i32, %c0_i32_0 : i32, i32
  }
  func.func @transform_9(%arg0: i32) -> (i32, i32) {
    %c0_i32 = arith.constant 0 : i32
    %c0_i32_0 = arith.constant 0 : i32
    %c0_i32_1 = arith.constant 0 : i32
    return %c0_i32, %c0_i32_0 : i32, i32
  }
  func.func @transform_10(%arg0: i32) -> (i32, i32, i32, i32) {
    %c0_i32 = arith.constant 0 : i32
    %c0_i32_0 = arith.constant 0 : i32
    %c0_i32_1 = arith.constant 0 : i32
    %c0_i32_2 = arith.constant 0 : i32
    return %arg0, %c0_i32, %c0_i32_0, %c0_i32_1 : i32, i32, i32, i32
  }
}

</mosaic_0001>

<llo_original>
// kernel: bottleneck_forward.1
$region0: #{bottleneck_forward.1}
  #allocation0 [shape = 'u32[]', space=smem, size = 0x4, offset = 0x4, fixed_abs, tag = 'smem constant byte address 0x4 - core index']
  #allocation1 [shape = 'u32[144,128]{1,0:T(1,128)}', space=vmem, size = 0x12000, scoped, tag = 'internal scratch']
  #allocation2 [shape = 'bf16[18,16,384]{2,1,0:T(16,128)(2,1)}', space=vmem, size = 0x36000, scoped, tag = 'scratch operand']
  #allocation3 [shape = 'f32[256,128]{1,0:T(8,128)}', space=vmem, size = 0x20000, scoped, tag = 'scratch operand']
  %s0 = inlined_call_operand.vmem [shape: f32[2,16,16,128], index: 0, kind: input, shape index: {}]
  %s1 = inlined_call_operand.vmem [shape: bf16[128,128], index: 1, kind: input, shape index: {}]
  %s2 = inlined_call_operand.vmem [shape: f32[1,128], index: 2, kind: input, shape index: {}]
  %s3 = inlined_call_operand.vmem [shape: f32[1,128], index: 3, kind: input, shape index: {}]
  %s4 = inlined_call_operand.vmem [shape: bf16[3,384,128], index: 4, kind: input, shape index: {}]
  %s5 = inlined_call_operand.vmem [shape: f32[1,128], index: 5, kind: input, shape index: {}]
  %s6 = inlined_call_operand.vmem [shape: f32[1,128], index: 6, kind: input, shape index: {}]
  %s7 = inlined_call_operand.vmem [shape: bf16[128,128], index: 7, kind: input, shape index: {}]
  %s8 = inlined_call_operand.vmem [shape: f32[1,128], index: 8, kind: input, shape index: {}]
  %s9 = inlined_call_operand.vmem [shape: f32[1,128], index: 9, kind: input, shape index: {}]
  %s10 = inlined_call_operand.vmem [shape: f32[2,16,16,128], index: 10, kind: output, shape index: {}]
  %s11 = sld [smem:[#allocation0]]
  $region73: #{bottleneck_forward.1} parent=0
    _
  %s13 = ssub.s32 1, %s11
  %s14 = scalar_select 0, %s13, %s11
  loop: start=0, step=1, limit=4
  $region2: #{bottleneck_forward.1} parent=0 // loop_pre_header
    _
  $region3: #{bottleneck_forward.1} parent=0 // loop_header
    %s16 = sphi 0, %s20
    %p17 = scmp.ge.s32.totalorder %s16, 4
    %s26 = sphi 0, %s28
    %s29 = sphi 0, %s26
    %s30 = sphi 0, %s29
    %s46 = sphi 0, %s30
    %s50 = sphi 0, %s50
    %s52 = sphi 0, %s50
    %s53 = sphi 0, %s52
    %s67 = sphi 0, %s53
    %s71 = sphi 0, %s71
    %s73 = sphi 0, %s71
    %s74 = sphi 0, %s73
    %s88 = sphi 0, %s74
    %s92 = sphi 0, %s92
    %s94 = sphi 0, %s92
    %s95 = sphi 0, %s94
    %s109 = sphi 0, %s95
    %s113 = sphi 0, %s113
    %s115 = sphi 0, %s113
    %s116 = sphi 0, %s115
    %s130 = sphi 0, %s116
    %s134 = sphi 0, %s134
    %s136 = sphi 0, %s134
    %s137 = sphi 0, %s136
    %s151 = sphi 0, %s137
    %s155 = sphi 0, %s155
    %s157 = sphi 0, %s155
    %s158 = sphi 0, %s157
    %s172 = sphi 0, %s158
    %s176 = sphi 0, %s176
    %s178 = sphi 0, %s176
    %s179 = sphi 0, %s178
    %s193 = sphi 0, %s179
    %s197 = sphi 0, %s197
    %s199 = sphi 0, %s197
    %s200 = sphi 0, %s199
    %s214 = sphi 0, %s200
    %s218 = sphi 0, %s218
    %s220 = sphi 0, %s218
    %s221 = sphi 0, %s220
    %s235 = sphi 0, %s221
    %s241 = sphi 0, %s243
    %s244 = sphi 0, %s241
    %s245 = sphi 0, %s244
    %s261 = sphi 0, %s245
  $region4: #{bottleneck_forward.1} parent=0 // loop_header_branch
    %19 = sbr.rel (%p17) target = $region8
  $region5: #{bottleneck_forward.1} parent=0 // loop_body
    %s21 = ssub.s32 %s16, 1
    %s22 = ssub.s32 %s16, 2
    %s23 = sadd.s32 %s16, 1
    %s24 = ssub.s32 %s16, %s23
    %p25 = scmp.eq.s32.totalorder %s24, 0
    %s27 = sadd.s32 %s26, 1
    %s28 = scalar_select %p25, %s26, %s27
    %p31 = pneg %p25
    %p32 = scmp.eq.s32.totalorder %s16, 1
    %p33 = por %p31, %p32
    %p34 = scmp.ne.s32.totalorder %s26, %s29
    %p35 = scmp.eq.s32.totalorder %s16, 0
    %p36 = por %p34, %p35
    %p37 = scmp.ne.s32.totalorder %s26, %s29
    %p38 = scmp.eq.s32.totalorder %s21, 1
    %p39 = por %p37, %p38
    %p40 = scmp.ne.s32.totalorder %s29, %s30
    %p41 = scmp.eq.s32.totalorder %s21, 0
    %p42 = por %p40, %p41
    %p43 = scmp.ne.s32.totalorder %s29, %s30
    %p44 = scmp.eq.s32.totalorder %s22, 1
    %p45 = por %p43, %p44
    %p47 = scmp.ne.s32.totalorder %s30, %s46
    %p48 = scmp.eq.s32.totalorder %s22, 0
    %p49 = por %p47, %p48
    %s51 = sadd.s32 %s50, 1
    %p54 = scmp.eq.s32.totalorder %s16, 1
    %p55 = scmp.ne.s32.totalorder %s50, %s52
    %p56 = scmp.eq.s32.totalorder %s16, 0
    %p57 = por %p55, %p56
    %p58 = scmp.ne.s32.totalorder %s50, %s52
    %p59 = scmp.eq.s32.totalorder %s21, 1
    %p60 = por %p58, %p59
    %p61 = scmp.ne.s32.totalorder %s52, %s53
    %p62 = scmp.eq.s32.totalorder %s21, 0
    %p63 = por %p61, %p62
    %p64 = scmp.ne.s32.totalorder %s52, %s53
    %p65 = scmp.eq.s32.totalorder %s22, 1
    %p66 = por %p64, %p65
    %p68 = scmp.ne.s32.totalorder %s53, %s67
    %p69 = scmp.eq.s32.totalorder %s22, 0
    %p70 = por %p68, %p69
    %s72 = sadd.s32 %s71, 1
    %p75 = scmp.eq.s32.totalorder %s16, 1
    %p76 = scmp.ne.s32.totalorder %s71, %s73
    %p77 = scmp.eq.s32.totalorder %s16, 0
    %p78 = por %p76, %p77
    %p79 = scmp.ne.s32.totalorder %s71, %s73
    %p80 = scmp.eq.s32.totalorder %s21, 1
    %p81 = por %p79, %p80
    %p82 = scmp.ne.s32.totalorder %s73, %s74
    %p83 = scmp.eq.s32.totalorder %s21, 0
    %p84 = por %p82, %p83
    %p85 = scmp.ne.s32.totalorder %s73, %s74
    %p86 = scmp.eq.s32.totalorder %s22, 1
    %p87 = por %p85, %p86
    %p89 = scmp.ne.s32.totalorder %s74, %s88
    %p90 = scmp.eq.s32.totalorder %s22, 0
    %p91 = por %p89, %p90
    %s93 = sadd.s32 %s92, 1
    %p96 = scmp.eq.s32.totalorder %s16, 1
    %p97 = scmp.ne.s32.totalorder %s92, %s94
    %p98 = scmp.eq.s32.totalorder %s16, 0
    %p99 = por %p97, %p98
    %p100 = scmp.ne.s32.totalorder %s92, %s94
    %p101 = scmp.eq.s32.totalorder %s21, 1
    %p102 = por %p100, %p101
    %p103 = scmp.ne.s32.totalorder %s94, %s95
    %p104 = scmp.eq.s32.totalorder %s21, 0
    %p105 = por %p103, %p104
    %p106 = scmp.ne.s32.totalorder %s94, %s95
    %p107 = scmp.eq.s32.totalorder %s22, 1
    %p108 = por %p106, %p107
    %p110 = scmp.ne.s32.totalorder %s95, %s109
    %p111 = scmp.eq.s32.totalorder %s22, 0
    %p112 = por %p110, %p111
    %s114 = sadd.s32 %s113, 1
    %p117 = scmp.eq.s32.totalorder %s16, 1
    %p118 = scmp.ne.s32.totalorder %s113, %s115
    %p119 = scmp.eq.s32.totalorder %s16, 0
    %p120 = por %p118, %p119
    %p121 = scmp.ne.s32.totalorder %s113, %s115
    %p122 = scmp.eq.s32.totalorder %s21, 1
    %p123 = por %p121, %p122
    %p124 = scmp.ne.s32.totalorder %s115, %s116
    %p125 = scmp.eq.s32.totalorder %s21, 0
    %p126 = por %p124, %p125
    %p127 = scmp.ne.s32.totalorder %s115, %s116
    %p128 = scmp.eq.s32.totalorder %s22, 1
    %p129 = por %p127, %p128
    %p131 = scmp.ne.s32.totalorder %s116, %s130
    %p132 = scmp.eq.s32.totalorder %s22, 0
    %p133 = por %p131, %p132
    %s135 = sadd.s32 %s134, 1
    %p138 = scmp.eq.s32.totalorder %s16, 1
    %p139 = scmp.ne.s32.totalorder %s134, %s136
    %p140 = scmp.eq.s32.totalorder %s16, 0
    %p141 = por %p139, %p140
    %p142 = scmp.ne.s32.totalorder %s134, %s136
    %p143 = scmp.eq.s32.totalorder %s21, 1
    %p144 = por %p142, %p143
    %p145 = scmp.ne.s32.totalorder %s136, %s137
    %p146 = scmp.eq.s32.totalorder %s21, 0
    %p147 = por %p145, %p146
    %p148 = scmp.ne.s32.totalorder %s136, %s137
    %p149 = scmp.eq.s32.totalorder %s22, 1
    %p150 = por %p148, %p149
    %p152 = scmp.ne.s32.totalorder %s137, %s151
    %p153 = scmp.eq.s32.totalorder %s22, 0
    %p154 = por %p152, %p153
    %s156 = sadd.s32 %s155, 1
    %p159 = scmp.eq.s32.totalorder %s16, 1
    %p160 = scmp.ne.s32.totalorder %s155, %s157
    %p161 = scmp.eq.s32.totalorder %s16, 0
    %p162 = por %p160, %p161
    %p163 = scmp.ne.s32.totalorder %s155, %s157
    %p164 = scmp.eq.s32.totalorder %s21, 1
    %p165 = por %p163, %p164
    %p166 = scmp.ne.s32.totalorder %s157, %s158
    %p167 = scmp.eq.s32.totalorder %s21, 0
    %p168 = por %p166, %p167
    %p169 = scmp.ne.s32.totalorder %s157, %s158
    %p170 = scmp.eq.s32.totalorder %s22, 1
    %p171 = por %p169, %p170
    %p173 = scmp.ne.s32.totalorder %s158, %s172
    %p174 = scmp.eq.s32.totalorder %s22, 0
    %p175 = por %p173, %p174
    %s177 = sadd.s32 %s176, 1
    %p180 = scmp.eq.s32.totalorder %s16, 1
    %p181 = scmp.ne.s32.totalorder %s176, %s178
    %p182 = scmp.eq.s32.totalorder %s16, 0
    %p183 = por %p181, %p182
    %p184 = scmp.ne.s32.totalorder %s176, %s178
    %p185 = scmp.eq.s32.totalorder %s21, 1
    %p186 = por %p184, %p185
    %p187 = scmp.ne.s32.totalorder %s178, %s179
    %p188 = scmp.eq.s32.totalorder %s21, 0
    %p189 = por %p187, %p188
    %p190 = scmp.ne.s32.totalorder %s178, %s179
    %p191 = scmp.eq.s32.totalorder %s22, 1
    %p192 = por %p190, %p191
    %p194 = scmp.ne.s32.totalorder %s179, %s193
    %p195 = scmp.eq.s32.totalorder %s22, 0
    %p196 = por %p194, %p195
    %s198 = sadd.s32 %s197, 1
    %p201 = scmp.eq.s32.totalorder %s16, 1
    %p202 = scmp.ne.s32.totalorder %s197, %s199
    %p203 = scmp.eq.s32.totalorder %s16, 0
    %p204 = por %p202, %p203
    %p205 = scmp.ne.s32.totalorder %s197, %s199
    %p206 = scmp.eq.s32.totalorder %s21, 1
    %p207 = por %p205, %p206
    %p208 = scmp.ne.s32.totalorder %s199, %s200
    %p209 = scmp.eq.s32.totalorder %s21, 0
    %p210 = por %p208, %p209
    %p211 = scmp.ne.s32.totalorder %s199, %s200
    %p212 = scmp.eq.s32.totalorder %s22, 1
    %p213 = por %p211, %p212
    %p215 = scmp.ne.s32.totalorder %s200, %s214
    %p216 = scmp.eq.s32.totalorder %s22, 0
    %p217 = por %p215, %p216
    %s219 = sadd.s32 %s218, 1
    %p222 = scmp.eq.s32.totalorder %s16, 1
    %p223 = scmp.ne.s32.totalorder %s218, %s220
    %p224 = scmp.eq.s32.totalorder %s16, 0
    %p225 = por %p223, %p224
    %p226 = scmp.ne.s32.totalorder %s218, %s220
    %p227 = scmp.eq.s32.totalorder %s21, 1
    %p228 = por %p226, %p227
    %p229 = scmp.ne.s32.totalorder %s220, %s221
    %p230 = scmp.eq.s32.totalorder %s21, 0
    %p231 = por %p229, %p230
    %p232 = scmp.ne.s32.totalorder %s220, %s221
    %p233 = scmp.eq.s32.totalorder %s22, 1
    %p234 = por %p232, %p233
    %p236 = scmp.ne.s32.totalorder %s221, %s235
    %p237 = scmp.eq.s32.totalorder %s22, 0
    %p238 = por %p236, %p237
    %s239 = ssub.s32 %s16, %s23
    %p240 = scmp.eq.s32.totalorder %s239, 0
    %s242 = sadd.s32 %s241, 1
    %s243 = scalar_select %p240, %s241, %s242
    %p246 = pneg %p240
    %p247 = scmp.eq.s32.totalorder %s16, 1
    %p248 = por %p246, %p247
    %p249 = scmp.ne.s32.totalorder %s241, %s244
    %p250 = scmp.eq.s32.totalorder %s16, 0
    %p251 = por %p249, %p250
    %p252 = scmp.ne.s32.totalorder %s241, %s244
    %p253 = scmp.eq.s32.totalorder %s21, 1
    %p254 = por %p252, %p253
    %p255 = scmp.ne.s32.totalorder %s244, %s245
    %p256 = scmp.eq.s32.totalorder %s21, 0
    %p257 = por %p255, %p256
    %p258 = scmp.ne.s32.totalorder %s244, %s245
    %p259 = scmp.eq.s32.totalorder %s22, 1
    %p260 = por %p258, %p259
    %p262 = scmp.ne.s32.totalorder %s245, %s261
    %p263 = scmp.eq.s32.totalorder %s22, 0
    %p264 = por %p262, %p263
    %p265 = scmp.le.s32.totalorder 1, %s16
    %p266 = scmp.lt.s32.totalorder %s16, 3
    %p267 = pnand %p265, %p266
    %p268 = pneg %p267
    // Predicated region
    $region9: #{bottleneck_forward.1} parent=5 // pred_check
      _
    $region10: #{bottleneck_forward.1} parent=5 // pred_check_branch
      %270 = sbr.rel (%p267) target = $region12
    $region11: #{bottleneck_forward.1} parent=5 // pred_region
      %s271 = ssub.s32 %s16, 1
      // Predicated region
      $region13: #{bottleneck_forward.1} parent=11 // pred_check
        %p272 = pneg %p63
      $region14: #{bottleneck_forward.1} parent=11 // pred_check_branch
        %274 = sbr.rel (%p272) target = $region16
      $region15: #{bottleneck_forward.1} parent=11 // pred_region
        _
      $region16: #{bottleneck_forward.1} parent=11 // pred_fallthru
        _
      // Predicated region
      $region17: #{bottleneck_forward.1} parent=11 // pred_check
        %p275 = pneg %p84
      $region18: #{bottleneck_forward.1} parent=11 // pred_check_branch
        %277 = sbr.rel (%p275) target = $region20
      $region19: #{bottleneck_forward.1} parent=11 // pred_region
        _
      $region20: #{bottleneck_forward.1} parent=11 // pred_fallthru
        _
      // Predicated region
      $region21: #{bottleneck_forward.1} parent=11 // pred_check
        %p278 = pneg %p105
      $region22: #{bottleneck_forward.1} parent=11 // pred_check_branch
        %280 = sbr.rel (%p278) target = $region24
      $region23: #{bottleneck_forward.1} parent=11 // pred_region
        _
      $region24: #{bottleneck_forward.1} parent=11 // pred_fallthru
        _
      // Predicated region
      $region25: #{bottleneck_forward.1} parent=11 // pred_check
        %p281 = pneg %p126
      $region26: #{bottleneck_forward.1} parent=11 // pred_check_branch
        %283 = sbr.rel (%p281) target = $region28
      $region27: #{bottleneck_forward.1} parent=11 // pred_region
        _
      $region28: #{bottleneck_forward.1} parent=11 // pred_fallthru
        _
      // Predicated region
      $region29: #{bottleneck_forward.1} parent=11 // pred_check
        %p284 = pneg %p147
      $region30: #{bottleneck_forward.1} parent=11 // pred_check_branch
        %286 = sbr.rel (%p284) target = $region32
      $region31: #{bottleneck_forward.1} parent=11 // pred_region
        _
      $region32: #{bottleneck_forward.1} parent=11 // pred_fallthru
        _
      // Predicated region
      $region33: #{bottleneck_forward.1} parent=11 // pred_check
        %p287 = pneg %p168
      $region34: #{bottleneck_forward.1} parent=11 // pred_check_branch
        %289 = sbr.rel (%p287) target = $region36
      $region35: #{bottleneck_forward.1} parent=11 // pred_region
        _
      $region36: #{bottleneck_forward.1} parent=11 // pred_fallthru
        _
      // Predicated region
      $region37: #{bottleneck_forward.1} parent=11 // pred_check
        %p290 = pneg %p189
      $region38: #{bottleneck_forward.1} parent=11 // pred_check_branch
        %292 = sbr.rel (%p290) target = $region40
      $region39: #{bottleneck_forward.1} parent=11 // pred_region
        _
      $region40: #{bottleneck_forward.1} parent=11 // pred_fallthru
        _
      // Predicated region
      $region41: #{bottleneck_forward.1} parent=11 // pred_check
        %p293 = pneg %p210
      $region42: #{bottleneck_forward.1} parent=11 // pred_check_branch
        %295 = sbr.rel (%p293) target = $region44
      $region43: #{bottleneck_forward.1} parent=11 // pred_region
        _
      $region44: #{bottleneck_forward.1} parent=11 // pred_fallthru
        _
      // Predicated region
      $region45: #{bottleneck_forward.1} parent=11 // pred_check
        %p296 = pneg %p231
      $region46: #{bottleneck_forward.1} parent=11 // pred_check_branch
        %298 = sbr.rel (%p296) target = $region48
      $region47: #{bottleneck_forward.1} parent=11 // pred_region
        _
      $region48: #{bottleneck_forward.1} parent=11 // pred_fallthru
        _
    $region12: #{bottleneck_forward.1} parent=5 // pred_fallthru
      _
    %p299 = scmp.lt.s32.totalorder %s16, 2
    // Predicated region
    $region49: #{bottleneck_forward.1} parent=5 // pred_check
      %p300 = pneg %p299
    $region50: #{bottleneck_forward.1} parent=5 // pred_check_branch
      %302 = sbr.rel (%p300) target = $region52
    $region51: #{bottleneck_forward.1} parent=5 // pred_region
      // Predicated region
      $region53: #{bottleneck_forward.1} parent=51 // pred_check
        %p303 = pneg %p36
      $region54: #{bottleneck_forward.1} parent=51 // pred_check_branch
        %305 = sbr.rel (%p303) target = $region56
      $region55: #{bottleneck_forward.1} parent=51 // pred_region
        %p306 = scmp.lt.s32.totalorder %s16, 1
        %s307 = scalar_select %p306, %s16, 1
        %s308 = smul.addr %s307, 32
        %s309 = smul.addr %s308, 8
        %s310 = scalar_lea.vmem %s0, %s309
      $region56: #{bottleneck_forward.1} parent=51 // pred_fallthru
        _
    $region52: #{bottleneck_forward.1} parent=5 // pred_fallthru
      _
    %p311 = scmp.le.s32.totalorder 1, %s16
    %p312 = scmp.lt.s32.totalorder %s16, 3
    %p313 = pnand %p311, %p312
    %p314 = pneg %p313
    // Predicated region
    $region57: #{bottleneck_forward.1} parent=5 // pred_check
      _
    $region58: #{bottleneck_forward.1} parent=5 // pred_check_branch
      %316 = sbr.rel (%p313) target = $region60
    $region59: #{bottleneck_forward.1} parent=5 // pred_region
      %s317 = ssub.s32 %s16, 1
      %p318 = scmp.lt.s32.totalorder %s21, 1
      %s319 = scalar_select %p318, %s21, 1
      %s320 = smul.addr %s319, 32
      %s321 = smul.addr %s320, 8
      %s322 = scalar_lea.vmem %s0, %s321
      %p323 = pneg %p42
      %p324 = pneg %p39
      %p325 = pneg %p63
      %p326 = pneg %p60
      %p327 = pneg %p84
      %p328 = pneg %p81
      %p329 = pneg %p105
      %p330 = pneg %p102
      %p331 = pneg %p126
      %p332 = pneg %p123
      %p333 = pneg %p147
      %p334 = pneg %p144
      %p335 = pneg %p168
      %p336 = pneg %p165
      %p337 = pneg %p189
      %p338 = pneg %p186
      %p339 = pneg %p210
      %p340 = pneg %p207
      %p341 = pneg %p231
      %p342 = pneg %p228
      %p343 = pneg %p257
      %p344 = pneg %p254
      %p345 = scmp.lt.s32.totalorder %s21, 1
      %s346 = scalar_select %p345, %s21, 1
      %s347 = smul.addr %s346, 32
      %s348 = smul.addr %s347, 8
      %s349 = scalar_lea.vmem %s10, %s348
      %p350 = scmp.lt.s32.totalorder %s21, 1
      %s351 = scalar_select %p350, %s21, 1
      %s352 = smul.addr %s351, 32
      %s353 = smul.addr %s352, 8
      %s354 = scalar_lea.vmem %s0, %s353
      %p355 = scmp.lt.s32.totalorder %s21, 1
      %s356 = scalar_select %p355, %s21, 1
      %s357 = smul.addr %s356, 32
      %s358 = smul.addr %s357, 8
      %s359 = scalar_lea.vmem %s10, %s358
      %v361 = vld [vmem:[%s354] sm:$0xff]
      %v362 = vld [vmem:[%s354 + $0x8] sm:$0xff]
      %v363 = vld [vmem:[%s354 + $0x10] sm:$0xff]
      %v364 = vld [vmem:[%s354 + $0x18] sm:$0xff]
      %v365 = vld [vmem:[%s354 + $0x20] sm:$0xff]
      %v366 = vld [vmem:[%s354 + $0x28] sm:$0xff]
      %v367 = vld [vmem:[%s354 + $0x30] sm:$0xff]
      %v368 = vld [vmem:[%s354 + $0x38] sm:$0xff]
      %v369 = vld [vmem:[%s354 + $0x40] sm:$0xff]
      %v370 = vld [vmem:[%s354 + $0x48] sm:$0xff]
      %v371 = vld [vmem:[%s354 + $0x50] sm:$0xff]
      %v372 = vld [vmem:[%s354 + $0x58] sm:$0xff]
      %v373 = vld [vmem:[%s354 + $0x60] sm:$0xff]
      %v374 = vld [vmem:[%s354 + $0x68] sm:$0xff]
      %v375 = vld [vmem:[%s354 + $0x70] sm:$0xff]
      %v376 = vld [vmem:[%s354 + $0x78] sm:$0xff]
      %v377 = vld [vmem:[%s354 + $0x80] sm:$0xff]
      %v378 = vld [vmem:[%s354 + $0x88] sm:$0xff]
      %v379 = vld [vmem:[%s354 + $0x90] sm:$0xff]
      %v380 = vld [vmem:[%s354 + $0x98] sm:$0xff]
      %v381 = vld [vmem:[%s354 + $0xa0] sm:$0xff]
      %v382 = vld [vmem:[%s354 + $0xa8] sm:$0xff]
      %v383 = vld [vmem:[%s354 + $0xb0] sm:$0xff]
      %v384 = vld [vmem:[%s354 + $0xb8] sm:$0xff]
      %v385 = vld [vmem:[%s354 + $0xc0] sm:$0xff]
      %v386 = vld [vmem:[%s354 + $0xc8] sm:$0xff]
      %v387 = vld [vmem:[%s354 + $0xd0] sm:$0xff]
      %v388 = vld [vmem:[%s354 + $0xd8] sm:$0xff]
      %v389 = vld [vmem:[%s354 + $0xe0] sm:$0xff]
      %v390 = vld [vmem:[%s354 + $0xe8] sm:$0xff]
      %v391 = vld [vmem:[%s354 + $0xf0] sm:$0xff]
      %v392 = vld [vmem:[%s354 + $0xf8] sm:$0xff]
      %v393 = vpack.c.bf16 %v362, %v361
      %v394 = vpack.c.bf16 %v364, %v363
      %v395 = vpack.c.bf16 %v366, %v365
      %v396 = vpack.c.bf16 %v368, %v367
      %v397 = vpack.c.bf16 %v370, %v369
      %v398 = vpack.c.bf16 %v372, %v371
      %v399 = vpack.c.bf16 %v374, %v373
      %v400 = vpack.c.bf16 %v376, %v375
      %v401 = vpack.c.bf16 %v378, %v377
      %v402 = vpack.c.bf16 %v380, %v379
      %v403 = vpack.c.bf16 %v382, %v381
      %v404 = vpack.c.bf16 %v384, %v383
      %v405 = vpack.c.bf16 %v386, %v385
      %v406 = vpack.c.bf16 %v388, %v387
      %v407 = vpack.c.bf16 %v390, %v389
      %v408 = vpack.c.bf16 %v392, %v391
      %v409 = vld [vmem:[%s1] sm:$0xf]
      %v410 = vld [vmem:[%s1 + $0x4] sm:$0xf]
      %v411 = vld [vmem:[%s1 + $0x8] sm:$0xf]
      %v412 = vld [vmem:[%s1 + $0xc] sm:$0xf]
      %v413 = vld [vmem:[%s1 + $0x10] sm:$0xf]
      %v414 = vld [vmem:[%s1 + $0x14] sm:$0xf]
      %v415 = vld [vmem:[%s1 + $0x18] sm:$0xf]
      %v416 = vld [vmem:[%s1 + $0x1c] sm:$0xf]
      %v417 = vld [vmem:[%s1 + $0x20] sm:$0xf]
      %v418 = vld [vmem:[%s1 + $0x24] sm:$0xf]
      %v419 = vld [vmem:[%s1 + $0x28] sm:$0xf]
      %v420 = vld [vmem:[%s1 + $0x2c] sm:$0xf]
      %v421 = vld [vmem:[%s1 + $0x30] sm:$0xf]
      %v422 = vld [vmem:[%s1 + $0x34] sm:$0xf]
      %v423 = vld [vmem:[%s1 + $0x38] sm:$0xf]
      %v424 = vld [vmem:[%s1 + $0x3c] sm:$0xf]
      %v441 = vunpack.c.l.b16 %v409
      %v442 = vunpack.c.l.b16 %v410
      %v443 = vunpack.c.l.b16 %v411
      %v444 = vunpack.c.l.b16 %v412
      %v445 = vunpack.c.l.b16 %v413
      %v446 = vunpack.c.l.b16 %v414
      %v447 = vunpack.c.l.b16 %v415
      %v448 = vunpack.c.l.b16 %v416
      %v449 = vunpack.c.l.b16 %v417
      %v450 = vunpack.c.l.b16 %v418
      %v451 = vunpack.c.l.b16 %v419
      %v452 = vunpack.c.l.b16 %v420
      %v453 = vunpack.c.l.b16 %v421
      %v454 = vunpack.c.l.b16 %v422
      %v455 = vunpack.c.l.b16 %v423
      %v456 = vunpack.c.l.b16 %v424
      %v457 = vpack.c.b16 %v442, %v441
      %v458 = vpack.c.b16 %v444, %v443
      %v459 = vpack.c.b16 %v446, %v445
      %v460 = vpack.c.b16 %v448, %v447
      %v461 = vpack.c.b16 %v450, %v449
      %v462 = vpack.c.b16 %v452, %v451
      %v463 = vpack.c.b16 %v454, %v453
      %v464 = vpack.c.b16 %v456, %v455
      %473 = vmatprep.subr.bf16.mxu0 0
      %474 = vmatpush1.bf16.msra.mxu0 %v457
      %475 = vmatprep.subr.bf16.mxu0 0
      %476 = vmatpush1.bf16.msra.mxu0 %v458
      %477 = vmatprep.subr.bf16.mxu0 0
      %478 = vmatpush1.bf16.msra.mxu0 %v459
      %479 = vmatprep.subr.bf16.mxu0 0
      %480 = vmatpush1.bf16.msra.mxu0 %v460
      %481 = vmatprep.subr.bf16.mxu0 0
      %482 = vmatpush1.bf16.msra.mxu0 %v461
      %483 = vmatprep.subr.bf16.mxu0 0
      %484 = vmatpush1.bf16.msra.mxu0 %v462
      %485 = vmatprep.subr.bf16.mxu0 0
      %486 = vmatpush1.bf16.msra.mxu0 %v463
      %487 = vmatprep.subr.bf16.mxu0 0
      %488 = vmatpush1.bf16.msra.mxu0 %v464
      %489 = vmatprep.subr.bf16.mxu0 0
      %490 = vmatpush1.bf16.msra.mxu0 0
      %491 = vmatprep.subr.bf16.mxu0 0
      %492 = vmatpush1.bf16.msra.mxu0 0
      %493 = vmatprep.subr.bf16.mxu0 0
      %494 = vmatpush1.bf16.msra.mxu0 0
      %495 = vmatprep.subr.bf16.mxu0 0
      %496 = vmatpush1.bf16.msra.mxu0 0
      %497 = vmatprep.subr.bf16.mxu0 0
      %498 = vmatpush1.bf16.msra.mxu0 0
      %499 = vmatprep.subr.bf16.mxu0 0
      %500 = vmatpush1.bf16.msra.mxu0 0
      %501 = vmatprep.subr.bf16.mxu0 0
      %502 = vmatpush1.bf16.msra.mxu0 0
      %503 = vmatprep.subr.bf16.mxu0 0
      %504 = vmatpush1.bf16.msra.mxu0 0
      %505 = vmatprep.mubr.bf16.mxu0 0
      %506 = vmatmul.mubr.bf16.gmra.mrb[0].mxu0 %v393
      %v507 = vpop.f32.mrb[0].mxu0
      %v508 = vadd.f32 0.0, %v507
      %v509 = vpop.f32.mrb[0].mxu0
      %v510 = vpop.f32.mrb[0].mxu0
      %v511 = vadd.f32 0.0, %v510
      %v512 = vpop.f32.mrb[0].mxu0
      %513 = vmatprep.mubr.bf16.mxu0 0
      %514 = vmatmul.mubr.bf16.gmra.mrb[0].mxu0 %v394
      %v515 = vpop.f32.mrb[0].mxu0
      %v516 = vadd.f32 0.0, %v515
      %v517 = vpop.f32.mrb[0].mxu0
      %v518 = vpop.f32.mrb[0].mxu0
      %v519 = vadd.f32 0.0, %v518
      %v520 = vpop.f32.mrb[0].mxu0
      %521 = vmatprep.mubr.bf16.mxu0 0
      %522 = vmatmul.mubr.bf16.gmra.mrb[0].mxu0 %v395
      %v523 = vpop.f32.mrb[0].mxu0
      %v524 = vadd.f32 0.0, %v523
      %v525 = vpop.f32.mrb[0].mxu0
      %v526 = vpop.f32.mrb[0].mxu0
      %v527 = vadd.f32 0.0, %v526
      %v528 = vpop.f32.mrb[0].mxu0
      %529 = vmatprep.mubr.bf16.mxu0 0
      %530 = vmatmul.mubr.bf16.gmra.mrb[0].mxu0 %v396
      %v531 = vpop.f32.mrb[0].mxu0
      %v532 = vadd.f32 0.0, %v531
      %v533 = vpop.f32.mrb[0].mxu0
      %v534 = vpop.f32.mrb[0].mxu0
      %v535 = vadd.f32 0.0, %v534
      %v536 = vpop.f32.mrb[0].mxu0
      %537 = vmatprep.mubr.bf16.mxu0 0
      %538 = vmatmul.mubr.bf16.gmra.mrb[0].mxu0 %v397
      %v539 = vpop.f32.mrb[0].mxu0
      %v540 = vadd.f32 0.0, %v539
      %v541 = vpop.f32.mrb[0].mxu0
      %v542 = vpop.f32.mrb[0].mxu0
      %v543 = vadd.f32 0.0, %v542
      %v544 = vpop.f32.mrb[0].mxu0
      %545 = vmatprep.mubr.bf16.mxu0 0
      %546 = vmatmul.mubr.bf16.gmra.mrb[0].mxu0 %v398
      %v547 = vpop.f32.mrb[0].mxu0
      %v548 = vadd.f32 0.0, %v547
      %v549 = vpop.f32.mrb[0].mxu0
      %v550 = vpop.f32.mrb[0].mxu0
      %v551 = vadd.f32 0.0, %v550
      %v552 = vpop.f32.mrb[0].mxu0
      %553 = vmatprep.mubr.bf16.mxu0 0
      %554 = vmatmul.mubr.bf16.gmra.mrb[0].mxu0 %v399
      %v555 = vpop.f32.mrb[0].mxu0
      %v556 = vadd.f32 0.0, %v555
      %v557 = vpop.f32.mrb[0].mxu0
      %v558 = vpop.f32.mrb[0].mxu0
      %v559 = vadd.f32 0.0, %v558
      %v560 = vpop.f32.mrb[0].mxu0
      %561 = vmatprep.mubr.bf16.mxu0 0
      %562 = vmatmul.mubr.bf16.gmra.mrb[0].mxu0 %v400
      %v563 = vpop.f32.mrb[0].mxu0
      %v564 = vadd.f32 0.0, %v563
      %v565 = vpop.f32.mrb[0].mxu0
      %v566 = vpop.f32.mrb[0].mxu0
      %v567 = vadd.f32 0.0, %v566
      %v568 = vpop.f32.mrb[0].mxu0
      %569 = vmatprep.mubr.bf16.mxu0 0
      %570 = vmatmul.mubr.bf16.gmra.mrb[0].mxu0 %v401
      %v571 = vpop.f32.mrb[0].mxu0
      %v572 = vadd.f32 0.0, %v571
      %v573 = vpop.f32.mrb[0].mxu0
      %v574 = vpop.f32.mrb[0].mxu0
      %v575 = vadd.f32 0.0, %v574
      %v576 = vpop.f32.mrb[0].mxu0
      %577 = vmatprep.mubr.bf16.mxu0 0
      %578 = vmatmul.mubr.bf16.gmra.mrb[0].mxu0 %v402
      %v579 = vpop.f32.mrb[0].mxu0
      %v580 = vadd.f32 0.0, %v579
      %v581 = vpop.f32.mrb[0].mxu0
      %v582 = vpop.f32.mrb[0].mxu0
      %v583 = vadd.f32 0.0, %v582
      %v584 = vpop.f32.mrb[0].mxu0
      %585 = vmatprep.mubr.bf16.mxu0 0
      %586 = vmatmul.mubr.bf16.gmra.mrb[0].mxu0 %v403
      %v587 = vpop.f32.mrb[0].mxu0
      %v588 = vadd.f32 0.0, %v587
      %v589 = vpop.f32.mrb[0].mxu0
      %v590 = vpop.f32.mrb[0].mxu0
      %v591 = vadd.f32 0.0, %v590
      %v592 = vpop.f32.mrb[0].mxu0
      %593 = vmatprep.mubr.bf16.mxu0 0
      %594 = vmatmul.mubr.bf16.gmra.mrb[0].mxu0 %v404
      %v595 = vpop.f32.mrb[0].mxu0
      %v596 = vadd.f32 0.0, %v595
      %v597 = vpop.f32.mrb[0].mxu0
      %v598 = vpop.f32.mrb[0].mxu0
      %v599 = vadd.f32 0.0, %v598
      %v600 = vpop.f32.mrb[0].mxu0
      %601 = vmatprep.mubr.bf16.mxu0 0
      %602 = vmatmul.mubr.bf16.gmra.mrb[0].mxu0 %v405
      %v603 = vpop.f32.mrb[0].mxu0
      %v604 = vadd.f32 0.0, %v603
      %v605 = vpop.f32.mrb[0].mxu0
      %v606 = vpop.f32.mrb[0].mxu0
      %v607 = vadd.f32 0.0, %v606
      %v608 = vpop.f32.mrb[0].mxu0
      %609 = vmatprep.mubr.bf16.mxu0 0
      %610 = vmatmul.mubr.bf16.gmra.mrb[0].mxu0 %v406
      %v611 = vpop.f32.mrb[0].mxu0
      %v612 = vadd.f32 0.0, %v611
      %v613 = vpop.f32.mrb[0].mxu0
      %v614 = vpop.f32.mrb[0].mxu0
      %v615 = vadd.f32 0.0, %v614
      %v616 = vpop.f32.mrb[0].mxu0
      %617 = vmatprep.mubr.bf16.mxu0 0
      %618 = vmatmul.mubr.bf16.gmra.mrb[0].mxu0 %v407
      %v619 = vpop.f32.mrb[0].mxu0
      %v620 = vadd.f32 0.0, %v619
      %v621 = vpop.f32.mrb[0].mxu0
      %v622 = vpop.f32.mrb[0].mxu0
      %v623 = vadd.f32 0.0, %v622
      %v624 = vpop.f32.mrb[0].mxu0
      %625 = vmatprep.mubr.bf16.mxu0 0
      %626 = vmatmul.mubr.bf16.gmra.mrb[0].mxu0 %v408
      %v627 = vpop.f32.mrb[0].mxu0
      %v628 = vadd.f32 0.0, %v627
      %v629 = vpop.f32.mrb[0].mxu0
      %v630 = vpop.f32.mrb[0].mxu0
      %v631 = vadd.f32 0.0, %v630
      %v632 = vpop.f32.mrb[0].mxu0
      %633 = vdwg.mxu0
      %v634 = vld [vmem:[%s2] sm:$0x1]
      %v636 = vlaneseq
      %v637 = vshrl.u32 %v636, 7
      %v638 = vsub.s32 0, %v637
      %v639 = vrot.slane %v634, %v638
      %v641 = vmul.f32 %v508, %v639
      %v642 = vmul.f32 %v511, %v639
      %v643 = vmul.f32 %v516, %v639
      %v644 = vmul.f32 %v519, %v639
      %v645 = vmul.f32 %v524, %v639
      %v646 = vmul.f32 %v527, %v639
      %v647 = vmul.f32 %v532, %v639
      %v648 = vmul.f32 %v535, %v639
      %v649 = vmul.f32 %v540, %v639
      %v650 = vmul.f32 %v543, %v639
      %v651 = vmul.f32 %v548, %v639
      %v652 = vmul.f32 %v551, %v639
      %v653 = vmul.f32 %v556, %v639
      %v654 = vmul.f32 %v559, %v639
      %v655 = vmul.f32 %v564, %v639
      %v656 = vmul.f32 %v567, %v639
      %v657 = vmul.f32 %v572, %v639
      %v658 = vmul.f32 %v575, %v639
      %v659 = vmul.f32 %v580, %v639
      %v660 = vmul.f32 %v583, %v639
      %v661 = vmul.f32 %v588, %v639
      %v662 = vmul.f32 %v591, %v639
      %v663 = vmul.f32 %v596, %v639
      %v664 = vmul.f32 %v599, %v639
      %v665 = vmul.f32 %v604, %v639
      %v666 = vmul.f32 %v607, %v639
      %v667 = vmul.f32 %v612, %v639
      %v668 = vmul.f32 %v615, %v639
      %v669 = vmul.f32 %v620, %v639
      %v670 = vmul.f32 %v623, %v639
      %v671 = vmul.f32 %v628, %v639
      %v672 = vmul.f32 %v631, %v639
      %v673 = vld [vmem:[%s3] sm:$0x1]
      %v675 = vlaneseq
      %v676 = vshrl.u32 %v675, 7
      %v677 = vsub.s32 0, %v676
      %v678 = vrot.slane %v673, %v677
      %v680 = vadd.f32 %v641, %v678
      %v681 = vadd.f32 %v642, %v678
      %v682 = vadd.f32 %v643, %v678
      %v683 = vadd.f32 %v644, %v678
      %v684 = vadd.f32 %v645, %v678
      %v685 = vadd.f32 %v646, %v678
      %v686 = vadd.f32 %v647, %v678
      %v687 = vadd.f32 %v648, %v678
      %v688 = vadd.f32 %v649, %v678
      %v689 = vadd.f32 %v650, %v678
      %v690 = vadd.f32 %v651, %v678
      %v691 = vadd.f32 %v652, %v678
      %v692 = vadd.f32 %v653, %v678
      %v693 = vadd.f32 %v654, %v678
      %v694 = vadd.f32 %v655, %v678
      %v695 = vadd.f32 %v656, %v678
      %v696 = vadd.f32 %v657, %v678
      %v697 = vadd.f32 %v658, %v678
      %v698 = vadd.f32 %v659, %v678
      %v699 = vadd.f32 %v660, %v678
      %v700 = vadd.f32 %v661, %v678
      %v701 = vadd.f32 %v662, %v678
      %v702 = vadd.f32 %v663, %v678
      %v703 = vadd.f32 %v664, %v678
      %v704 = vadd.f32 %v665, %v678
      %v705 = vadd.f32 %v666, %v678
      %v706 = vadd.f32 %v667, %v678
      %v707 = vadd.f32 %v668, %v678
      %v708 = vadd.f32 %v669, %v678
      %v709 = vadd.f32 %v670, %v678
      %v710 = vadd.f32 %v671, %v678
      %v711 = vadd.f32 %v672, %v678
      %v712 = vmax.f32 %v680, 0.0
      %v713 = vmax.f32 %v681, 0.0
      %v714 = vmax.f32 %v682, 0.0
      %v715 = vmax.f32 %v683, 0.0
      %v716 = vmax.f32 %v684, 0.0
      %v717 = vmax.f32 %v685, 0.0
      %v718 = vmax.f32 %v686, 0.0
      %v719 = vmax.f32 %v687, 0.0
      %v720 = vmax.f32 %v688, 0.0
      %v721 = vmax.f32 %v689, 0.0
      %v722 = vmax.f32 %v690, 0.0
      %v723 = vmax.f32 %v691, 0.0
      %v724 = vmax.f32 %v692, 0.0
      %v725 = vmax.f32 %v693, 0.0
      %v726 = vmax.f32 %v694, 0.0
      %v727 = vmax.f32 %v695, 0.0
      %v728 = vmax.f32 %v696, 0.0
      %v729 = vmax.f32 %v697, 0.0
      %v730 = vmax.f32 %v698, 0.0
      %v731 = vmax.f32 %v699, 0.0
      %v732 = vmax.f32 %v700, 0.0
      %v733 = vmax.f32 %v701, 0.0
      %v734 = vmax.f32 %v702, 0.0
      %v735 = vmax.f32 %v703, 0.0
      %v736 = vmax.f32 %v704, 0.0
      %v737 = vmax.f32 %v705, 0.0
      %v738 = vmax.f32 %v706, 0.0
      %v739 = vmax.f32 %v707, 0.0
      %v740 = vmax.f32 %v708, 0.0
      %v741 = vmax.f32 %v709, 0.0
      %v742 = vmax.f32 %v710, 0.0
      %v743 = vmax.f32 %v711, 0.0
      %v744 = vpack.c.bf16 %v713, %v712
      %v745 = vpack.c.bf16 %v715, %v714
      %v746 = vpack.c.bf16 %v717, %v716
      %v747 = vpack.c.bf16 %v719, %v718
      %v748 = vpack.c.bf16 %v721, %v720
      %v749 = vpack.c.bf16 %v723, %v722
      %v750 = vpack.c.bf16 %v725, %v724
      %v751 = vpack.c.bf16 %v727, %v726
      %v752 = vpack.c.bf16 %v729, %v728
      %v753 = vpack.c.bf16 %v731, %v730
      %v754 = vpack.c.bf16 %v733, %v732
      %v755 = vpack.c.bf16 %v735, %v734
      %v756 = vpack.c.bf16 %v737, %v736
      %v757 = vpack.c.bf16 %v739, %v738
      %v758 = vpack.c.bf16 %v741, %v740
      %v759 = vpack.c.bf16 %v743, %v742
      %760 = vst [vmem:[#allocation2] sm:$0xff] 0
      %761 = vst [vmem:[#allocation2 + $0x8] sm:$0xff] 0
      %762 = vst [vmem:[#allocation2 + $0x10] sm:$0xff] 0
      %s763 = scalar_lea.vmem [#allocation2], 408
      %764 = vst [vmem:[%s763] sm:$0xff] 0
      %765 = vst [vmem:[%s763 + $0x8] sm:$0xff] 0
      %766 = vst [vmem:[%s763 + $0x10] sm:$0xff] 0
      %s767 = scalar_lea.vmem [#allocation2], 24
      %768 = vst [vmem:[%s767 + $0x8] sm:$0xff] %v744
      %769 = vst [vmem:[%s767 + $0x20] sm:$0xff] %v745
      %770 = vst [vmem:[%s767 + $0x38] sm:$0xff] %v746
      %771 = vst [vmem:[%s767 + $0x50] sm:$0xff] %v747
      %772 = vst [vmem:[%s767 + $0x68] sm:$0xff] %v748
      %773 = vst [vmem:[%s767 + $0x80] sm:$0xff] %v749
      %774 = vst [vmem:[%s767 + $0x98] sm:$0xff] %v750
      %775 = vst [vmem:[%s767 + $0xb0] sm:$0xff] %v751
      %776 = vst [vmem:[%s767 + $0xc8] sm:$0xff] %v752
      %777 = vst [vmem:[%s767 + $0xe0] sm:$0xff] %v753
      %778 = vst [vmem:[%s767 + $0xf8] sm:$0xff] %v754
      %779 = vst [vmem:[%s767 + $0x110] sm:$0xff] %v755
      %780 = vst [vmem:[%s767 + $0x128] sm:$0xff] %v756
      %781 = vst [vmem:[%s767 + $0x140] sm:$0xff] %v757
      %782 = vst [vmem:[%s767 + $0x158] sm:$0xff] %v758
      %783 = vst [vmem:[%s767 + $0x170] sm:$0xff] %v759
      %vm784 = vcmask 1040384
      %vm785 = vsmask.f32 256
      %vm786 = vmand %vm784, %vm785
      %v787 = vld [vmem:[%s767] sm:$0x1]
      %v788 = vsel %vm786, 0, %v787
      %789 = vst [vmem:[%s767] sm:$0x1] %v788
      %v790 = vld [vmem:[%s767 + $0x18] sm:$0x1]
      %v791 = vsel %vm786, 0, %v790
      %792 = vst [vmem:[%s767 + $0x18] sm:$0x1] %v791
      %v793 = vld [vmem:[%s767 + $0x30] sm:$0x1]
      %v794 = vsel %vm786, 0, %v793
      %795 = vst [vmem:[%s767 + $0x30] sm:$0x1] %v794
      %v796 = vld [vmem:[%s767 + $0x48] sm:$0x1]
      %v797 = vsel %vm786, 0, %v796
      %798 = vst [vmem:[%s767 + $0x48] sm:$0x1] %v797
      %v799 = vld [vmem:[%s767 + $0x60] sm:$0x1]
      %v800 = vsel %vm786, 0, %v799
      %801 = vst [vmem:[%s767 + $0x60] sm:$0x1] %v800
      %v802 = vld [vmem:[%s767 + $0x78] sm:$0x1]
      %v803 = vsel %vm786, 0, %v802
      %804 = vst [vmem:[%s767 + $0x78] sm:$0x1] %v803
      %v805 = vld [vmem:[%s767 + $0x90] sm:$0x1]
      %v806 = vsel %vm786, 0, %v805
      %807 = vst [vmem:[%s767 + $0x90] sm:$0x1] %v806
      %v808 = vld [vmem:[%s767 + $0xa8] sm:$0x1]
      %v809 = vsel %vm786, 0, %v808
      %810 = vst [vmem:[%s767 + $0xa8] sm:$0x1] %v809
      %v811 = vld [vmem:[%s767 + $0xc0] sm:$0x1]
      %v812 = vsel %vm786, 0, %v811
      %813 = vst [vmem:[%s767 + $0xc0] sm:$0x1] %v812
      %v814 = vld [vmem:[%s767 + $0xd8] sm:$0x1]
      %v815 = vsel %vm786, 0, %v814
      %816 = vst [vmem:[%s767 + $0xd8] sm:$0x1] %v815
      %v817 = vld [vmem:[%s767 + $0xf0] sm:$0x1]
      %v818 = vsel %vm786, 0, %v817
      %819 = vst [vmem:[%s767 + $0xf0] sm:$0x1] %v818
      %v820 = vld [vmem:[%s767 + $0x108] sm:$0x1]
      %v821 = vsel %vm786, 0, %v820
      %822 = vst [vmem:[%s767 + $0x108] sm:$0x1] %v821
      %v823 = vld [vmem:[%s767 + $0x120] sm:$0x1]
      %v824 = vsel %vm786, 0, %v823
      %825 = vst [vmem:[%s767 + $0x120] sm:$0x1] %v824
      %v826 = vld [vmem:[%s767 + $0x138] sm:$0x1]
      %v827 = vsel %vm786, 0, %v826
      %828 = vst [vmem:[%s767 + $0x138] sm:$0x1] %v827
      %v829 = vld [vmem:[%s767 + $0x150] sm:$0x1]
      %v830 = vsel %vm786, 0, %v829
      %831 = vst [vmem:[%s767 + $0x150] sm:$0x1] %v830
      %v832 = vld [vmem:[%s767 + $0x168] sm:$0x1]
      %v833 = vsel %vm786, 0, %v832
      %834 = vst [vmem:[%s767 + $0x168] sm:$0x1] %v833
      %v836 = vshrl.u32 %v744, 16
      %v838 = vrot.slane %v836, 7
      %v839 = vshll.u32 %v744, 16
      %v841 = vor.u32 %v838, %v839
      %v843 = vshrl.u32 %v745, 16
      %v845 = vrot.slane %v843, 7
      %v846 = vshll.u32 %v745, 16
      %v848 = vor.u32 %v845, %v846
      %v850 = vshrl.u32 %v746, 16
      %v852 = vrot.slane %v850, 7
      %v853 = vshll.u32 %v746, 16
      %v855 = vor.u32 %v852, %v853
      %v857 = vshrl.u32 %v747, 16
      %v859 = vrot.slane %v857, 7
      %v860 = vshll.u32 %v747, 16
      %v862 = vor.u32 %v859, %v860
      %v864 = vshrl.u32 %v748, 16
      %v866 = vrot.slane %v864, 7
      %v867 = vshll.u32 %v748, 16
      %v869 = vor.u32 %v866, %v867
      %v871 = vshrl.u32 %v749, 16
      %v873 = vrot.slane %v871, 7
      %v874 = vshll.u32 %v749, 16
      %v876 = vor.u32 %v873, %v874
      %v878 = vshrl.u32 %v750, 16
      %v880 = vrot.slane %v878, 7
      %v881 = vshll.u32 %v750, 16
      %v883 = vor.u32 %v880, %v881
      %v885 = vshrl.u32 %v751, 16
      %v887 = vrot.slane %v885, 7
      %v888 = vshll.u32 %v751, 16
      %v890 = vor.u32 %v887, %v888
      %v892 = vshrl.u32 %v752, 16
      %v894 = vrot.slane %v892, 7
      %v895 = vshll.u32 %v752, 16
      %v897 = vor.u32 %v894, %v895
      %v899 = vshrl.u32 %v753, 16
      %v901 = vrot.slane %v899, 7
      %v902 = vshll.u32 %v753, 16
      %v904 = vor.u32 %v901, %v902
      %v906 = vshrl.u32 %v754, 16
      %v908 = vrot.slane %v906, 7
      %v909 = vshll.u32 %v754, 16
      %v911 = vor.u32 %v908, %v909
      %v913 = vshrl.u32 %v755, 16
      %v915 = vrot.slane %v913, 7
      %v916 = vshll.u32 %v755, 16
      %v918 = vor.u32 %v915, %v916
      %v920 = vshrl.u32 %v756, 16
      %v922 = vrot.slane %v920, 7
      %v923 = vshll.u32 %v756, 16
      %v925 = vor.u32 %v922, %v923
      %v927 = vshrl.u32 %v757, 16
      %v929 = vrot.slane %v927, 7
      %v930 = vshll.u32 %v757, 16
      %v932 = vor.u32 %v929, %v930
      %v934 = vshrl.u32 %v758, 16
      %v936 = vrot.slane %v934, 7
      %v937 = vshll.u32 %v758, 16
      %v939 = vor.u32 %v936, %v937
      %v941 = vshrl.u32 %v759, 16
      %v943 = vrot.slane %v941, 7
      %v944 = vshll.u32 %v759, 16
      %v946 = vor.u32 %v943, %v944
      %vm963 = vcmask 1047552
      %vm964 = vsmask.f32 7938
      %vm965 = vmand %vm963, %vm964
      %v966 = vld [vmem:[%s767] sm:$0xff]
      %v967 = vsel %vm965, %v841, %v966
      %968 = vst [vmem:[%s767] sm:$0xff] %v967
      %v969 = vld [vmem:[%s767 + $0x18] sm:$0xff]
      %v970 = vsel %vm965, %v848, %v969
      %971 = vst [vmem:[%s767 + $0x18] sm:$0xff] %v970
      %v972 = vld [vmem:[%s767 + $0x30] sm:$0xff]
      %v973 = vsel %vm965, %v855, %v972
      %974 = vst [vmem:[%s767 + $0x30] sm:$0xff] %v973
      %v975 = vld [vmem:[%s767 + $0x48] sm:$0xff]
      %v976 = vsel %vm965, %v862, %v975
      %977 = vst [vmem:[%s767 + $0x48] sm:$0xff] %v976
      %v978 = vld [vmem:[%s767 + $0x60] sm:$0xff]
      %v979 = vsel %vm965, %v869, %v978
      %980 = vst [vmem:[%s767 + $0x60] sm:$0xff] %v979
      %v981 = vld [vmem:[%s767 + $0x78] sm:$0xff]
      %v982 = vsel %vm965, %v876, %v981
      %983 = vst [vmem:[%s767 + $0x78] sm:$0xff] %v982
      %v984 = vld [vmem:[%s767 + $0x90] sm:$0xff]
      %v985 = vsel %vm965, %v883, %v984
      %986 = vst [vmem:[%s767 + $0x90] sm:$0xff] %v985
      %v987 = vld [vmem:[%s767 + $0xa8] sm:$0xff]
      %v988 = vsel %vm965, %v890, %v987
      %989 = vst [vmem:[%s767 + $0xa8] sm:$0xff] %v988
      %v990 = vld [vmem:[%s767 + $0xc0] sm:$0xff]
      %v991 = vsel %vm965, %v897, %v990
      %992 = vst [vmem:[%s767 + $0xc0] sm:$0xff] %v991
      %v993 = vld [vmem:[%s767 + $0xd8] sm:$0xff]
      %v994 = vsel %vm965, %v904, %v993
      %995 = vst [vmem:[%s767 + $0xd8] sm:$0xff] %v994
      %v996 = vld [vmem:[%s767 + $0xf0] sm:$0xff]
      %v997 = vsel %vm965, %v911, %v996
      %998 = vst [vmem:[%s767 + $0xf0] sm:$0xff] %v997
      %v999 = vld [vmem:[%s767 + $0x108] sm:$0xff]
      %v1000 = vsel %vm965, %v918, %v999
      %1001 = vst [vmem:[%s767 + $0x108] sm:$0xff] %v1000
      %v1002 = vld [vmem:[%s767 + $0x120] sm:$0xff]
      %v1003 = vsel %vm965, %v925, %v1002
      %1004 = vst [vmem:[%s767 + $0x120] sm:$0xff] %v1003
      %v1005 = vld [vmem:[%s767 + $0x138] sm:$0xff]
      %v1006 = vsel %vm965, %v932, %v1005
      %1007 = vst [vmem:[%s767 + $0x138] sm:$0xff] %v1006
      %v1008 = vld [vmem:[%s767 + $0x150] sm:$0xff]
      %v1009 = vsel %vm965, %v939, %v1008
      %1010 = vst [vmem:[%s767 + $0x150] sm:$0xff] %v1009
      %v1011 = vld [vmem:[%s767 + $0x168] sm:$0xff]
      %v1012 = vsel %vm965, %v946, %v1011
      %1013 = vst [vmem:[%s767 + $0x168] sm:$0xff] %v1012
      %vm1014 = vcmask 1047559
      %vm1015 = vsmask.f32 7966
      %vm1016 = vmand %vm1014, %vm1015
      %v1017 = vld [vmem:[%s767 + $0x10] sm:$0x80]
      %v1018 = vsel %vm1016, 0, %v1017
      %1019 = vst [vmem:[%s767 + $0x10] sm:$0x80] %v1018
      %v1020 = vld [vmem:[%s767 + $0x28] sm:$0x80]
      %v1021 = vsel %vm1016, 0, %v1020
      %1022 = vst [vmem:[%s767 + $0x28] sm:$0x80] %v1021
      %v1023 = vld [vmem:[%s767 + $0x40] sm:$0x80]
      %v1024 = vsel %vm1016, 0, %v1023
      %1025 = vst [vmem:[%s767 + $0x40] sm:$0x80] %v1024
      %v1026 = vld [vmem:[%s767 + $0x58] sm:$0x80]
      %v1027 = vsel %vm1016, 0, %v1026
      %1028 = vst [vmem:[%s767 + $0x58] sm:$0x80] %v1027
      %v1029 = vld [vmem:[%s767 + $0x70] sm:$0x80]
      %v1030 = vsel %vm1016, 0, %v1029
      %1031 = vst [vmem:[%s767 + $0x70] sm:$0x80] %v1030
      %v1032 = vld [vmem:[%s767 + $0x88] sm:$0x80]
      %v1033 = vsel %vm1016, 0, %v1032
      %1034 = vst [vmem:[%s767 + $0x88] sm:$0x80] %v1033
      %v1035 = vld [vmem:[%s767 + $0xa0] sm:$0x80]
      %v1036 = vsel %vm1016, 0, %v1035
      %1037 = vst [vmem:[%s767 + $0xa0] sm:$0x80] %v1036
      %v1038 = vld [vmem:[%s767 + $0xb8] sm:$0x80]
      %v1039 = vsel %vm1016, 0, %v1038
      %1040 = vst [vmem:[%s767 + $0xb8] sm:$0x80] %v1039
      %v1041 = vld [vmem:[%s767 + $0xd0] sm:$0x80]
      %v1042 = vsel %vm1016, 0, %v1041
      %1043 = vst [vmem:[%s767 + $0xd0] sm:$0x80] %v1042
      %v1044 = vld [vmem:[%s767 + $0xe8] sm:$0x80]
      %v1045 = vsel %vm1016, 0, %v1044
      %1046 = vst [vmem:[%s767 + $0xe8] sm:$0x80] %v1045
      %v1047 = vld [vmem:[%s767 + $0x100] sm:$0x80]
      %v1048 = vsel %vm1016, 0, %v1047
      %1049 = vst [vmem:[%s767 + $0x100] sm:$0x80] %v1048
      %v1050 = vld [vmem:[%s767 + $0x118] sm:$0x80]
      %v1051 = vsel %vm1016, 0, %v1050
      %1052 = vst [vmem:[%s767 + $0x118] sm:$0x80] %v1051
      %v1053 = vld [vmem:[%s767 + $0x130] sm:$0x80]
      %v1054 = vsel %vm1016, 0, %v1053
      %1055 = vst [vmem:[%s767 + $0x130] sm:$0x80] %v1054
      %v1056 = vld [vmem:[%s767 + $0x148] sm:$0x80]
      %v1057 = vsel %vm1016, 0, %v1056
      %1058 = vst [vmem:[%s767 + $0x148] sm:$0x80] %v1057
      %v1059 = vld [vmem:[%s767 + $0x160] sm:$0x80]
      %v1060 = vsel %vm1016, 0, %v1059
      %1061 = vst [vmem:[%s767 + $0x160] sm:$0x80] %v1060
      %v1062 = vld [vmem:[%s767 + $0x178] sm:$0x80]
      %v1063 = vsel %vm1016, 0, %v1062
      %1064 = vst [vmem:[%s767 + $0x178] sm:$0x80] %v1063
      %v1065 = vrot.slane %v839, 1
      %v1066 = vor.u32 %v836, %v1065
      %v1067 = vrot.slane %v846, 1
      %v1068 = vor.u32 %v843, %v1067
      %v1069 = vrot.slane %v853, 1
      %v1070 = vor.u32 %v850, %v1069
      %v1071 = vrot.slane %v860, 1
      %v1072 = vor.u32 %v857, %v1071
      %v1073 = vrot.slane %v867, 1
      %v1074 = vor.u32 %v864, %v1073
      %v1075 = vrot.slane %v874, 1
      %v1076 = vor.u32 %v871, %v1075
      %v1077 = vrot.slane %v881, 1
      %v1078 = vor.u32 %v878, %v1077
      %v1079 = vrot.slane %v888, 1
      %v1080 = vor.u32 %v885, %v1079
      %v1081 = vrot.slane %v895, 1
      %v1082 = vor.u32 %v892, %v1081
      %v1083 = vrot.slane %v902, 1
      %v1084 = vor.u32 %v899, %v1083
      %v1085 = vrot.slane %v909, 1
      %v1086 = vor.u32 %v906, %v1085
      %v1087 = vrot.slane %v916, 1
      %v1088 = vor.u32 %v913, %v1087
      %v1089 = vrot.slane %v923, 1
      %v1090 = vor.u32 %v920, %v1089
      %v1091 = vrot.slane %v930, 1
      %v1092 = vor.u32 %v927, %v1091
      %v1093 = vrot.slane %v937, 1
      %v1094 = vor.u32 %v934, %v1093
      %v1095 = vrot.slane %v944, 1
      %v1096 = vor.u32 %v941, %v1095
      %vm1113 = vsmask.f32 7424
      %vm1114 = vmand %vm963, %vm1113
      %v1115 = vld [vmem:[%s767 + $0x10] sm:$0xff]
      %v1116 = vsel %vm1114, %v1066, %v1115
      %1117 = vst [vmem:[%s767 + $0x10] sm:$0xff] %v1116
      %v1118 = vld [vmem:[%s767 + $0x28] sm:$0xff]
      %v1119 = vsel %vm1114, %v1068, %v1118
      %1120 = vst [vmem:[%s767 + $0x28] sm:$0xff] %v1119
      %v1121 = vld [vmem:[%s767 + $0x40] sm:$0xff]
      %v1122 = vsel %vm1114, %v1070, %v1121
      %1123 = vst [vmem:[%s767 + $0x40] sm:$0xff] %v1122
      %v1124 = vld [vmem:[%s767 + $0x58] sm:$0xff]
      %v1125 = vsel %vm1114, %v1072, %v1124
      %1126 = vst [vmem:[%s767 + $0x58] sm:$0xff] %v1125
      %v1127 = vld [vmem:[%s767 + $0x70] sm:$0xff]
      %v1128 = vsel %vm1114, %v1074, %v1127
      %1129 = vst [vmem:[%s767 + $0x70] sm:$0xff] %v1128
      %v1130 = vld [vmem:[%s767 + $0x88] sm:$0xff]
      %v1131 = vsel %vm1114, %v1076, %v1130
      %1132 = vst [vmem:[%s767 + $0x88] sm:$0xff] %v1131
      %v1133 = vld [vmem:[%s767 + $0xa0] sm:$0xff]
      %v1134 = vsel %vm1114, %v1078, %v1133
      %1135 = vst [vmem:[%s767 + $0xa0] sm:$0xff] %v1134
      %v1136 = vld [vmem:[%s767 + $0xb8] sm:$0xff]
      %v1137 = vsel %vm1114, %v1080, %v1136
      %1138 = vst [vmem:[%s767 + $0xb8] sm:$0xff] %v1137
      %v1139 = vld [vmem:[%s767 + $0xd0] sm:$0xff]
      %v1140 = vsel %vm1114, %v1082, %v1139
      %1141 = vst [vmem:[%s767 + $0xd0] sm:$0xff] %v1140
      %v1142 = vld [vmem:[%s767 + $0xe8] sm:$0xff]
      %v1143 = vsel %vm1114, %v1084, %v1142
      %1144 = vst [vmem:[%s767 + $0xe8] sm:$0xff] %v1143
      %v1145 = vld [vmem:[%s767 + $0x100] sm:$0xff]
      %v1146 = vsel %vm1114, %v1086, %v1145
      %1147 = vst [vmem:[%s767 + $0x100] sm:$0xff] %v1146
      %v1148 = vld [vmem:[%s767 + $0x118] sm:$0xff]
      %v1149 = vsel %vm1114, %v1088, %v1148
      %1150 = vst [vmem:[%s767 + $0x118] sm:$0xff] %v1149
      %v1151 = vld [vmem:[%s767 + $0x130] sm:$0xff]
      %v1152 = vsel %vm1114, %v1090, %v1151
      %1153 = vst [vmem:[%s767 + $0x130] sm:$0xff] %v1152
      %v1154 = vld [vmem:[%s767 + $0x148] sm:$0xff]
      %v1155 = vsel %vm1114, %v1092, %v1154
      %1156 = vst [vmem:[%s767 + $0x148] sm:$0xff] %v1155
      %v1157 = vld [vmem:[%s767 + $0x160] sm:$0xff]
      %v1158 = vsel %vm1114, %v1094, %v1157
      %1159 = vst [vmem:[%s767 + $0x160] sm:$0xff] %v1158
      %v1160 = vld [vmem:[%s767 + $0x178] sm:$0xff]
      %v1161 = vsel %vm1114, %v1096, %v1160
      %1162 = vst [vmem:[%s767 + $0x178] sm:$0xff] %v1161
      %v1163 = vld [vmem:[#allocation2] sm:$0xff]
      %v1164 = vld [vmem:[#allocation2 + $0x8] sm:$0xff]
      %v1165 = vld [vmem:[#allocation2 + $0x10] sm:$0xff]
      %v1166 = vld [vmem:[#allocation2 + $0x18] sm:$0xff]
      %v1167 = vld [vmem:[#allocation2 + $0x20] sm:$0xff]
      %v1168 = vld [vmem:[#allocation2 + $0x28] sm:$0xff]
      %v1169 = vld [vmem:[#allocation2 + $0x30] sm:$0xff]
      %v1170 = vld [vmem:[#allocation2 + $0x38] sm:$0xff]
      %v1171 = vld [vmem:[#allocation2 + $0x40] sm:$0xff]
      %v1172 = vld [vmem:[#allocation2 + $0x48] sm:$0xff]
      %v1173 = vld [vmem:[#allocation2 + $0x50] sm:$0xff]
      %v1174 = vld [vmem:[#allocation2 + $0x58] sm:$0xff]
      %v1175 = vld [vmem:[#allocation2 + $0x60] sm:$0xff]
      %v1176 = vld [vmem:[#allocation2 + $0x68] sm:$0xff]
      %v1177 = vld [vmem:[#allocation2 + $0x70] sm:$0xff]
      %v1178 = vld [vmem:[#allocation2 + $0x78] sm:$0xff]
      %v1179 = vld [vmem:[#allocation2 + $0x80] sm:$0xff]
      %v1180 = vld [vmem:[#allocation2 + $0x88] sm:$0xff]
      %v1181 = vld [vmem:[#allocation2 + $0x90] sm:$0xff]
      %v1182 = vld [vmem:[#allocation2 + $0x98] sm:$0xff]
      %v1183 = vld [vmem:[#allocation2 + $0xa0] sm:$0xff]
      %v1184 = vld [vmem:[#allocation2 + $0xa8] sm:$0xff]
      %v1185 = vld [vmem:[#allocation2 + $0xb0] sm:$0xff]
      %v1186 = vld [vmem:[#allocation2 + $0xb8] sm:$0xff]
      %v1187 = vld [vmem:[#allocation2 + $0xc0] sm:$0xff]
      %v1188 = vld [vmem:[#allocation2 + $0xc8] sm:$0xff]
      %v1189 = vld [vmem:[#allocation2 + $0xd0] sm:$0xff]
      %v1190 = vld [vmem:[#allocation2 + $0xd8] sm:$0xff]
      %v1191 = vld [vmem:[#allocation2 + $0xe0] sm:$0xff]
      %v1192 = vld [vmem:[#allocation2 + $0xe8] sm:$0xff]
      %v1193 = vld [vmem:[#allocation2 + $0xf0] sm:$0xff]
      %v1194 = vld [vmem:[#allocation2 + $0xf8] sm:$0xff]
      %v1195 = vld [vmem:[#allocation2 + $0x100] sm:$0xff]
      %v1196 = vld [vmem:[#allocation2 + $0x108] sm:$0xff]
      %v1197 = vld [vmem:[#allocation2 + $0x110] sm:$0xff]
      %v1198 = vld [vmem:[#allocation2 + $0x118] sm:$0xff]
      %v1199 = vld [vmem:[#allocation2 + $0x120] sm:$0xff]
      %v1200 = vld [vmem:[#allocation2 + $0x128] sm:$0xff]
      %v1201 = vld [vmem:[#allocation2 + $0x130] sm:$0xff]
      %v1202 = vld [vmem:[#allocation2 + $0x138] sm:$0xff]
      %v1203 = vld [vmem:[#allocation2 + $0x140] sm:$0xff]
      %v1204 = vld [vmem:[#allocation2 + $0x148] sm:$0xff]
      %v1205 = vld [vmem:[#allocation2 + $0x150] sm:$0xff]
      %v1206 = vld [vmem:[#allocation2 + $0x158] sm:$0xff]
      %v1207 = vld [vmem:[#allocation2 + $0x160] sm:$0xff]
      %v1208 = vld [vmem:[#allocation2 + $0x168] sm:$0xff]
      %v1209 = vld [vmem:[#allocation2 + $0x170] sm:$0xff]
      %v1210 = vld [vmem:[#allocation2 + $0x178] sm:$0xff]
      %v1211 = vld [vmem:[%s4] sm:$0xf]
      %v1212 = vld [vmem:[%s4 + $0x4] sm:$0xf]
      %v1213 = vld [vmem:[%s4 + $0x8] sm:$0xf]
      %v1214 = vld [vmem:[%s4 + $0xc] sm:$0xf]
      %v1215 = vld [vmem:[%s4 + $0x10] sm:$0xf]
      %v1216 = vld [vmem:[%s4 + $0x14] sm:$0xf]
      %v1217 = vld [vmem:[%s4 + $0x18] sm:$0xf]
      %v1218 = vld [vmem:[%s4 + $0x1c] sm:$0xf]
      %v1219 = vld [vmem:[%s4 + $0x20] sm:$0xf]
      %v1220 = vld [vmem:[%s4 + $0x24] sm:$0xf]
      %v1221 = vld [vmem:[%s4 + $0x28] sm:$0xf]
      %v1222 = vld [vmem:[%s4 + $0x2c] sm:$0xf]
      %v1223 = vld [vmem:[%s4 + $0x30] sm:$0xf]
      %v1224 = vld [vmem:[%s4 + $0x34] sm:$0xf]
      %v1225 = vld [vmem:[%s4 + $0x38] sm:$0xf]
      %v1226 = vld [vmem:[%s4 + $0x3c] sm:$0xf]
      %v1227 = vld [vmem:[%s4 + $0x40] sm:$0xf]
      %v1228 = vld [vmem:[%s4 + $0x44] sm:$0xf]
      %v1229 = vld [vmem:[%s4 + $0x48] sm:$0xf]
      %v1230 = vld [vmem:[%s4 + $0x4c] sm:$0xf]
      %v1231 = vld [vmem:[%s4 + $0x50] sm:$0xf]
      %v1232 = vld [vmem:[%s4 + $0x54] sm:$0xf]
      %v1233 = vld [vmem:[%s4 + $0x58] sm:$0xf]
      %v1234 = vld [vmem:[%s4 + $0x5c] sm:$0xf]
      %v1235 = vld [vmem:[%s4 + $0x60] sm:$0xf]
      %v1236 = vld [vmem:[%s4 + $0x64] sm:$0xf]
      %v1237 = vld [vmem:[%s4 + $0x68] sm:$0xf]
      %v1238 = vld [vmem:[%s4 + $0x6c] sm:$0xf]
      %v1239 = vld [vmem:[%s4 + $0x70] sm:$0xf]
      %v1240 = vld [vmem:[%s4 + $0x74] sm:$0xf]
      %v1241 = vld [vmem:[%s4 + $0x78] sm:$0xf]
      %v1242 = vld [vmem:[%s4 + $0x7c] sm:$0xf]
      %v1243 = vld [vmem:[%s4 + $0x80] sm:$0xf]
      %v1244 = vld [vmem:[%s4 + $0x84] sm:$0xf]
      %v1245 = vld [vmem:[%s4 + $0x88] sm:$0xf]
      %v1246 = vld [vmem:[%s4 + $0x8c] sm:$0xf]
      %v1247 = vld [vmem:[%s4 + $0x90] sm:$0xf]
      %v1248 = vld [vmem:[%s4 + $0x94] sm:$0xf]
      %v1249 = vld [vmem:[%s4 + $0x98] sm:$0xf]
      %v1250 = vld [vmem:[%s4 + $0x9c] sm:$0xf]
      %v1251 = vld [vmem:[%s4 + $0xa0] sm:$0xf]
      %v1252 = vld [vmem:[%s4 + $0xa4] sm:$0xf]
      %v1253 = vld [vmem:[%s4 + $0xa8] sm:$0xf]
      %v1254 = vld [vmem:[%s4 + $0xac] sm:$0xf]
      %v1255 = vld [vmem:[%s4 + $0xb0] sm:$0xf]
      %v1256 = vld [vmem:[%s4 + $0xb4] sm:$0xf]
      %v1257 = vld [vmem:[%s4 + $0xb8] sm:$0xf]
      %v1258 = vld [vmem:[%s4 + $0xbc] sm:$0xf]
      %v1307 = vunpack.c.l.b16 %v1211
      %v1308 = vunpack.c.l.b16 %v1212
      %v1309 = vunpack.c.l.b16 %v1213
      %v1310 = vunpack.c.l.b16 %v1214
      %v1311 = vunpack.c.l.b16 %v1215
      %v1312 = vunpack.c.l.b16 %v1216
      %v1313 = vunpack.c.l.b16 %v1217
      %v1314 = vunpack.c.l.b16 %v1218
      %v1315 = vunpack.c.l.b16 %v1219
      %v1316 = vunpack.c.l.b16 %v1220
      %v1317 = vunpack.c.l.b16 %v1221
      %v1318 = vunpack.c.l.b16 %v1222
      %v1319 = vunpack.c.l.b16 %v1223
      %v1320 = vunpack.c.l.b16 %v1224
      %v1321 = vunpack.c.l.b16 %v1225
      %v1322 = vunpack.c.l.b16 %v1226
      %v1323 = vunpack.c.l.b16 %v1227
      %v1324 = vunpack.c.l.b16 %v1228
      %v1325 = vunpack.c.l.b16 %v1229
      %v1326 = vunpack.c.l.b16 %v1230
      %v1327 = vunpack.c.l.b16 %v1231
      %v1328 = vunpack.c.l.b16 %v1232
      %v1329 = vunpack.c.l.b16 %v1233
      %v1330 = vunpack.c.l.b16 %v1234
      %v1331 = vunpack.c.l.b16 %v1235
      %v1332 = vunpack.c.l.b16 %v1236
      %v1333 = vunpack.c.l.b16 %v1237
      %v1334 = vunpack.c.l.b16 %v1238
      %v1335 = vunpack.c.l.b16 %v1239
      %v1336 = vunpack.c.l.b16 %v1240
      %v1337 = vunpack.c.l.b16 %v1241
      %v1338 = vunpack.c.l.b16 %v1242
      %v1339 = vunpack.c.l.b16 %v1243
      %v1340 = vunpack.c.l.b16 %v1244
      %v1341 = vunpack.c.l.b16 %v1245
      %v1342 = vunpack.c.l.b16 %v1246
      %v1343 = vunpack.c.l.b16 %v1247
      %v1344 = vunpack.c.l.b16 %v1248
      %v1345 = vunpack.c.l.b16 %v1249
      %v1346 = vunpack.c.l.b16 %v1250
      %v1347 = vunpack.c.l.b16 %v1251
      %v1348 = vunpack.c.l.b16 %v1252
      %v1349 = vunpack.c.l.b16 %v1253
      %v1350 = vunpack.c.l.b16 %v1254
      %v1351 = vunpack.c.l.b16 %v1255
      %v1352 = vunpack.c.l.b16 %v1256
      %v1353 = vunpack.c.l.b16 %v1257
      %v1354 = vunpack.c.l.b16 %v1258
      %v1355 = vpack.c.b16 %v1308, %v1307
      %v1356 = vpack.c.b16 %v1310, %v1309
      %v1357 = vpack.c.b16 %v1312, %v1311
      %v1358 = vpack.c.b16 %v1314, %v1313
      %v1359 = vpack.c.b16 %v1316, %v1315
      %v1360 = vpack.c.b16 %v1318, %v1317
      %v1361 = vpack.c.b16 %v1320, %v1319
      %v1362 = vpack.c.b16 %v1322, %v1321
      %v1363 = vpack.c.b16 %v1324, %v1323
      %v1364 = vpack.c.b16 %v1326, %v1325
      %v1365 = vpack.c.b16 %v1328, %v1327
      %v1366 = vpack.c.b16 %v1330, %v1329
      %v1367 = vpack.c.b16 %v1332, %v1331
      %v1368 = vpack.c.b16 %v1334, %v1333
      %v1369 = vpack.c.b16 %v1336, %v1335
      %v1370 = vpack.c.b16 %v1338, %v1337
      %v1371 = vpack.c.b16 %v1340, %v1339
      %v1372 = vpack.c.b16 %v1342, %v1341
      %v1373 = vpack.c.b16 %v1344, %v1343
      %v1374 = vpack.c.b16 %v1346, %v1345
      %v1375 = vpack.c.b16 %v1348, %v1347
      %v1376 = vpack.c.b16 %v1350, %v1349
      %v1377 = vpack.c.b16 %v1352, %v1351
      %v1378 = vpack.c.b16 %v1354, %v1353
      %1403 = vmatprep.subr.bf16.mxu0 0
      %1404 = vmatpush1.bf16.msra.mxu0 %v1355
      %1405 = vmatprep.subr.bf16.mxu0 0
      %1406 = vmatpush1.bf16.msra.mxu0 %v1356
      %1407 = vmatprep.subr.bf16.mxu0 0
      %1408 = vmatpush1.bf16.msra.mxu0 %v1357
      %1409 = vmatprep.subr.bf16.mxu0 0
      %1410 = vmatpush1.bf16.msra.mxu0 %v1358
      %1411 = vmatprep.subr.bf16.mxu0 0
      %1412 = vmatpush1.bf16.msra.mxu0 %v1359
      %1413 = vmatprep.subr.bf16.mxu0 0
      %1414 = vmatpush1.bf16.msra.mxu0 %v1360
      %1415 = vmatprep.subr.bf16.mxu0 0
      %1416 = vmatpush1.bf16.msra.mxu0 %v1361
      %1417 = vmatprep.subr.bf16.mxu0 0
      %1418 = vmatpush1.bf16.msra.mxu0 %v1362
      %1419 = vmatprep.subr.bf16.mxu0 0
      %1420 = vmatpush1.bf16.msra.mxu0 %v1363
      %1421 = vmatprep.subr.bf16.mxu0 0
      %1422 = vmatpush1.bf16.msra.mxu0 %v1364
      %1423 = vmatprep.subr.bf16.mxu0 0
      %1424 = vmatpush1.bf16.msra.mxu0 %v1365
      %1425 = vmatprep.subr.bf16.mxu0 0
      %1426 = vmatpush1.bf16.msra.mxu0 %v1366
      %1427 = vmatprep.subr.bf16.mxu0 0
      %1428 = vmatpush1.bf16.msra.mxu0 %v1367
      %1429 = vmatprep.subr.bf16.mxu0 0
      %1430 = vmatpush1.bf16.msra.mxu0 %v1368
      %1431 = vmatprep.subr.bf16.mxu0 0
      %1432 = vmatpush1.bf16.msra.mxu0 %v1369
      %1433 = vmatprep.subr.bf16.mxu0 0
      %1434 = vmatpush1.bf16.msra.mxu0 %v1370
      %1435 = vmatprep.mubr.bf16.mxu0 %v1164
      %1436 = vmatmul.mubr.bf16.gmra.mrb[0].mxu0 %v1163
      %v1437 = vpop.f32.mrb[0].mxu0
      %v1438 = vadd.f32 0.0, %v1437
      %v1439 = vpop.f32.mrb[0].mxu0
      %v1440 = vpop.f32.mrb[0].mxu0
      %v1441 = vadd.f32 0.0, %v1440
      %v1442 = vpop.f32.mrb[0].mxu0
      %1443 = vmatprep.mubr.bf16.mxu0 %v1167
      %1444 = vmatmul.mubr.bf16.gmra.mrb[0].mxu0 %v1166
      %v1445 = vpop.f32.mrb[0].mxu0
      %v1446 = vadd.f32 0.0, %v1445
      %v1447 = vpop.f32.mrb[0].mxu0
      %v1448 = vpop.f32.mrb[0].mxu0
      %v1449 = vadd.f32 0.0, %v1448
      %v1450 = vpop.f32.mrb[0].mxu0
      %1451 = vmatprep.mubr.bf16.mxu0 %v1170
      %1452 = vmatmul.mubr.bf16.gmra.mrb[0].mxu0 %v1169
      %v1453 = vpop.f32.mrb[0].mxu0
      %v1454 = vadd.f32 0.0, %v1453
      %v1455 = vpop.f32.mrb[0].mxu0
      %v1456 = vpop.f32.mrb[0].mxu0
      %v1457 = vadd.f32 0.0, %v1456
      %v1458 = vpop.f32.mrb[0].mxu0
      %1459 = vmatprep.mubr.bf16.mxu0 %v1173
      %1460 = vmatmul.mubr.bf16.gmra.mrb[0].mxu0 %v1172
      %v1461 = vpop.f32.mrb[0].mxu0
      %v1462 = vadd.f32 0.0, %v1461
      %v1463 = vpop.f32.mrb[0].mxu0
      %v1464 = vpop.f32.mrb[0].mxu0
      %v1465 = vadd.f32 0.0, %v1464
      %v1466 = vpop.f32.mrb[0].mxu0
      %1467 = vmatprep.mubr.bf16.mxu0 %v1176
      %1468 = vmatmul.mubr.bf16.gmra.mrb[0].mxu0 %v1175
      %v1469 = vpop.f32.mrb[0].mxu0
      %v1470 = vadd.f32 0.0, %v1469
      %v1471 = vpop.f32.mrb[0].mxu0
      %v1472 = vpop.f32.mrb[0].mxu0
      %v1473 = vadd.f32 0.0, %v1472
      %v1474 = vpop.f32.mrb[0].mxu0
      %1475 = vmatprep.mubr.bf16.mxu0 %v1179
      %1476 = vmatmul.mubr.bf16.gmra.mrb[0].mxu0 %v1178
      %v1477 = vpop.f32.mrb[0].mxu0
      %v1478 = vadd.f32 0.0, %v1477
      %v1479 = vpop.f32.mrb[0].mxu0
      %v1480 = vpop.f32.mrb[0].mxu0
      %v1481 = vadd.f32 0.0, %v1480
      %v1482 = vpop.f32.mrb[0].mxu0
      %1483 = vmatprep.mubr.bf16.mxu0 %v1182
      %1484 = vmatmul.mubr.bf16.gmra.mrb[0].mxu0 %v1181
      %v1485 = vpop.f32.mrb[0].mxu0
      %v1486 = vadd.f32 0.0, %v1485
      %v1487 = vpop.f32.mrb[0].mxu0
      %v1488 = vpop.f32.mrb[0].mxu0
      %v1489 = vadd.f32 0.0, %v1488
      %v1490 = vpop.f32.mrb[0].mxu0
      %1491 = vmatprep.mubr.bf16.mxu0 %v1185
      %1492 = vmatmul.mubr.bf16.gmra.mrb[0].mxu0 %v1184
      %v1493 = vpop.f32.mrb[0].mxu0
      %v1494 = vadd.f32 0.0, %v1493
      %v1495 = vpop.f32.mrb[0].mxu0
      %v1496 = vpop.f32.mrb[0].mxu0
      %v1497 = vadd.f32 0.0, %v1496
      %v1498 = vpop.f32.mrb[0].mxu0
      %1499 = vmatprep.mubr.bf16.mxu0 %v1188
      %1500 = vmatmul.mubr.bf16.gmra.mrb[0].mxu0 %v1187
      %v1501 = vpop.f32.mrb[0].mxu0
      %v1502 = vadd.f32 0.0, %v1501
      %v1503 = vpop.f32.mrb[0].mxu0
      %v1504 = vpop.f32.mrb[0].mxu0
      %v1505 = vadd.f32 0.0, %v1504
      %v1506 = vpop.f32.mrb[0].mxu0
      %1507 = vmatprep.mubr.bf16.mxu0 %v1191
      %1508 = vmatmul.mubr.bf16.gmra.mrb[0].mxu0 %v1190
      %v1509 = vpop.f32.mrb[0].mxu0
      %v1510 = vadd.f32 0.0, %v1509
      %v1511 = vpop.f32.mrb[0].mxu0
      %v1512 = vpop.f32.mrb[0].mxu0
      %v1513 = vadd.f32 0.0, %v1512
      %v1514 = vpop.f32.mrb[0].mxu0
      %1515 = vmatprep.mubr.bf16.mxu0 %v1194
      %1516 = vmatmul.mubr.bf16.gmra.mrb[0].mxu0 %v1193
      %v1517 = vpop.f32.mrb[0].mxu0
      %v1518 = vadd.f32 0.0, %v1517
      %v1519 = vpop.f32.mrb[0].mxu0
      %v1520 = vpop.f32.mrb[0].mxu0
      %v1521 = vadd.f32 0.0, %v1520
      %v1522 = vpop.f32.mrb[0].mxu0
      %1523 = vmatprep.mubr.bf16.mxu0 %v1197
      %1524 = vmatmul.mubr.bf16.gmra.mrb[0].mxu0 %v1196
      %v1525 = vpop.f32.mrb[0].mxu0
      %v1526 = vadd.f32 0.0, %v1525
      %v1527 = vpop.f32.mrb[0].mxu0
      %v1528 = vpop.f32.mrb[0].mxu0
      %v1529 = vadd.f32 0.0, %v1528
      %v1530 = vpop.f32.mrb[0].mxu0
      %1531 = vmatprep.mubr.bf16.mxu0 %v1200
      %1532 = vmatmul.mubr.bf16.gmra.mrb[0].mxu0 %v1199
      %v1533 = vpop.f32.mrb[0].mxu0
      %v1534 = vadd.f32 0.0, %v1533
      %v1535 = vpop.f32.mrb[0].mxu0
      %v1536 = vpop.f32.mrb[0].mxu0
      %v1537 = vadd.f32 0.0, %v1536
      %v1538 = vpop.f32.mrb[0].mxu0
      %1539 = vmatprep.mubr.bf16.mxu0 %v1203
      %1540 = vmatmul.mubr.bf16.gmra.mrb[0].mxu0 %v1202
      %v1541 = vpop.f32.mrb[0].mxu0
      %v1542 = vadd.f32 0.0, %v1541
      %v1543 = vpop.f32.mrb[0].mxu0
      %v1544 = vpop.f32.mrb[0].mxu0
      %v1545 = vadd.f32 0.0, %v1544
      %v1546 = vpop.f32.mrb[0].mxu0
      %1547 = vmatprep.mubr.bf16.mxu0 %v1206
      %1548 = vmatmul.mubr.bf16.gmra.mrb[0].mxu0 %v1205
      %v1549 = vpop.f32.mrb[0].mxu0
      %v1550 = vadd.f32 0.0, %v1549
      %v1551 = vpop.f32.mrb[0].mxu0
      %v1552 = vpop.f32.mrb[0].mxu0
      %v1553 = vadd.f32 0.0, %v1552
      %v1554 = vpop.f32.mrb[0].mxu0
      %1555 = vmatprep.mubr.bf16.mxu0 %v1209
      %1556 = vmatmul.mubr.bf16.gmra.mrb[0].mxu0 %v1208
      %v1557 = vpop.f32.mrb[0].mxu0
      %v1558 = vadd.f32 0.0, %v1557
      %v1559 = vpop.f32.mrb[0].mxu0
      %v1560 = vpop.f32.mrb[0].mxu0
      %v1561 = vadd.f32 0.0, %v1560
      %v1562 = vpop.f32.mrb[0].mxu0
      %1563 = vdwg.mxu0
      %1564 = vmatprep.subr.bf16.mxu0 0
      %1565 = vmatpush1.bf16.msra.mxu0 %v1371
      %1566 = vmatprep.subr.bf16.mxu0 0
      %1567 = vmatpush1.bf16.msra.mxu0 %v1372
      %1568 = vmatprep.subr.bf16.mxu0 0
      %1569 = vmatpush1.bf16.msra.mxu0 %v1373
      %1570 = vmatprep.subr.bf16.mxu0 0
      %1571 = vmatpush1.bf16.msra.mxu0 %v1374
      %1572 = vmatprep.subr.bf16.mxu0 0
      %1573 = vmatpush1.bf16.msra.mxu0 %v1375
      %1574 = vmatprep.subr.bf16.mxu0 0
      %1575 = vmatpush1.bf16.msra.mxu0 %v1376
      %1576 = vmatprep.subr.bf16.mxu0 0
      %1577 = vmatpush1.bf16.msra.mxu0 %v1377
      %1578 = vmatprep.subr.bf16.mxu0 0
      %1579 = vmatpush1.bf16.msra.mxu0 %v1378
      %1580 = vmatprep.subr.bf16.mxu0 0
      %1581 = vmatpush1.bf16.msra.mxu0 0
      %1582 = vmatprep.subr.bf16.mxu0 0
      %1583 = vmatpush1.bf16.msra.mxu0 0
      %1584 = vmatprep.subr.bf16.mxu0 0
      %1585 = vmatpush1.bf16.msra.mxu0 0
      %1586 = vmatprep.subr.bf16.mxu0 0
      %1587 = vmatpush1.bf16.msra.mxu0 0
      %1588 = vmatprep.subr.bf16.mxu0 0
      %1589 = vmatpush1.bf16.msra.mxu0 0
      %1590 = vmatprep.subr.bf16.mxu0 0
      %1591 = vmatpush1.bf16.msra.mxu0 0
      %1592 = vmatprep.subr.bf16.mxu0 0
      %1593 = vmatpush1.bf16.msra.mxu0 0
      %1594 = vmatprep.subr.bf16.mxu0 0
      %1595 = vmatpush1.bf16.msra.mxu0 0
      %1596 = vmatprep.mubr.bf16.mxu0 0
      %1597 = vmatmul.mubr.bf16.gmra.mrb[0].mxu0 %v1165
      %v1598 = vpop.f32.mrb[0].mxu0
      %v1599 = vadd.f32 %v1438, %v1598
      %v1600 = vpop.f32.mrb[0].mxu0
      %v1601 = vpop.f32.mrb[0].mxu0
      %v1602 = vadd.f32 %v1441, %v1601
      %v1603 = vpop.f32.mrb[0].mxu0
      %1604 = vmatprep.mubr.bf16.mxu0 0
      %1605 = vmatmul.mubr.bf16.gmra.mrb[0].mxu0 %v1168
      %v1606 = vpop.f32.mrb[0].mxu0
      %v1607 = vadd.f32 %v1446, %v1606
      %v1608 = vpop.f32.mrb[0].mxu0
      %v1609 = vpop.f32.mrb[0].mxu0
      %v1610 = vadd.f32 %v1449, %v1609
      %v1611 = vpop.f32.mrb[0].mxu0
      %1612 = vmatprep.mubr.bf16.mxu0 0
      %1613 = vmatmul.mubr.bf16.gmra.mrb[0].mxu0 %v1171
      %v1614 = vpop.f32.mrb[0].mxu0
      %v1615 = vadd.f32 %v1454, %v1614
      %v1616 = vpop.f32.mrb[0].mxu0
      %v1617 = vpop.f32.mrb[0].mxu0
      %v1618 = vadd.f32 %v1457, %v1617
      %v1619 = vpop.f32.mrb[0].mxu0
      %1620 = vmatprep.mubr.bf16.mxu0 0
      %1621 = vmatmul.mubr.bf16.gmra.mrb[0].mxu0 %v1174
      %v1622 = vpop.f32.mrb[0].mxu0
      %v1623 = vadd.f32 %v1462, %v1622
      %v1624 = vpop.f32.mrb[0].mxu0
      %v1625 = vpop.f32.mrb[0].mxu0
      %v1626 = vadd.f32 %v1465, %v1625
      %v1627 = vpop.f32.mrb[0].mxu0
      %1628 = vmatprep.mubr.bf16.mxu0 0
      %1629 = vmatmul.mubr.bf16.gmra.mrb[0].mxu0 %v1177
      %v1630 = vpop.f32.mrb[0].mxu0
      %v1631 = vadd.f32 %v1470, %v1630
      %v1632 = vpop.f32.mrb[0].mxu0
      %v1633 = vpop.f32.mrb[0].mxu0
      %v1634 = vadd.f32 %v1473, %v1633
      %v1635 = vpop.f32.mrb[0].mxu0
      %1636 = vmatprep.mubr.bf16.mxu0 0
      %1637 = vmatmul.mubr.bf16.gmra.mrb[0].mxu0 %v1180
      %v1638 = vpop.f32.mrb[0].mxu0
      %v1639 = vadd.f32 %v1478, %v1638
      %v1640 = vpop.f32.mrb[0].mxu0
      %v1641 = vpop.f32.mrb[0].mxu0
      %v1642 = vadd.f32 %v1481, %v1641
      %v1643 = vpop.f32.mrb[0].mxu0
      %1644 = vmatprep.mubr.bf16.mxu0 0
      %1645 = vmatmul.mubr.bf16.gmra.mrb[0].mxu0 %v1183
      %v1646 = vpop.f32.mrb[0].mxu0
      %v1647 = vadd.f32 %v1486, %v1646
      %v1648 = vpop.f32.mrb[0].mxu0
      %v1649 = vpop.f32.mrb[0].mxu0
      %v1650 = vadd.f32 %v1489, %v1649
      %v1651 = vpop.f32.mrb[0].mxu0
      %1652 = vmatprep.mubr.bf16.mxu0 0
      %1653 = vmatmul.mubr.bf16.gmra.mrb[0].mxu0 %v1186
      %v1654 = vpop.f32.mrb[0].mxu0
      %v1655 = vadd.f32 %v1494, %v1654
      %v1656 = vpop.f32.mrb[0].mxu0
      %v1657 = vpop.f32.mrb[0].mxu0
      %v1658 = vadd.f32 %v1497, %v1657
      %v1659 = vpop.f32.mrb[0].mxu0
      %1660 = vmatprep.mubr.bf16.mxu0 0
      %1661 = vmatmul.mubr.bf16.gmra.mrb[0].mxu0 %v1189
      %v1662 = vpop.f32.mrb[0].mxu0
      %v1663 = vadd.f32 %v1502, %v1662
      %v1664 = vpop.f32.mrb[0].mxu0
      %v1665 = vpop.f32.mrb[0].mxu0
      %v1666 = vadd.f32 %v1505, %v1665
      %v1667 = vpop.f32.mrb[0].mxu0
      %1668 = vmatprep.mubr.bf16.mxu0 0
      %1669 = vmatmul.mubr.bf16.gmra.mrb[0].mxu0 %v1192
      %v1670 = vpop.f32.mrb[0].mxu0
      %v1671 = vadd.f32 %v1510, %v1670
      %v1672 = vpop.f32.mrb[0].mxu0
      %v1673 = vpop.f32.mrb[0].mxu0
      %v1674 = vadd.f32 %v1513, %v1673
      %v1675 = vpop.f32.mrb[0].mxu0
      %1676 = vmatprep.mubr.bf16.mxu0 0
      %1677 = vmatmul.mubr.bf16.gmra.mrb[0].mxu0 %v1195
      %v1678 = vpop.f32.mrb[0].mxu0
      %v1679 = vadd.f32 %v1518, %v1678
      %v1680 = vpop.f32.mrb[0].mxu0
      %v1681 = vpop.f32.mrb[0].mxu0
      %v1682 = vadd.f32 %v1521, %v1681
      %v1683 = vpop.f32.mrb[0].mxu0
      %1684 = vmatprep.mubr.bf16.mxu0 0
      %1685 = vmatmul.mubr.bf16.gmra.mrb[0].mxu0 %v1198
      %v1686 = vpop.f32.mrb[0].mxu0
      %v1687 = vadd.f32 %v1526, %v1686
      %v1688 = vpop.f32.mrb[0].mxu0
      %v1689 = vpop.f32.mrb[0].mxu0
      %v1690 = vadd.f32 %v1529, %v1689
      %v1691 = vpop.f32.mrb[0].mxu0
      %1692 = vmatprep.mubr.bf16.mxu0 0
      %1693 = vmatmul.mubr.bf16.gmra.mrb[0].mxu0 %v1201
      %v1694 = vpop.f32.mrb[0].mxu0
      %v1695 = vadd.f32 %v1534, %v1694
      %v1696 = vpop.f32.mrb[0].mxu0
      %v1697 = vpop.f32.mrb[0].mxu0
      %v1698 = vadd.f32 %v1537, %v1697
      %v1699 = vpop.f32.mrb[0].mxu0
      %1700 = vmatprep.mubr.bf16.mxu0 0
      %1701 = vmatmul.mubr.bf16.gmra.mrb[0].mxu0 %v1204
      %v1702 = vpop.f32.mrb[0].mxu0
      %v1703 = vadd.f32 %v1542, %v1702
      %v1704 = vpop.f32.mrb[0].mxu0
      %v1705 = vpop.f32.mrb[0].mxu0
      %v1706 = vadd.f32 %v1545, %v1705
      %v1707 = vpop.f32.mrb[0].mxu0
      %1708 = vmatprep.mubr.bf16.mxu0 0
      %1709 = vmatmul.mubr.bf16.gmra.mrb[0].mxu0 %v1207
      %v1710 = vpop.f32.mrb[0].mxu0
      %v1711 = vadd.f32 %v1550, %v1710
      %v1712 = vpop.f32.mrb[0].mxu0
      %v1713 = vpop.f32.mrb[0].mxu0
      %v1714 = vadd.f32 %v1553, %v1713
      %v1715 = vpop.f32.mrb[0].mxu0
      %1716 = vmatprep.mubr.bf16.mxu0 0
      %1717 = vmatmul.mubr.bf16.gmra.mrb[0].mxu0 %v1210
      %v1718 = vpop.f32.mrb[0].mxu0
      %v1719 = vadd.f32 %v1558, %v1718
      %v1720 = vpop.f32.mrb[0].mxu0
      %v1721 = vpop.f32.mrb[0].mxu0
      %v1722 = vadd.f32 %v1561, %v1721
      %v1723 = vpop.f32.mrb[0].mxu0
      %1724 = vdwg.mxu0
      %1725 = vst [vmem:[#allocation3] sm:$0xff] %v1599
      %1726 = vst [vmem:[#allocation3 + $0x8] sm:$0xff] %v1602
      %1727 = vst [vmem:[#allocation3 + $0x10] sm:$0xff] %v1607
      %1728 = vst [vmem:[#allocation3 + $0x18] sm:$0xff] %v1610
      %1729 = vst [vmem:[#allocation3 + $0x20] sm:$0xff] %v1615
      %1730 = vst [vmem:[#allocation3 + $0x28] sm:$0xff] %v1618
      %1731 = vst [vmem:[#allocation3 + $0x30] sm:$0xff] %v1623
      %1732 = vst [vmem:[#allocation3 + $0x38] sm:$0xff] %v1626
      %1733 = vst [vmem:[#allocation3 + $0x40] sm:$0xff] %v1631
      %1734 = vst [vmem:[#allocation3 + $0x48] sm:$0xff] %v1634
      %1735 = vst [vmem:[#allocation3 + $0x50] sm:$0xff] %v1639
      %1736 = vst [vmem:[#allocation3 + $0x58] sm:$0xff] %v1642
      %1737 = vst [vmem:[#allocation3 + $0x60] sm:$0xff] %v1647
      %1738 = vst [vmem:[#allocation3 + $0x68] sm:$0xff] %v1650
      %1739 = vst [vmem:[#allocation3 + $0x70] sm:$0xff] %v1655
      %1740 = vst [vmem:[#allocation3 + $0x78] sm:$0xff] %v1658
      %1741 = vst [vmem:[#allocation3 + $0x80] sm:$0xff] %v1663
      %1742 = vst [vmem:[#allocation3 + $0x88] sm:$0xff] %v1666
      %1743 = vst [vmem:[#allocation3 + $0x90] sm:$0xff] %v1671
      %1744 = vst [vmem:[#allocation3 + $0x98] sm:$0xff] %v1674
      %1745 = vst [vmem:[#allocation3 + $0xa0] sm:$0xff] %v1679
      %1746 = vst [vmem:[#allocation3 + $0xa8] sm:$0xff] %v1682
      %1747 = vst [vmem:[#allocation3 + $0xb0] sm:$0xff] %v1687
      %1748 = vst [vmem:[#allocation3 + $0xb8] sm:$0xff] %v1690
      %1749 = vst [vmem:[#allocation3 + $0xc0] sm:$0xff] %v1695
      %1750 = vst [vmem:[#allocation3 + $0xc8] sm:$0xff] %v1698
      %1751 = vst [vmem:[#allocation3 + $0xd0] sm:$0xff] %v1703
      %1752 = vst [vmem:[#allocation3 + $0xd8] sm:$0xff] %v1706
      %1753 = vst [vmem:[#allocation3 + $0xe0] sm:$0xff] %v1711
      %1754 = vst [vmem:[#allocation3 + $0xe8] sm:$0xff] %v1714
      %1755 = vst [vmem:[#allocation3 + $0xf0] sm:$0xff] %v1719
      %1756 = vst [vmem:[#allocation3 + $0xf8] sm:$0xff] %v1722
      %v1757 = vld [vmem:[#allocation3] sm:$0xff]
      %v1758 = vld [vmem:[#allocation3 + $0x8] sm:$0xff]
      %v1759 = vld [vmem:[#allocation3 + $0x10] sm:$0xff]
      %v1760 = vld [vmem:[#allocation3 + $0x18] sm:$0xff]
      %v1761 = vld [vmem:[#allocation3 + $0x20] sm:$0xff]
      %v1762 = vld [vmem:[#allocation3 + $0x28] sm:$0xff]
      %v1763 = vld [vmem:[#allocation3 + $0x30] sm:$0xff]
      %v1764 = vld [vmem:[#allocation3 + $0x38] sm:$0xff]
      %v1765 = vld [vmem:[#allocation3 + $0x40] sm:$0xff]
      %v1766 = vld [vmem:[#allocation3 + $0x48] sm:$0xff]
      %v1767 = vld [vmem:[#allocation3 + $0x50] sm:$0xff]
      %v1768 = vld [vmem:[#allocation3 + $0x58] sm:$0xff]
      %v1769 = vld [vmem:[#allocation3 + $0x60] sm:$0xff]
      %v1770 = vld [vmem:[#allocation3 + $0x68] sm:$0xff]
      %v1771 = vld [vmem:[#allocation3 + $0x70] sm:$0xff]
      %v1772 = vld [vmem:[#allocation3 + $0x78] sm:$0xff]
      %v1773 = vld [vmem:[#allocation3 + $0x80] sm:$0xff]
      %v1774 = vld [vmem:[#allocation3 + $0x88] sm:$0xff]
      %v1775 = vld [vmem:[#allocation3 + $0x90] sm:$0xff]
      %v1776 = vld [vmem:[#allocation3 + $0x98] sm:$0xff]
      %v1777 = vld [vmem:[#allocation3 + $0xa0] sm:$0xff]
      %v1778 = vld [vmem:[#allocation3 + $0xa8] sm:$0xff]
      %v1779 = vld [vmem:[#allocation3 + $0xb0] sm:$0xff]
      %v1780 = vld [vmem:[#allocation3 + $0xb8] sm:$0xff]
      %v1781 = vld [vmem:[#allocation3 + $0xc0] sm:$0xff]
      %v1782 = vld [vmem:[#allocation3 + $0xc8] sm:$0xff]
      %v1783 = vld [vmem:[#allocation3 + $0xd0] sm:$0xff]
      %v1784 = vld [vmem:[#allocation3 + $0xd8] sm:$0xff]
      %v1785 = vld [vmem:[#allocation3 + $0xe0] sm:$0xff]
      %v1786 = vld [vmem:[#allocation3 + $0xe8] sm:$0xff]
      %v1787 = vld [vmem:[#allocation3 + $0xf0] sm:$0xff]
      %v1788 = vld [vmem:[#allocation3 + $0xf8] sm:$0xff]
      %v1789 = vld [vmem:[%s767] sm:$0xff]
      %v1790 = vld [vmem:[%s767 + $0x8] sm:$0xff]
      %v1791 = vld [vmem:[%s767 + $0x10] sm:$0xff]
      %v1792 = vld [vmem:[%s767 + $0x18] sm:$0xff]
      %v1793 = vld [vmem:[%s767 + $0x20] sm:$0xff]
      %v1794 = vld [vmem:[%s767 + $0x28] sm:$0xff]
      %v1795 = vld [vmem:[%s767 + $0x30] sm:$0xff]
      %v1796 = vld [vmem:[%s767 + $0x38] sm:$0xff]
      %v1797 = vld [vmem:[%s767 + $0x40] sm:$0xff]
      %v1798 = vld [vmem:[%s767 + $0x48] sm:$0xff]
      %v1799 = vld [vmem:[%s767 + $0x50] sm:$0xff]
      %v1800 = vld [vmem:[%s767 + $0x58] sm:$0xff]
      %v1801 = vld [vmem:[%s767 + $0x60] sm:$0xff]
      %v1802 = vld [vmem:[%s767 + $0x68] sm:$0xff]
      %v1803 = vld [vmem:[%s767 + $0x70] sm:$0xff]
      %v1804 = vld [vmem:[%s767 + $0x78] sm:$0xff]
      %v1805 = vld [vmem:[%s767 + $0x80] sm:$0xff]
      %v1806 = vld [vmem:[%s767 + $0x88] sm:$0xff]
      %v1807 = vld [vmem:[%s767 + $0x90] sm:$0xff]
      %v1808 = vld [vmem:[%s767 + $0x98] sm:$0xff]
      %v1809 = vld [vmem:[%s767 + $0xa0] sm:$0xff]
      %v1810 = vld [vmem:[%s767 + $0xa8] sm:$0xff]
      %v1811 = vld [vmem:[%s767 + $0xb0] sm:$0xff]
      %v1812 = vld [vmem:[%s767 + $0xb8] sm:$0xff]
      %v1813 = vld [vmem:[%s767 + $0xc0] sm:$0xff]
      %v1814 = vld [vmem:[%s767 + $0xc8] sm:$0xff]
      %v1815 = vld [vmem:[%s767 + $0xd0] sm:$0xff]
      %v1816 = vld [vmem:[%s767 + $0xd8] sm:$0xff]
      %v1817 = vld [vmem:[%s767 + $0xe0] sm:$0xff]
      %v1818 = vld [vmem:[%s767 + $0xe8] sm:$0xff]
      %v1819 = vld [vmem:[%s767 + $0xf0] sm:$0xff]
      %v1820 = vld [vmem:[%s767 + $0xf8] sm:$0xff]
      %v1821 = vld [vmem:[%s767 + $0x100] sm:$0xff]
      %v1822 = vld [vmem:[%s767 + $0x108] sm:$0xff]
      %v1823 = vld [vmem:[%s767 + $0x110] sm:$0xff]
      %v1824 = vld [vmem:[%s767 + $0x118] sm:$0xff]
      %v1825 = vld [vmem:[%s767 + $0x120] sm:$0xff]
      %v1826 = vld [vmem:[%s767 + $0x128] sm:$0xff]
      %v1827 = vld [vmem:[%s767 + $0x130] sm:$0xff]
      %v1828 = vld [vmem:[%s767 + $0x138] sm:$0xff]
      %v1829 = vld [vmem:[%s767 + $0x140] sm:$0xff]
      %v1830 = vld [vmem:[%s767 + $0x148] sm:$0xff]
      %v1831 = vld [vmem:[%s767 + $0x150] sm:$0xff]
      %v1832 = vld [vmem:[%s767 + $0x158] sm:$0xff]
      %v1833 = vld [vmem:[%s767 + $0x160] sm:$0xff]
      %v1834 = vld [vmem:[%s767 + $0x168] sm:$0xff]
      %v1835 = vld [vmem:[%s767 + $0x170] sm:$0xff]
      %v1836 = vld [vmem:[%s767 + $0x178] sm:$0xff]
      %s1837 = scalar_lea.vmem %s4, 192
      %v1838 = vld [vmem:[%s1837] sm:$0xf]
      %v1839 = vld [vmem:[%s1837 + $0x4] sm:$0xf]
      %v1840 = vld [vmem:[%s1837 + $0x8] sm:$0xf]
      %v1841 = vld [vmem:[%s1837 + $0xc] sm:$0xf]
      %v1842 = vld [vmem:[%s1837 + $0x10] sm:$0xf]
      %v1843 = vld [vmem:[%s1837 + $0x14] sm:$0xf]
      %v1844 = vld [vmem:[%s1837 + $0x18] sm:$0xf]
      %v1845 = vld [vmem:[%s1837 + $0x1c] sm:$0xf]
      %v1846 = vld [vmem:[%s1837 + $0x20] sm:$0xf]
      %v1847 = vld [vmem:[%s1837 + $0x24] sm:$0xf]
      %v1848 = vld [vmem:[%s1837 + $0x28] sm:$0xf]
      %v1849 = vld [vmem:[%s1837 + $0x2c] sm:$0xf]
      %v1850 = vld [vmem:[%s1837 + $0x30] sm:$0xf]
      %v1851 = vld [vmem:[%s1837 + $0x34] sm:$0xf]
      %v1852 = vld [vmem:[%s1837 + $0x38] sm:$0xf]
      %v1853 = vld [vmem:[%s1837 + $0x3c] sm:$0xf]
      %v1854 = vld [vmem:[%s1837 + $0x40] sm:$0xf]
      %v1855 = vld [vmem:[%s1837 + $0x44] sm:$0xf]
      %v1856 = vld [vmem:[%s1837 + $0x48] sm:$0xf]
      %v1857 = vld [vmem:[%s1837 + $0x4c] sm:$0xf]
      %v1858 = vld [vmem:[%s1837 + $0x50] sm:$0xf]
      %v1859 = vld [vmem:[%s1837 + $0x54] sm:$0xf]
      %v1860 = vld [vmem:[%s1837 + $0x58] sm:$0xf]
      %v1861 = vld [vmem:[%s1837 + $0x5c] sm:$0xf]
      %v1862 = vld [vmem:[%s1837 + $0x60] sm:$0xf]
      %v1863 = vld [vmem:[%s1837 + $0x64] sm:$0xf]
      %v1864 = vld [vmem:[%s1837 + $0x68] sm:$0xf]
      %v1865 = vld [vmem:[%s1837 + $0x6c] sm:$0xf]
      %v1866 = vld [vmem:[%s1837 + $0x70] sm:$0xf]
      %v1867 = vld [vmem:[%s1837 + $0x74] sm:$0xf]
      %v1868 = vld [vmem:[%s1837 + $0x78] sm:$0xf]
      %v1869 = vld [vmem:[%s1837 + $0x7c] sm:$0xf]
      %v1870 = vld [vmem:[%s1837 + $0x80] sm:$0xf]
      %v1871 = vld [vmem:[%s1837 + $0x84] sm:$0xf]
      %v1872 = vld [vmem:[%s1837 + $0x88] sm:$0xf]
      %v1873 = vld [vmem:[%s1837 + $0x8c] sm:$0xf]
      %v1874 = vld [vmem:[%s1837 + $0x90] sm:$0xf]
      %v1875 = vld [vmem:[%s1837 + $0x94] sm:$0xf]
      %v1876 = vld [vmem:[%s1837 + $0x98] sm:$0xf]
      %v1877 = vld [vmem:[%s1837 + $0x9c] sm:$0xf]
      %v1878 = vld [vmem:[%s1837 + $0xa0] sm:$0xf]
      %v1879 = vld [vmem:[%s1837 + $0xa4] sm:$0xf]
      %v1880 = vld [vmem:[%s1837 + $0xa8] sm:$0xf]
      %v1881 = vld [vmem:[%s1837 + $0xac] sm:$0xf]
      %v1882 = vld [vmem:[%s1837 + $0xb0] sm:$0xf]
      %v1883 = vld [vmem:[%s1837 + $0xb4] sm:$0xf]
      %v1884 = vld [vmem:[%s1837 + $0xb8] sm:$0xf]
      %v1885 = vld [vmem:[%s1837 + $0xbc] sm:$0xf]
      %v1934 = vunpack.c.l.b16 %v1838
      %v1935 = vunpack.c.l.b16 %v1839
      %v1936 = vunpack.c.l.b16 %v1840
      %v1937 = vunpack.c.l.b16 %v1841
      %v1938 = vunpack.c.l.b16 %v1842
      %v1939 = vunpack.c.l.b16 %v1843
      %v1940 = vunpack.c.l.b16 %v1844
      %v1941 = vunpack.c.l.b16 %v1845
      %v1942 = vunpack.c.l.b16 %v1846
      %v1943 = vunpack.c.l.b16 %v1847
      %v1944 = vunpack.c.l.b16 %v1848
      %v1945 = vunpack.c.l.b16 %v1849
      %v1946 = vunpack.c.l.b16 %v1850
      %v1947 = vunpack.c.l.b16 %v1851
      %v1948 = vunpack.c.l.b16 %v1852
      %v1949 = vunpack.c.l.b16 %v1853
      %v1950 = vunpack.c.l.b16 %v1854
      %v1951 = vunpack.c.l.b16 %v1855
      %v1952 = vunpack.c.l.b16 %v1856
      %v1953 = vunpack.c.l.b16 %v1857
      %v1954 = vunpack.c.l.b16 %v1858
      %v1955 = vunpack.c.l.b16 %v1859
      %v1956 = vunpack.c.l.b16 %v1860
      %v1957 = vunpack.c.l.b16 %v1861
      %v1958 = vunpack.c.l.b16 %v1862
      %v1959 = vunpack.c.l.b16 %v1863
      %v1960 = vunpack.c.l.b16 %v1864
      %v1961 = vunpack.c.l.b16 %v1865
      %v1962 = vunpack.c.l.b16 %v1866
      %v1963 = vunpack.c.l.b16 %v1867
      %v1964 = vunpack.c.l.b16 %v1868
      %v1965 = vunpack.c.l.b16 %v1869
      %v1966 = vunpack.c.l.b16 %v1870
      %v1967 = vunpack.c.l.b16 %v1871
      %v1968 = vunpack.c.l.b16 %v1872
      %v1969 = vunpack.c.l.b16 %v1873
      %v1970 = vunpack.c.l.b16 %v1874
      %v1971 = vunpack.c.l.b16 %v1875
      %v1972 = vunpack.c.l.b16 %v1876
      %v1973 = vunpack.c.l.b16 %v1877
      %v1974 = vunpack.c.l.b16 %v1878
      %v1975 = vunpack.c.l.b16 %v1879
      %v1976 = vunpack.c.l.b16 %v1880
      %v1977 = vunpack.c.l.b16 %v1881
      %v1978 = vunpack.c.l.b16 %v1882
      %v1979 = vunpack.c.l.b16 %v1883
      %v1980 = vunpack.c.l.b16 %v1884
      %v1981 = vunpack.c.l.b16 %v1885
      %v1982 = vpack.c.b16 %v1935, %v1934
      %v1983 = vpack.c.b16 %v1937, %v1936
      %v1984 = vpack.c.b16 %v1939, %v1938
      %v1985 = vpack.c.b16 %v1941, %v1940
      %v1986 = vpack.c.b16 %v1943, %v1942
      %v1987 = vpack.c.b16 %v1945, %v1944
      %v1988 = vpack.c.b16 %v1947, %v1946
      %v1989 = vpack.c.b16 %v1949, %v1948
      %v1990 = vpack.c.b16 %v1951, %v1950
      %v1991 = vpack.c.b16 %v1953, %v1952
      %v1992 = vpack.c.b16 %v1955, %v1954
      %v1993 = vpack.c.b16 %v1957, %v1956
      %v1994 = vpack.c.b16 %v1959, %v1958
      %v1995 = vpack.c.b16 %v1961, %v1960
      %v1996 = vpack.c.b16 %v1963, %v1962
      %v1997 = vpack.c.b16 %v1965, %v1964
      %v1998 = vpack.c.b16 %v1967, %v1966
      %v1999 = vpack.c.b16 %v1969, %v1968
      %v2000 = vpack.c.b16 %v1971, %v1970
      %v2001 = vpack.c.b16 %v1973, %v1972
      %v2002 = vpack.c.b16 %v1975, %v1974
      %v2003 = vpack.c.b16 %v1977, %v1976
      %v2004 = vpack.c.b16 %v1979, %v1978
      %v2005 = vpack.c.b16 %v1981, %v1980
      %2030 = vmatprep.subr.bf16.mxu0 0
      %2031 = vmatpush1.bf16.msra.mxu0 %v1982
      %2032 = vmatprep.subr.bf16.mxu0 0
      %2033 = vmatpush1.bf16.msra.mxu0 %v1983
      %2034 = vmatprep.subr.bf16.mxu0 0
      %2035 = vmatpush1.bf16.msra.mxu0 %v1984
      %2036 = vmatprep.subr.bf16.mxu0 0
      %2037 = vmatpush1.bf16.msra.mxu0 %v1985
      %2038 = vmatprep.subr.bf16.mxu0 0
      %2039 = vmatpush1.bf16.msra.mxu0 %v1986
      %2040 = vmatprep.subr.bf16.mxu0 0
      %2041 = vmatpush1.bf16.msra.mxu0 %v1987
      %2042 = vmatprep.subr.bf16.mxu0 0
      %2043 = vmatpush1.bf16.msra.mxu0 %v1988
      %2044 = vmatprep.subr.bf16.mxu0 0
      %2045 = vmatpush1.bf16.msra.mxu0 %v1989
      %2046 = vmatprep.subr.bf16.mxu0 0
      %2047 = vmatpush1.bf16.msra.mxu0 %v1990
      %2048 = vmatprep.subr.bf16.mxu0 0
      %2049 = vmatpush1.bf16.msra.mxu0 %v1991
      %2050 = vmatprep.subr.bf16.mxu0 0
      %2051 = vmatpush1.bf16.msra.mxu0 %v1992
      %2052 = vmatprep.subr.bf16.mxu0 0
      %2053 = vmatpush1.bf16.msra.mxu0 %v1993
      %2054 = vmatprep.subr.bf16.mxu0 0
      %2055 = vmatpush1.bf16.msra.mxu0 %v1994
      %2056 = vmatprep.subr.bf16.mxu0 0
      %2057 = vmatpush1.bf16.msra.mxu0 %v1995
      %2058 = vmatprep.subr.bf16.mxu0 0
      %2059 = vmatpush1.bf16.msra.mxu0 %v1996
      %2060 = vmatprep.subr.bf16.mxu0 0
      %2061 = vmatpush1.bf16.msra.mxu0 %v1997
      %2062 = vmatprep.mubr.bf16.mxu0 %v1790
      %2063 = vmatmul.mubr.bf16.gmra.mrb[0].mxu0 %v1789
      %v2064 = vpop.f32.mrb[0].mxu0
      %v2065 = vadd.f32 0.0, %v2064
      %v2066 = vpop.f32.mrb[0].mxu0
      %v2067 = vpop.f32.mrb[0].mxu0
      %v2068 = vadd.f32 0.0, %v2067
      %v2069 = vpop.f32.mrb[0].mxu0
      %2070 = vmatprep.mubr.bf16.mxu0 %v1793
      %2071 = vmatmul.mubr.bf16.gmra.mrb[0].mxu0 %v1792
      %v2072 = vpop.f32.mrb[0].mxu0
      %v2073 = vadd.f32 0.0, %v2072
      %v2074 = vpop.f32.mrb[0].mxu0
      %v2075 = vpop.f32.mrb[0].mxu0
      %v2076 = vadd.f32 0.0, %v2075
      %v2077 = vpop.f32.mrb[0].mxu0
      %2078 = vmatprep.mubr.bf16.mxu0 %v1796
      %2079 = vmatmul.mubr.bf16.gmra.mrb[0].mxu0 %v1795
      %v2080 = vpop.f32.mrb[0].mxu0
      %v2081 = vadd.f32 0.0, %v2080
      %v2082 = vpop.f32.mrb[0].mxu0
      %v2083 = vpop.f32.mrb[0].mxu0
      %v2084 = vadd.f32 0.0, %v2083
      %v2085 = vpop.f32.mrb[0].mxu0
      %2086 = vmatprep.mubr.bf16.mxu0 %v1799
      %2087 = vmatmul.mubr.bf16.gmra.mrb[0].mxu0 %v1798
      %v2088 = vpop.f32.mrb[0].mxu0
      %v2089 = vadd.f32 0.0, %v2088
      %v2090 = vpop.f32.mrb[0].mxu0
      %v2091 = vpop.f32.mrb[0].mxu0
      %v2092 = vadd.f32 0.0, %v2091
      %v2093 = vpop.f32.mrb[0].mxu0
      %2094 = vmatprep.mubr.bf16.mxu0 %v1802
      %2095 = vmatmul.mubr.bf16.gmra.mrb[0].mxu0 %v1801
      %v2096 = vpop.f32.mrb[0].mxu0
      %v2097 = vadd.f32 0.0, %v2096
      %v2098 = vpop.f32.mrb[0].mxu0
      %v2099 = vpop.f32.mrb[0].mxu0
      %v2100 = vadd.f32 0.0, %v2099
      %v2101 = vpop.f32.mrb[0].mxu0
      %2102 = vmatprep.mubr.bf16.mxu0 %v1805
      %2103 = vmatmul.mubr.bf16.gmra.mrb[0].mxu0 %v1804
      %v2104 = vpop.f32.mrb[0].mxu0
      %v2105 = vadd.f32 0.0, %v2104
      %v2106 = vpop.f32.mrb[0].mxu0
      %v2107 = vpop.f32.mrb[0].mxu0
      %v2108 = vadd.f32 0.0, %v2107
      %v2109 = vpop.f32.mrb[0].mxu0
      %2110 = vmatprep.mubr.bf16.mxu0 %v1808
      %2111 = vmatmul.mubr.bf16.gmra.mrb[0].mxu0 %v1807
      %v2112 = vpop.f32.mrb[0].mxu0
      %v2113 = vadd.f32 0.0, %v2112
      %v2114 = vpop.f32.mrb[0].mxu0
      %v2115 = vpop.f32.mrb[0].mxu0
      %v2116 = vadd.f32 0.0, %v2115
      %v2117 = vpop.f32.mrb[0].mxu0
      %2118 = vmatprep.mubr.bf16.mxu0 %v1811
      %2119 = vmatmul.mubr.bf16.gmra.mrb[0].mxu0 %v1810
      %v2120 = vpop.f32.mrb[0].mxu0
      %v2121 = vadd.f32 0.0, %v2120
      %v2122 = vpop.f32.mrb[0].mxu0
      %v2123 = vpop.f32.mrb[0].mxu0
      %v2124 = vadd.f32 0.0, %v2123
      %v2125 = vpop.f32.mrb[0].mxu0
      %2126 = vmatprep.mubr.bf16.mxu0 %v1814
      %2127 = vmatmul.mubr.bf16.gmra.mrb[0].mxu0 %v1813
      %v2128 = vpop.f32.mrb[0].mxu0
      %v2129 = vadd.f32 0.0, %v2128
      %v2130 = vpop.f32.mrb[0].mxu0
      %v2131 = vpop.f32.mrb[0].mxu0
      %v2132 = vadd.f32 0.0, %v2131
      %v2133 = vpop.f32.mrb[0].mxu0
      %2134 = vmatprep.mubr.bf16.mxu0 %v1817
      %2135 = vmatmul.mubr.bf16.gmra.mrb[0].mxu0 %v1816
      %v2136 = vpop.f32.mrb[0].mxu0
      %v2137 = vadd.f32 0.0, %v2136
      %v2138 = vpop.f32.mrb[0].mxu0
      %v2139 = vpop.f32.mrb[0].mxu0
      %v2140 = vadd.f32 0.0, %v2139
      %v2141 = vpop.f32.mrb[0].mxu0
      %2142 = vmatprep.mubr.bf16.mxu0 %v1820
      %2143 = vmatmul.mubr.bf16.gmra.mrb[0].mxu0 %v1819
      %v2144 = vpop.f32.mrb[0].mxu0
      %v2145 = vadd.f32 0.0, %v2144
      %v2146 = vpop.f32.mrb[0].mxu0
      %v2147 = vpop.f32.mrb[0].mxu0
      %v2148 = vadd.f32 0.0, %v2147
      %v2149 = vpop.f32.mrb[0].mxu0
      %2150 = vmatprep.mubr.bf16.mxu0 %v1823
      %2151 = vmatmul.mubr.bf16.gmra.mrb[0].mxu0 %v1822
      %v2152 = vpop.f32.mrb[0].mxu0
      %v2153 = vadd.f32 0.0, %v2152
      %v2154 = vpop.f32.mrb[0].mxu0
      %v2155 = vpop.f32.mrb[0].mxu0
      %v2156 = vadd.f32 0.0, %v2155
      %v2157 = vpop.f32.mrb[0].mxu0
      %2158 = vmatprep.mubr.bf16.mxu0 %v1826
      %2159 = vmatmul.mubr.bf16.gmra.mrb[0].mxu0 %v1825
      %v2160 = vpop.f32.mrb[0].mxu0
      %v2161 = vadd.f32 0.0, %v2160
      %v2162 = vpop.f32.mrb[0].mxu0
      %v2163 = vpop.f32.mrb[0].mxu0
      %v2164 = vadd.f32 0.0, %v2163
      %v2165 = vpop.f32.mrb[0].mxu0
      %2166 = vmatprep.mubr.bf16.mxu0 %v1829
      %2167 = vmatmul.mubr.bf16.gmra.mrb[0].mxu0 %v1828
      %v2168 = vpop.f32.mrb[0].mxu0
      %v2169 = vadd.f32 0.0, %v2168
      %v2170 = vpop.f32.mrb[0].mxu0
      %v2171 = vpop.f32.mrb[0].mxu0
      %v2172 = vadd.f32 0.0, %v2171
      %v2173 = vpop.f32.mrb[0].mxu0
      %2174 = vmatprep.mubr.bf16.mxu0 %v1832
      %2175 = vmatmul.mubr.bf16.gmra.mrb[0].mxu0 %v1831
      %v2176 = vpop.f32.mrb[0].mxu0
      %v2177 = vadd.f32 0.0, %v2176
      %v2178 = vpop.f32.mrb[0].mxu0
      %v2179 = vpop.f32.mrb[0].mxu0
      %v2180 = vadd.f32 0.0, %v2179
      %v2181 = vpop.f32.mrb[0].mxu0
      %2182 = vmatprep.mubr.bf16.mxu0 %v1835
      %2183 = vmatmul.mubr.bf16.gmra.mrb[0].mxu0 %v1834
      %v2184 = vpop.f32.mrb[0].mxu0
      %v2185 = vadd.f32 0.0, %v2184
      %v2186 = vpop.f32.mrb[0].mxu0
      %v2187 = vpop.f32.mrb[0].mxu0
      %v2188 = vadd.f32 0.0, %v2187
      %v2189 = vpop.f32.mrb[0].mxu0
      %2190 = vdwg.mxu0
      %2191 = vmatprep.subr.bf16.mxu0 0
      %2192 = vmatpush1.bf16.msra.mxu0 %v1998
      %2193 = vmatprep.subr.bf16.mxu0 0
      %2194 = vmatpush1.bf16.msra.mxu0 %v1999
      %2195 = vmatprep.subr.bf16.mxu0 0
      %2196 = vmatpush1.bf16.msra.mxu0 %v2000
      %2197 = vmatprep.subr.bf16.mxu0 0
      %2198 = vmatpush1.bf16.msra.mxu0 %v2001
      %2199 = vmatprep.subr.bf16.mxu0 0
      %2200 = vmatpush1.bf16.msra.mxu0 %v2002
      %2201 = vmatprep.subr.bf16.mxu0 0
      %2202 = vmatpush1.bf16.msra.mxu0 %v2003
      %2203 = vmatprep.subr.bf16.mxu0 0
      %2204 = vmatpush1.bf16.msra.mxu0 %v2004
      %2205 = vmatprep.subr.bf16.mxu0 0
      %2206 = vmatpush1.bf16.msra.mxu0 %v2005
      %2207 = vmatprep.subr.bf16.mxu0 0
      %2208 = vmatpush1.bf16.msra.mxu0 0
      %2209 = vmatprep.subr.bf16.mxu0 0
      %2210 = vmatpush1.bf16.msra.mxu0 0
      %2211 = vmatprep.subr.bf16.mxu0 0
      %2212 = vmatpush1.bf16.msra.mxu0 0
      %2213 = vmatprep.subr.bf16.mxu0 0
      %2214 = vmatpush1.bf16.msra.mxu0 0
      %2215 = vmatprep.subr.bf16.mxu0 0
      %2216 = vmatpush1.bf16.msra.mxu0 0
      %2217 = vmatprep.subr.bf16.mxu0 0
      %2218 = vmatpush1.bf16.msra.mxu0 0
      %2219 = vmatprep.subr.bf16.mxu0 0
      %2220 = vmatpush1.bf16.msra.mxu0 0
      %2221 = vmatprep.subr.bf16.mxu0 0
      %2222 = vmatpush1.bf16.msra.mxu0 0
      %2223 = vmatprep.mubr.bf16.mxu0 0
      %2224 = vmatmul.mubr.bf16.gmra.mrb[0].mxu0 %v1791
      %v2225 = vpop.f32.mrb[0].mxu0
      %v2226 = vadd.f32 %v2065, %v2225
      %v2227 = vpop.f32.mrb[0].mxu0
      %v2228 = vpop.f32.mrb[0].mxu0
      %v2229 = vadd.f32 %v2068, %v2228
      %v2230 = vpop.f32.mrb[0].mxu0
      %2231 = vmatprep.mubr.bf16.mxu0 0
      %2232 = vmatmul.mubr.bf16.gmra.mrb[0].mxu0 %v1794
      %v2233 = vpop.f32.mrb[0].mxu0
      %v2234 = vadd.f32 %v2073, %v2233
      %v2235 = vpop.f32.mrb[0].mxu0
      %v2236 = vpop.f32.mrb[0].mxu0
      %v2237 = vadd.f32 %v2076, %v2236
      %v2238 = vpop.f32.mrb[0].mxu0
      %2239 = vmatprep.mubr.bf16.mxu0 0
      %2240 = vmatmul.mubr.bf16.gmra.mrb[0].mxu0 %v1797
      %v2241 = vpop.f32.mrb[0].mxu0
      %v2242 = vadd.f32 %v2081, %v2241
      %v2243 = vpop.f32.mrb[0].mxu0
      %v2244 = vpop.f32.mrb[0].mxu0
      %v2245 = vadd.f32 %v2084, %v2244
      %v2246 = vpop.f32.mrb[0].mxu0
      %2247 = vmatprep.mubr.bf16.mxu0 0
      %2248 = vmatmul.mubr.bf16.gmra.mrb[0].mxu0 %v1800
      %v2249 = vpop.f32.mrb[0].mxu0
      %v2250 = vadd.f32 %v2089, %v2249
      %v2251 = vpop.f32.mrb[0].mxu0
      %v2252 = vpop.f32.mrb[0].mxu0
      %v2253 = vadd.f32 %v2092, %v2252
      %v2254 = vpop.f32.mrb[0].mxu0
      %2255 = vmatprep.mubr.bf16.mxu0 0
      %2256 = vmatmul.mubr.bf16.gmra.mrb[0].mxu0 %v1803
      %v2257 = vpop.f32.mrb[0].mxu0
      %v2258 = vadd.f32 %v2097, %v2257
      %v2259 = vpop.f32.mrb[0].mxu0
      %v2260 = vpop.f32.mrb[0].mxu0
      %v2261 = vadd.f32 %v2100, %v2260
      %v2262 = vpop.f32.mrb[0].mxu0
      %2263 = vmatprep.mubr.bf16.mxu0 0
      %2264 = vmatmul.mubr.bf16.gmra.mrb[0].mxu0 %v1806
      %v2265 = vpop.f32.mrb[0].mxu0
      %v2266 = vadd.f32 %v2105, %v2265
      %v2267 = vpop.f32.mrb[0].mxu0
      %v2268 = vpop.f32.mrb[0].mxu0
      %v2269 = vadd.f32 %v2108, %v2268
      %v2270 = vpop.f32.mrb[0].mxu0
      %2271 = vmatprep.mubr.bf16.mxu0 0
      %2272 = vmatmul.mubr.bf16.gmra.mrb[0].mxu0 %v1809
      %v2273 = vpop.f32.mrb[0].mxu0
      %v2274 = vadd.f32 %v2113, %v2273
      %v2275 = vpop.f32.mrb[0].mxu0
      %v2276 = vpop.f32.mrb[0].mxu0
      %v2277 = vadd.f32 %v2116, %v2276
      %v2278 = vpop.f32.mrb[0].mxu0
      %2279 = vmatprep.mubr.bf16.mxu0 0
      %2280 = vmatmul.mubr.bf16.gmra.mrb[0].mxu0 %v1812
      %v2281 = vpop.f32.mrb[0].mxu0
      %v2282 = vadd.f32 %v2121, %v2281
      %v2283 = vpop.f32.mrb[0].mxu0
      %v2284 = vpop.f32.mrb[0].mxu0
      %v2285 = vadd.f32 %v2124, %v2284
      %v2286 = vpop.f32.mrb[0].mxu0
      %2287 = vmatprep.mubr.bf16.mxu0 0
      %2288 = vmatmul.mubr.bf16.gmra.mrb[0].mxu0 %v1815
      %v2289 = vpop.f32.mrb[0].mxu0
      %v2290 = vadd.f32 %v2129, %v2289
      %v2291 = vpop.f32.mrb[0].mxu0
      %v2292 = vpop.f32.mrb[0].mxu0
      %v2293 = vadd.f32 %v2132, %v2292
      %v2294 = vpop.f32.mrb[0].mxu0
      %2295 = vmatprep.mubr.bf16.mxu0 0
      %2296 = vmatmul.mubr.bf16.gmra.mrb[0].mxu0 %v1818
      %v2297 = vpop.f32.mrb[0].mxu0
      %v2298 = vadd.f32 %v2137, %v2297
      %v2299 = vpop.f32.mrb[0].mxu0
      %v2300 = vpop.f32.mrb[0].mxu0
      %v2301 = vadd.f32 %v2140, %v2300
      %v2302 = vpop.f32.mrb[0].mxu0
      %2303 = vmatprep.mubr.bf16.mxu0 0
      %2304 = vmatmul.mubr.bf16.gmra.mrb[0].mxu0 %v1821
      %v2305 = vpop.f32.mrb[0].mxu0
      %v2306 = vadd.f32 %v2145, %v2305
      %v2307 = vpop.f32.mrb[0].mxu0
      %v2308 = vpop.f32.mrb[0].mxu0
      %v2309 = vadd.f32 %v2148, %v2308
      %v2310 = vpop.f32.mrb[0].mxu0
      %2311 = vmatprep.mubr.bf16.mxu0 0
      %2312 = vmatmul.mubr.bf16.gmra.mrb[0].mxu0 %v1824
      %v2313 = vpop.f32.mrb[0].mxu0
      %v2314 = vadd.f32 %v2153, %v2313
      %v2315 = vpop.f32.mrb[0].mxu0
      %v2316 = vpop.f32.mrb[0].mxu0
      %v2317 = vadd.f32 %v2156, %v2316
      %v2318 = vpop.f32.mrb[0].mxu0
      %2319 = vmatprep.mubr.bf16.mxu0 0
      %2320 = vmatmul.mubr.bf16.gmra.mrb[0].mxu0 %v1827
      %v2321 = vpop.f32.mrb[0].mxu0
      %v2322 = vadd.f32 %v2161, %v2321
      %v2323 = vpop.f32.mrb[0].mxu0
      %v2324 = vpop.f32.mrb[0].mxu0
      %v2325 = vadd.f32 %v2164, %v2324
      %v2326 = vpop.f32.mrb[0].mxu0
      %2327 = vmatprep.mubr.bf16.mxu0 0
      %2328 = vmatmul.mubr.bf16.gmra.mrb[0].mxu0 %v1830
      %v2329 = vpop.f32.mrb[0].mxu0
      %v2330 = vadd.f32 %v2169, %v2329
      %v2331 = vpop.f32.mrb[0].mxu0
      %v2332 = vpop.f32.mrb[0].mxu0
      %v2333 = vadd.f32 %v2172, %v2332
      %v2334 = vpop.f32.mrb[0].mxu0
      %2335 = vmatprep.mubr.bf16.mxu0 0
      %2336 = vmatmul.mubr.bf16.gmra.mrb[0].mxu0 %v1833
      %v2337 = vpop.f32.mrb[0].mxu0
      %v2338 = vadd.f32 %v2177, %v2337
      %v2339 = vpop.f32.mrb[0].mxu0
      %v2340 = vpop.f32.mrb[0].mxu0
      %v2341 = vadd.f32 %v2180, %v2340
      %v2342 = vpop.f32.mrb[0].mxu0
      %2343 = vmatprep.mubr.bf16.mxu0 0
      %2344 = vmatmul.mubr.bf16.gmra.mrb[0].mxu0 %v1836
      %v2345 = vpop.f32.mrb[0].mxu0
      %v2346 = vadd.f32 %v2185, %v2345
      %v2347 = vpop.f32.mrb[0].mxu0
      %v2348 = vpop.f32.mrb[0].mxu0
      %v2349 = vadd.f32 %v2188, %v2348
      %v2350 = vpop.f32.mrb[0].mxu0
      %2351 = vdwg.mxu0
      %v2352 = vadd.f32 %v1757, %v2226
      %v2353 = vadd.f32 %v1758, %v2229
      %v2354 = vadd.f32 %v1759, %v2234
      %v2355 = vadd.f32 %v1760, %v2237
      %v2356 = vadd.f32 %v1761, %v2242
      %v2357 = vadd.f32 %v1762, %v2245
      %v2358 = vadd.f32 %v1763, %v2250
      %v2359 = vadd.f32 %v1764, %v2253
      %v2360 = vadd.f32 %v1765, %v2258
      %v2361 = vadd.f32 %v1766, %v2261
      %v2362 = vadd.f32 %v1767, %v2266
      %v2363 = vadd.f32 %v1768, %v2269
      %v2364 = vadd.f32 %v1769, %v2274
      %v2365 = vadd.f32 %v1770, %v2277
      %v2366 = vadd.f32 %v1771, %v2282
      %v2367 = vadd.f32 %v1772, %v2285
      %v2368 = vadd.f32 %v1773, %v2290
      %v2369 = vadd.f32 %v1774, %v2293
      %v2370 = vadd.f32 %v1775, %v2298
      %v2371 = vadd.f32 %v1776, %v2301
      %v2372 = vadd.f32 %v1777, %v2306
      %v2373 = vadd.f32 %v1778, %v2309
      %v2374 = vadd.f32 %v1779, %v2314
      %v2375 = vadd.f32 %v1780, %v2317
      %v2376 = vadd.f32 %v1781, %v2322
      %v2377 = vadd.f32 %v1782, %v2325
      %v2378 = vadd.f32 %v1783, %v2330
      %v2379 = vadd.f32 %v1784, %v2333
      %v2380 = vadd.f32 %v1785, %v2338
      %v2381 = vadd.f32 %v1786, %v2341
      %v2382 = vadd.f32 %v1787, %v2346
      %v2383 = vadd.f32 %v1788, %v2349
      %2384 = vst [vmem:[#allocation3] sm:$0xff] %v2352
      %2385 = vst [vmem:[#allocation3 + $0x8] sm:$0xff] %v2353
      %2386 = vst [vmem:[#allocation3 + $0x10] sm:$0xff] %v2354
      %2387 = vst [vmem:[#allocation3 + $0x18] sm:$0xff] %v2355
      %2388 = vst [vmem:[#allocation3 + $0x20] sm:$0xff] %v2356
      %2389 = vst [vmem:[#allocation3 + $0x28] sm:$0xff] %v2357
      %2390 = vst [vmem:[#allocation3 + $0x30] sm:$0xff] %v2358
      %2391 = vst [vmem:[#allocation3 + $0x38] sm:$0xff] %v2359
      %2392 = vst [vmem:[#allocation3 + $0x40] sm:$0xff] %v2360
      %2393 = vst [vmem:[#allocation3 + $0x48] sm:$0xff] %v2361
      %2394 = vst [vmem:[#allocation3 + $0x50] sm:$0xff] %v2362
      %2395 = vst [vmem:[#allocation3 + $0x58] sm:$0xff] %v2363
      %2396 = vst [vmem:[#allocation3 + $0x60] sm:$0xff] %v2364
      %2397 = vst [vmem:[#allocation3 + $0x68] sm:$0xff] %v2365
      %2398 = vst [vmem:[#allocation3 + $0x70] sm:$0xff] %v2366
      %2399 = vst [vmem:[#allocation3 + $0x78] sm:$0xff] %v2367
      %2400 = vst [vmem:[#allocation3 + $0x80] sm:$0xff] %v2368
      %2401 = vst [vmem:[#allocation3 + $0x88] sm:$0xff] %v2369
      %2402 = vst [vmem:[#allocation3 + $0x90] sm:$0xff] %v2370
      %2403 = vst [vmem:[#allocation3 + $0x98] sm:$0xff] %v2371
      %2404 = vst [vmem:[#allocation3 + $0xa0] sm:$0xff] %v2372
      %2405 = vst [vmem:[#allocation3 + $0xa8] sm:$0xff] %v2373
      %2406 = vst [vmem:[#allocation3 + $0xb0] sm:$0xff] %v2374
      %2407 = vst [vmem:[#allocation3 + $0xb8] sm:$0xff] %v2375
      %2408 = vst [vmem:[#allocation3 + $0xc0] sm:$0xff] %v2376
      %2409 = vst [vmem:[#allocation3 + $0xc8] sm:$0xff] %v2377
      %2410 = vst [vmem:[#allocation3 + $0xd0] sm:$0xff] %v2378
      %2411 = vst [vmem:[#allocation3 + $0xd8] sm:$0xff] %v2379
      %2412 = vst [vmem:[#allocation3 + $0xe0] sm:$0xff] %v2380
      %2413 = vst [vmem:[#allocation3 + $0xe8] sm:$0xff] %v2381
      %2414 = vst [vmem:[#allocation3 + $0xf0] sm:$0xff] %v2382
      %2415 = vst [vmem:[#allocation3 + $0xf8] sm:$0xff] %v2383
      %v2416 = vld [vmem:[#allocation3] sm:$0xff]
      %v2417 = vld [vmem:[#allocation3 + $0x8] sm:$0xff]
      %v2418 = vld [vmem:[#allocation3 + $0x10] sm:$0xff]
      %v2419 = vld [vmem:[#allocation3 + $0x18] sm:$0xff]
      %v2420 = vld [vmem:[#allocation3 + $0x20] sm:$0xff]
      %v2421 = vld [vmem:[#allocation3 + $0x28] sm:$0xff]
      %v2422 = vld [vmem:[#allocation3 + $0x30] sm:$0xff]
      %v2423 = vld [vmem:[#allocation3 + $0x38] sm:$0xff]
      %v2424 = vld [vmem:[#allocation3 + $0x40] sm:$0xff]
      %v2425 = vld [vmem:[#allocation3 + $0x48] sm:$0xff]
      %v2426 = vld [vmem:[#allocation3 + $0x50] sm:$0xff]
      %v2427 = vld [vmem:[#allocation3 + $0x58] sm:$0xff]
      %v2428 = vld [vmem:[#allocation3 + $0x60] sm:$0xff]
      %v2429 = vld [vmem:[#allocation3 + $0x68] sm:$0xff]
      %v2430 = vld [vmem:[#allocation3 + $0x70] sm:$0xff]
      %v2431 = vld [vmem:[#allocation3 + $0x78] sm:$0xff]
      %v2432 = vld [vmem:[#allocation3 + $0x80] sm:$0xff]
      %v2433 = vld [vmem:[#allocation3 + $0x88] sm:$0xff]
      %v2434 = vld [vmem:[#allocation3 + $0x90] sm:$0xff]
      %v2435 = vld [vmem:[#allocation3 + $0x98] sm:$0xff]
      %v2436 = vld [vmem:[#allocation3 + $0xa0] sm:$0xff]
      %v2437 = vld [vmem:[#allocation3 + $0xa8] sm:$0xff]
      %v2438 = vld [vmem:[#allocation3 + $0xb0] sm:$0xff]
      %v2439 = vld [vmem:[#allocation3 + $0xb8] sm:$0xff]
      %v2440 = vld [vmem:[#allocation3 + $0xc0] sm:$0xff]
      %v2441 = vld [vmem:[#allocation3 + $0xc8] sm:$0xff]
      %v2442 = vld [vmem:[#allocation3 + $0xd0] sm:$0xff]
      %v2443 = vld [vmem:[#allocation3 + $0xd8] sm:$0xff]
      %v2444 = vld [vmem:[#allocation3 + $0xe0] sm:$0xff]
      %v2445 = vld [vmem:[#allocation3 + $0xe8] sm:$0xff]
      %v2446 = vld [vmem:[#allocation3 + $0xf0] sm:$0xff]
      %v2447 = vld [vmem:[#allocation3 + $0xf8] sm:$0xff]
      %s2448 = scalar_lea.vmem [#allocation2], 48
      %v2449 = vld [vmem:[%s2448] sm:$0xff]
      %v2450 = vld [vmem:[%s2448 + $0x8] sm:$0xff]
      %v2451 = vld [vmem:[%s2448 + $0x10] sm:$0xff]
      %v2452 = vld [vmem:[%s2448 + $0x18] sm:$0xff]
      %v2453 = vld [vmem:[%s2448 + $0x20] sm:$0xff]
      %v2454 = vld [vmem:[%s2448 + $0x28] sm:$0xff]
      %v2455 = vld [vmem:[%s2448 + $0x30] sm:$0xff]
      %v2456 = vld [vmem:[%s2448 + $0x38] sm:$0xff]
      %v2457 = vld [vmem:[%s2448 + $0x40] sm:$0xff]
      %v2458 = vld [vmem:[%s2448 + $0x48] sm:$0xff]
      %v2459 = vld [vmem:[%s2448 + $0x50] sm:$0xff]
      %v2460 = vld [vmem:[%s2448 + $0x58] sm:$0xff]
      %v2461 = vld [vmem:[%s2448 + $0x60] sm:$0xff]
      %v2462 = vld [vmem:[%s2448 + $0x68] sm:$0xff]
      %v2463 = vld [vmem:[%s2448 + $0x70] sm:$0xff]
      %v2464 = vld [vmem:[%s2448 + $0x78] sm:$0xff]
      %v2465 = vld [vmem:[%s2448 + $0x80] sm:$0xff]
      %v2466 = vld [vmem:[%s2448 + $0x88] sm:$0xff]
      %v2467 = vld [vmem:[%s2448 + $0x90] sm:$0xff]
      %v2468 = vld [vmem:[%s2448 + $0x98] sm:$0xff]
      %v2469 = vld [vmem:[%s2448 + $0xa0] sm:$0xff]
      %v2470 = vld [vmem:[%s2448 + $0xa8] sm:$0xff]
      %v2471 = vld [vmem:[%s2448 + $0xb0] sm:$0xff]
      %v2472 = vld [vmem:[%s2448 + $0xb8] sm:$0xff]
      %v2473 = vld [vmem:[%s2448 + $0xc0] sm:$0xff]
      %v2474 = vld [vmem:[%s2448 + $0xc8] sm:$0xff]
      %v2475 = vld [vmem:[%s2448 + $0xd0] sm:$0xff]
      %v2476 = vld [vmem:[%s2448 + $0xd8] sm:$0xff]
      %v2477 = vld [vmem:[%s2448 + $0xe0] sm:$0xff]
      %v2478 = vld [vmem:[%s2448 + $0xe8] sm:$0xff]
      %v2479 = vld [vmem:[%s2448 + $0xf0] sm:$0xff]
      %v2480 = vld [vmem:[%s2448 + $0xf8] sm:$0xff]
      %v2481 = vld [vmem:[%s2448 + $0x100] sm:$0xff]
      %v2482 = vld [vmem:[%s2448 + $0x108] sm:$0xff]
      %v2483 = vld [vmem:[%s2448 + $0x110] sm:$0xff]
      %v2484 = vld [vmem:[%s2448 + $0x118] sm:$0xff]
      %v2485 = vld [vmem:[%s2448 + $0x120] sm:$0xff]
      %v2486 = vld [vmem:[%s2448 + $0x128] sm:$0xff]
      %v2487 = vld [vmem:[%s2448 + $0x130] sm:$0xff]
      %v2488 = vld [vmem:[%s2448 + $0x138] sm:$0xff]
      %v2489 = vld [vmem:[%s2448 + $0x140] sm:$0xff]
      %v2490 = vld [vmem:[%s2448 + $0x148] sm:$0xff]
      %v2491 = vld [vmem:[%s2448 + $0x150] sm:$0xff]
      %v2492 = vld [vmem:[%s2448 + $0x158] sm:$0xff]
      %v2493 = vld [vmem:[%s2448 + $0x160] sm:$0xff]
      %v2494 = vld [vmem:[%s2448 + $0x168] sm:$0xff]
      %v2495 = vld [vmem:[%s2448 + $0x170] sm:$0xff]
      %v2496 = vld [vmem:[%s2448 + $0x178] sm:$0xff]
      %s2497 = scalar_lea.vmem %s4, 384
      %v2498 = vld [vmem:[%s2497] sm:$0xf]
      %v2499 = vld [vmem:[%s2497 + $0x4] sm:$0xf]
      %v2500 = vld [vmem:[%s2497 + $0x8] sm:$0xf]
      %v2501 = vld [vmem:[%s2497 + $0xc] sm:$0xf]
      %v2502 = vld [vmem:[%s2497 + $0x10] sm:$0xf]
      %v2503 = vld [vmem:[%s2497 + $0x14] sm:$0xf]
      %v2504 = vld [vmem:[%s2497 + $0x18] sm:$0xf]
      %v2505 = vld [vmem:[%s2497 + $0x1c] sm:$0xf]
      %v2506 = vld [vmem:[%s2497 + $0x20] sm:$0xf]
      %v2507 = vld [vmem:[%s2497 + $0x24] sm:$0xf]
      %v2508 = vld [vmem:[%s2497 + $0x28] sm:$0xf]
      %v2509 = vld [vmem:[%s2497 + $0x2c] sm:$0xf]
      %v2510 = vld [vmem:[%s2497 + $0x30] sm:$0xf]
      %v2511 = vld [vmem:[%s2497 + $0x34] sm:$0xf]
      %v2512 = vld [vmem:[%s2497 + $0x38] sm:$0xf]
      %v2513 = vld [vmem:[%s2497 + $0x3c] sm:$0xf]
      %v2514 = vld [vmem:[%s2497 + $0x40] sm:$0xf]
      %v2515 = vld [vmem:[%s2497 + $0x44] sm:$0xf]
      %v2516 = vld [vmem:[%s2497 + $0x48] sm:$0xf]
      %v2517 = vld [vmem:[%s2497 + $0x4c] sm:$0xf]
      %v2518 = vld [vmem:[%s2497 + $0x50] sm:$0xf]
      %v2519 = vld [vmem:[%s2497 + $0x54] sm:$0xf]
      %v2520 = vld [vmem:[%s2497 + $0x58] sm:$0xf]
      %v2521 = vld [vmem:[%s2497 + $0x5c] sm:$0xf]
      %v2522 = vld [vmem:[%s2497 + $0x60] sm:$0xf]
      %v2523 = vld [vmem:[%s2497 + $0x64] sm:$0xf]
      %v2524 = vld [vmem:[%s2497 + $0x68] sm:$0xf]
      %v2525 = vld [vmem:[%s2497 + $0x6c] sm:$0xf]
      %v2526 = vld [vmem:[%s2497 + $0x70] sm:$0xf]
      %v2527 = vld [vmem:[%s2497 + $0x74] sm:$0xf]
      %v2528 = vld [vmem:[%s2497 + $0x78] sm:$0xf]
      %v2529 = vld [vmem:[%s2497 + $0x7c] sm:$0xf]
      %v2530 = vld [vmem:[%s2497 + $0x80] sm:$0xf]
      %v2531 = vld [vmem:[%s2497 + $0x84] sm:$0xf]
      %v2532 = vld [vmem:[%s2497 + $0x88] sm:$0xf]
      %v2533 = vld [vmem:[%s2497 + $0x8c] sm:$0xf]
      %v2534 = vld [vmem:[%s2497 + $0x90] sm:$0xf]
      %v2535 = vld [vmem:[%s2497 + $0x94] sm:$0xf]
      %v2536 = vld [vmem:[%s2497 + $0x98] sm:$0xf]
      %v2537 = vld [vmem:[%s2497 + $0x9c] sm:$0xf]
      %v2538 = vld [vmem:[%s2497 + $0xa0] sm:$0xf]
      %v2539 = vld [vmem:[%s2497 + $0xa4] sm:$0xf]
      %v2540 = vld [vmem:[%s2497 + $0xa8] sm:$0xf]
      %v2541 = vld [vmem:[%s2497 + $0xac] sm:$0xf]
      %v2542 = vld [vmem:[%s2497 + $0xb0] sm:$0xf]
      %v2543 = vld [vmem:[%s2497 + $0xb4] sm:$0xf]
      %v2544 = vld [vmem:[%s2497 + $0xb8] sm:$0xf]
      %v2545 = vld [vmem:[%s2497 + $0xbc] sm:$0xf]
      %v2594 = vunpack.c.l.b16 %v2498
      %v2595 = vunpack.c.l.b16 %v2499
      %v2596 = vunpack.c.l.b16 %v2500
      %v2597 = vunpack.c.l.b16 %v2501
      %v2598 = vunpack.c.l.b16 %v2502
      %v2599 = vunpack.c.l.b16 %v2503
      %v2600 = vunpack.c.l.b16 %v2504
      %v2601 = vunpack.c.l.b16 %v2505
      %v2602 = vunpack.c.l.b16 %v2506
      %v2603 = vunpack.c.l.b16 %v2507
      %v2604 = vunpack.c.l.b16 %v2508
      %v2605 = vunpack.c.l.b16 %v2509
      %v2606 = vunpack.c.l.b16 %v2510
      %v2607 = vunpack.c.l.b16 %v2511
      %v2608 = vunpack.c.l.b16 %v2512
      %v2609 = vunpack.c.l.b16 %v2513
      %v2610 = vunpack.c.l.b16 %v2514
      %v2611 = vunpack.c.l.b16 %v2515
      %v2612 = vunpack.c.l.b16 %v2516
      %v2613 = vunpack.c.l.b16 %v2517
      %v2614 = vunpack.c.l.b16 %v2518
      %v2615 = vunpack.c.l.b16 %v2519
      %v2616 = vunpack.c.l.b16 %v2520
      %v2617 = vunpack.c.l.b16 %v2521
      %v2618 = vunpack.c.l.b16 %v2522
      %v2619 = vunpack.c.l.b16 %v2523
      %v2620 = vunpack.c.l.b16 %v2524
      %v2621 = vunpack.c.l.b16 %v2525
      %v2622 = vunpack.c.l.b16 %v2526
      %v2623 = vunpack.c.l.b16 %v2527
      %v2624 = vunpack.c.l.b16 %v2528
      %v2625 = vunpack.c.l.b16 %v2529
      %v2626 = vunpack.c.l.b16 %v2530
      %v2627 = vunpack.c.l.b16 %v2531
      %v2628 = vunpack.c.l.b16 %v2532
      %v2629 = vunpack.c.l.b16 %v2533
      %v2630 = vunpack.c.l.b16 %v2534
      %v2631 = vunpack.c.l.b16 %v2535
      %v2632 = vunpack.c.l.b16 %v2536
      %v2633 = vunpack.c.l.b16 %v2537
      %v2634 = vunpack.c.l.b16 %v2538
      %v2635 = vunpack.c.l.b16 %v2539
      %v2636 = vunpack.c.l.b16 %v2540
      %v2637 = vunpack.c.l.b16 %v2541
      %v2638 = vunpack.c.l.b16 %v2542
      %v2639 = vunpack.c.l.b16 %v2543
      %v2640 = vunpack.c.l.b16 %v2544
      %v2641 = vunpack.c.l.b16 %v2545
      %v2642 = vpack.c.b16 %v2595, %v2594
      %v2643 = vpack.c.b16 %v2597, %v2596
      %v2644 = vpack.c.b16 %v2599, %v2598
      %v2645 = vpack.c.b16 %v2601, %v2600
      %v2646 = vpack.c.b16 %v2603, %v2602
      %v2647 = vpack.c.b16 %v2605, %v2604
      %v2648 = vpack.c.b16 %v2607, %v2606
      %v2649 = vpack.c.b16 %v2609, %v2608
      %v2650 = vpack.c.b16 %v2611, %v2610
      %v2651 = vpack.c.b16 %v2613, %v2612
      %v2652 = vpack.c.b16 %v2615, %v2614
      %v2653 = vpack.c.b16 %v2617, %v2616
      %v2654 = vpack.c.b16 %v2619, %v2618
      %v2655 = vpack.c.b16 %v2621, %v2620
      %v2656 = vpack.c.b16 %v2623, %v2622
      %v2657 = vpack.c.b16 %v2625, %v2624
      %v2658 = vpack.c.b16 %v2627, %v2626
      %v2659 = vpack.c.b16 %v2629, %v2628
      %v2660 = vpack.c.b16 %v2631, %v2630
      %v2661 = vpack.c.b16 %v2633, %v2632
      %v2662 = vpack.c.b16 %v2635, %v2634
      %v2663 = vpack.c.b16 %v2637, %v2636
      %v2664 = vpack.c.b16 %v2639, %v2638
      %v2665 = vpack.c.b16 %v2641, %v2640
      %2690 = vmatprep.subr.bf16.mxu0 0
      %2691 = vmatpush1.bf16.msra.mxu0 %v2642
      %2692 = vmatprep.subr.bf16.mxu0 0
      %2693 = vmatpush1.bf16.msra.mxu0 %v2643
      %2694 = vmatprep.subr.bf16.mxu0 0
      %2695 = vmatpush1.bf16.msra.mxu0 %v2644
      %2696 = vmatprep.subr.bf16.mxu0 0
      %2697 = vmatpush1.bf16.msra.mxu0 %v2645
      %2698 = vmatprep.subr.bf16.mxu0 0
      %2699 = vmatpush1.bf16.msra.mxu0 %v2646
      %2700 = vmatprep.subr.bf16.mxu0 0
      %2701 = vmatpush1.bf16.msra.mxu0 %v2647
      %2702 = vmatprep.subr.bf16.mxu0 0
      %2703 = vmatpush1.bf16.msra.mxu0 %v2648
      %2704 = vmatprep.subr.bf16.mxu0 0
      %2705 = vmatpush1.bf16.msra.mxu0 %v2649
      %2706 = vmatprep.subr.bf16.mxu0 0
      %2707 = vmatpush1.bf16.msra.mxu0 %v2650
      %2708 = vmatprep.subr.bf16.mxu0 0
      %2709 = vmatpush1.bf16.msra.mxu0 %v2651
      %2710 = vmatprep.subr.bf16.mxu0 0
      %2711 = vmatpush1.bf16.msra.mxu0 %v2652
      %2712 = vmatprep.subr.bf16.mxu0 0
      %2713 = vmatpush1.bf16.msra.mxu0 %v2653
      %2714 = vmatprep.subr.bf16.mxu0 0
      %2715 = vmatpush1.bf16.msra.mxu0 %v2654
      %2716 = vmatprep.subr.bf16.mxu0 0
      %2717 = vmatpush1.bf16.msra.mxu0 %v2655
      %2718 = vmatprep.subr.bf16.mxu0 0
      %2719 = vmatpush1.bf16.msra.mxu0 %v2656
      %2720 = vmatprep.subr.bf16.mxu0 0
      %2721 = vmatpush1.bf16.msra.mxu0 %v2657
      %2722 = vmatprep.mubr.bf16.mxu0 %v2450
      %2723 = vmatmul.mubr.bf16.gmra.mrb[0].mxu0 %v2449
      %v2724 = vpop.f32.mrb[0].mxu0
      %v2725 = vadd.f32 0.0, %v2724
      %v2726 = vpop.f32.mrb[0].mxu0
      %v2727 = vpop.f32.mrb[0].mxu0
      %v2728 = vadd.f32 0.0, %v2727
      %v2729 = vpop.f32.mrb[0].mxu0
      %2730 = vmatprep.mubr.bf16.mxu0 %v2453
      %2731 = vmatmul.mubr.bf16.gmra.mrb[0].mxu0 %v2452
      %v2732 = vpop.f32.mrb[0].mxu0
      %v2733 = vadd.f32 0.0, %v2732
      %v2734 = vpop.f32.mrb[0].mxu0
      %v2735 = vpop.f32.mrb[0].mxu0
      %v2736 = vadd.f32 0.0, %v2735
      %v2737 = vpop.f32.mrb[0].mxu0
      %2738 = vmatprep.mubr.bf16.mxu0 %v2456
      %2739 = vmatmul.mubr.bf16.gmra.mrb[0].mxu0 %v2455
      %v2740 = vpop.f32.mrb[0].mxu0
      %v2741 = vadd.f32 0.0, %v2740
      %v2742 = vpop.f32.mrb[0].mxu0
      %v2743 = vpop.f32.mrb[0].mxu0
      %v2744 = vadd.f32 0.0, %v2743
      %v2745 = vpop.f32.mrb[0].mxu0
      %2746 = vmatprep.mubr.bf16.mxu0 %v2459
      %2747 = vmatmul.mubr.bf16.gmra.mrb[0].mxu0 %v2458
      %v2748 = vpop.f32.mrb[0].mxu0
      %v2749 = vadd.f32 0.0, %v2748
      %v2750 = vpop.f32.mrb[0].mxu0
      %v2751 = vpop.f32.mrb[0].mxu0
      %v2752 = vadd.f32 0.0, %v2751
      %v2753 = vpop.f32.mrb[0].mxu0
      %2754 = vmatprep.mubr.bf16.mxu0 %v2462
      %2755 = vmatmul.mubr.bf16.gmra.mrb[0].mxu0 %v2461
      %v2756 = vpop.f32.mrb[0].mxu0
      %v2757 = vadd.f32 0.0, %v2756
      %v2758 = vpop.f32.mrb[0].mxu0
      %v2759 = vpop.f32.mrb[0].mxu0
      %v2760 = vadd.f32 0.0, %v2759
      %v2761 = vpop.f32.mrb[0].mxu0
      %2762 = vmatprep.mubr.bf16.mxu0 %v2465
      %2763 = vmatmul.mubr.bf16.gmra.mrb[0].mxu0 %v2464
      %v2764 = vpop.f32.mrb[0].mxu0
      %v2765 = vadd.f32 0.0, %v2764
      %v2766 = vpop.f32.mrb[0].mxu0
      %v2767 = vpop.f32.mrb[0].mxu0
      %v2768 = vadd.f32 0.0, %v2767
      %v2769 = vpop.f32.mrb[0].mxu0
      %2770 = vmatprep.mubr.bf16.mxu0 %v2468
      %2771 = vmatmul.mubr.bf16.gmra.mrb[0].mxu0 %v2467
      %v2772 = vpop.f32.mrb[0].mxu0
      %v2773 = vadd.f32 0.0, %v2772
      %v2774 = vpop.f32.mrb[0].mxu0
      %v2775 = vpop.f32.mrb[0].mxu0
      %v2776 = vadd.f32 0.0, %v2775
      %v2777 = vpop.f32.mrb[0].mxu0
      %2778 = vmatprep.mubr.bf16.mxu0 %v2471
      %2779 = vmatmul.mubr.bf16.gmra.mrb[0].mxu0 %v2470
      %v2780 = vpop.f32.mrb[0].mxu0
      %v2781 = vadd.f32 0.0, %v2780
      %v2782 = vpop.f32.mrb[0].mxu0
      %v2783 = vpop.f32.mrb[0].mxu0
      %v2784 = vadd.f32 0.0, %v2783
      %v2785 = vpop.f32.mrb[0].mxu0
      %2786 = vmatprep.mubr.bf16.mxu0 %v2474
      %2787 = vmatmul.mubr.bf16.gmra.mrb[0].mxu0 %v2473
      %v2788 = vpop.f32.mrb[0].mxu0
      %v2789 = vadd.f32 0.0, %v2788
      %v2790 = vpop.f32.mrb[0].mxu0
      %v2791 = vpop.f32.mrb[0].mxu0
      %v2792 = vadd.f32 0.0, %v2791
      %v2793 = vpop.f32.mrb[0].mxu0
      %2794 = vmatprep.mubr.bf16.mxu0 %v2477
      %2795 = vmatmul.mubr.bf16.gmra.mrb[0].mxu0 %v2476
      %v2796 = vpop.f32.mrb[0].mxu0
      %v2797 = vadd.f32 0.0, %v2796
      %v2798 = vpop.f32.mrb[0].mxu0
      %v2799 = vpop.f32.mrb[0].mxu0
      %v2800 = vadd.f32 0.0, %v2799
      %v2801 = vpop.f32.mrb[0].mxu0
      %2802 = vmatprep.mubr.bf16.mxu0 %v2480
      %2803 = vmatmul.mubr.bf16.gmra.mrb[0].mxu0 %v2479
      %v2804 = vpop.f32.mrb[0].mxu0
      %v2805 = vadd.f32 0.0, %v2804
      %v2806 = vpop.f32.mrb[0].mxu0
      %v2807 = vpop.f32.mrb[0].mxu0
      %v2808 = vadd.f32 0.0, %v2807
      %v2809 = vpop.f32.mrb[0].mxu0
      %2810 = vmatprep.mubr.bf16.mxu0 %v2483
      %2811 = vmatmul.mubr.bf16.gmra.mrb[0].mxu0 %v2482
      %v2812 = vpop.f32.mrb[0].mxu0
      %v2813 = vadd.f32 0.0, %v2812
      %v2814 = vpop.f32.mrb[0].mxu0
      %v2815 = vpop.f32.mrb[0].mxu0
      %v2816 = vadd.f32 0.0, %v2815
      %v2817 = vpop.f32.mrb[0].mxu0
      %2818 = vmatprep.mubr.bf16.mxu0 %v2486
      %2819 = vmatmul.mubr.bf16.gmra.mrb[0].mxu0 %v2485
      %v2820 = vpop.f32.mrb[0].mxu0
      %v2821 = vadd.f32 0.0, %v2820
      %v2822 = vpop.f32.mrb[0].mxu0
      %v2823 = vpop.f32.mrb[0].mxu0
      %v2824 = vadd.f32 0.0, %v2823
      %v2825 = vpop.f32.mrb[0].mxu0
      %2826 = vmatprep.mubr.bf16.mxu0 %v2489
      %2827 = vmatmul.mubr.bf16.gmra.mrb[0].mxu0 %v2488
      %v2828 = vpop.f32.mrb[0].mxu0
      %v2829 = vadd.f32 0.0, %v2828
      %v2830 = vpop.f32.mrb[0].mxu0
      %v2831 = vpop.f32.mrb[0].mxu0
      %v2832 = vadd.f32 0.0, %v2831
      %v2833 = vpop.f32.mrb[0].mxu0
      %2834 = vmatprep.mubr.bf16.mxu0 %v2492
      %2835 = vmatmul.mubr.bf16.gmra.mrb[0].mxu0 %v2491
      %v2836 = vpop.f32.mrb[0].mxu0
      %v2837 = vadd.f32 0.0, %v2836
      %v2838 = vpop.f32.mrb[0].mxu0
      %v2839 = vpop.f32.mrb[0].mxu0
      %v2840 = vadd.f32 0.0, %v2839
      %v2841 = vpop.f32.mrb[0].mxu0
      %2842 = vmatprep.mubr.bf16.mxu0 %v2495
      %2843 = vmatmul.mubr.bf16.gmra.mrb[0].mxu0 %v2494
      %v2844 = vpop.f32.mrb[0].mxu0
      %v2845 = vadd.f32 0.0, %v2844
      %v2846 = vpop.f32.mrb[0].mxu0
      %v2847 = vpop.f32.mrb[0].mxu0
      %v2848 = vadd.f32 0.0, %v2847
      %v2849 = vpop.f32.mrb[0].mxu0
      %2850 = vdwg.mxu0
      %2851 = vmatprep.subr.bf16.mxu0 0
      %2852 = vmatpush1.bf16.msra.mxu0 %v2658
      %2853 = vmatprep.subr.bf16.mxu0 0
      %2854 = vmatpush1.bf16.msra.mxu0 %v2659
      %2855 = vmatprep.subr.bf16.mxu0 0
      %2856 = vmatpush1.bf16.msra.mxu0 %v2660
      %2857 = vmatprep.subr.bf16.mxu0 0
      %2858 = vmatpush1.bf16.msra.mxu0 %v2661
      %2859 = vmatprep.subr.bf16.mxu0 0
      %2860 = vmatpush1.bf16.msra.mxu0 %v2662
      %2861 = vmatprep.subr.bf16.mxu0 0
      %2862 = vmatpush1.bf16.msra.mxu0 %v2663
      %2863 = vmatprep.subr.bf16.mxu0 0
      %2864 = vmatpush1.bf16.msra.mxu0 %v2664
      %2865 = vmatprep.subr.bf16.mxu0 0
      %2866 = vmatpush1.bf16.msra.mxu0 %v2665
      %2867 = vmatprep.subr.bf16.mxu0 0
      %2868 = vmatpush1.bf16.msra.mxu0 0
      %2869 = vmatprep.subr.bf16.mxu0 0
      %2870 = vmatpush1.bf16.msra.mxu0 0
      %2871 = vmatprep.subr.bf16.mxu0 0
      %2872 = vmatpush1.bf16.msra.mxu0 0
      %2873 = vmatprep.subr.bf16.mxu0 0
      %2874 = vmatpush1.bf16.msra.mxu0 0
      %2875 = vmatprep.subr.bf16.mxu0 0
      %2876 = vmatpush1.bf16.msra.mxu0 0
      %2877 = vmatprep.subr.bf16.mxu0 0
      %2878 = vmatpush1.bf16.msra.mxu0 0
      %2879 = vmatprep.subr.bf16.mxu0 0
      %2880 = vmatpush1.bf16.msra.mxu0 0
      %2881 = vmatprep.subr.bf16.mxu0 0
      %2882 = vmatpush1.bf16.msra.mxu0 0
      %2883 = vmatprep.mubr.bf16.mxu0 0
      %2884 = vmatmul.mubr.bf16.gmra.mrb[0].mxu0 %v2451
      %v2885 = vpop.f32.mrb[0].mxu0
      %v2886 = vadd.f32 %v2725, %v2885
      %v2887 = vpop.f32.mrb[0].mxu0
      %v2888 = vpop.f32.mrb[0].mxu0
      %v2889 = vadd.f32 %v2728, %v2888
      %v2890 = vpop.f32.mrb[0].mxu0
      %2891 = vmatprep.mubr.bf16.mxu0 0
      %2892 = vmatmul.mubr.bf16.gmra.mrb[0].mxu0 %v2454
      %v2893 = vpop.f32.mrb[0].mxu0
      %v2894 = vadd.f32 %v2733, %v2893
      %v2895 = vpop.f32.mrb[0].mxu0
      %v2896 = vpop.f32.mrb[0].mxu0
      %v2897 = vadd.f32 %v2736, %v2896
      %v2898 = vpop.f32.mrb[0].mxu0
      %2899 = vmatprep.mubr.bf16.mxu0 0
      %2900 = vmatmul.mubr.bf16.gmra.mrb[0].mxu0 %v2457
      %v2901 = vpop.f32.mrb[0].mxu0
      %v2902 = vadd.f32 %v2741, %v2901
      %v2903 = vpop.f32.mrb[0].mxu0
      %v2904 = vpop.f32.mrb[0].mxu0
      %v2905 = vadd.f32 %v2744, %v2904
      %v2906 = vpop.f32.mrb[0].mxu0
      %2907 = vmatprep.mubr.bf16.mxu0 0
      %2908 = vmatmul.mubr.bf16.gmra.mrb[0].mxu0 %v2460
      %v2909 = vpop.f32.mrb[0].mxu0
      %v2910 = vadd.f32 %v2749, %v2909
      %v2911 = vpop.f32.mrb[0].mxu0
      %v2912 = vpop.f32.mrb[0].mxu0
      %v2913 = vadd.f32 %v2752, %v2912
      %v2914 = vpop.f32.mrb[0].mxu0
      %2915 = vmatprep.mubr.bf16.mxu0 0
      %2916 = vmatmul.mubr.bf16.gmra.mrb[0].mxu0 %v2463
      %v2917 = vpop.f32.mrb[0].mxu0
      %v2918 = vadd.f32 %v2757, %v2917
      %v2919 = vpop.f32.mrb[0].mxu0
      %v2920 = vpop.f32.mrb[0].mxu0
      %v2921 = vadd.f32 %v2760, %v2920
      %v2922 = vpop.f32.mrb[0].mxu0
      %2923 = vmatprep.mubr.bf16.mxu0 0
      %2924 = vmatmul.mubr.bf16.gmra.mrb[0].mxu0 %v2466
      %v2925 = vpop.f32.mrb[0].mxu0
      %v2926 = vadd.f32 %v2765, %v2925
      %v2927 = vpop.f32.mrb[0].mxu0
      %v2928 = vpop.f32.mrb[0].mxu0
      %v2929 = vadd.f32 %v2768, %v2928
      %v2930 = vpop.f32.mrb[0].mxu0
      %2931 = vmatprep.mubr.bf16.mxu0 0
      %2932 = vmatmul.mubr.bf16.gmra.mrb[0].mxu0 %v2469
      %v2933 = vpop.f32.mrb[0].mxu0
      %v2934 = vadd.f32 %v2773, %v2933
      %v2935 = vpop.f32.mrb[0].mxu0
      %v2936 = vpop.f32.mrb[0].mxu0
      %v2937 = vadd.f32 %v2776, %v2936
      %v2938 = vpop.f32.mrb[0].mxu0
      %2939 = vmatprep.mubr.bf16.mxu0 0
      %2940 = vmatmul.mubr.bf16.gmra.mrb[0].mxu0 %v2472
      %v2941 = vpop.f32.mrb[0].mxu0
      %v2942 = vadd.f32 %v2781, %v2941
      %v2943 = vpop.f32.mrb[0].mxu0
      %v2944 = vpop.f32.mrb[0].mxu0
      %v2945 = vadd.f32 %v2784, %v2944
      %v2946 = vpop.f32.mrb[0].mxu0
      %2947 = vmatprep.mubr.bf16.mxu0 0
      %2948 = vmatmul.mubr.bf16.gmra.mrb[0].mxu0 %v2475
      %v2949 = vpop.f32.mrb[0].mxu0
      %v2950 = vadd.f32 %v2789, %v2949
      %v2951 = vpop.f32.mrb[0].mxu0
      %v2952 = vpop.f32.mrb[0].mxu0
      %v2953 = vadd.f32 %v2792, %v2952
      %v2954 = vpop.f32.mrb[0].mxu0
      %2955 = vmatprep.mubr.bf16.mxu0 0
      %2956 = vmatmul.mubr.bf16.gmra.mrb[0].mxu0 %v2478
      %v2957 = vpop.f32.mrb[0].mxu0
      %v2958 = vadd.f32 %v2797, %v2957
      %v2959 = vpop.f32.mrb[0].mxu0
      %v2960 = vpop.f32.mrb[0].mxu0
      %v2961 = vadd.f32 %v2800, %v2960
      %v2962 = vpop.f32.mrb[0].mxu0
      %2963 = vmatprep.mubr.bf16.mxu0 0
      %2964 = vmatmul.mubr.bf16.gmra.mrb[0].mxu0 %v2481
      %v2965 = vpop.f32.mrb[0].mxu0
      %v2966 = vadd.f32 %v2805, %v2965
      %v2967 = vpop.f32.mrb[0].mxu0
      %v2968 = vpop.f32.mrb[0].mxu0
      %v2969 = vadd.f32 %v2808, %v2968
      %v2970 = vpop.f32.mrb[0].mxu0
      %2971 = vmatprep.mubr.bf16.mxu0 0
      %2972 = vmatmul.mubr.bf16.gmra.mrb[0].mxu0 %v2484
      %v2973 = vpop.f32.mrb[0].mxu0
      %v2974 = vadd.f32 %v2813, %v2973
      %v2975 = vpop.f32.mrb[0].mxu0
      %v2976 = vpop.f32.mrb[0].mxu0
      %v2977 = vadd.f32 %v2816, %v2976
      %v2978 = vpop.f32.mrb[0].mxu0
      %2979 = vmatprep.mubr.bf16.mxu0 0
      %2980 = vmatmul.mubr.bf16.gmra.mrb[0].mxu0 %v2487
      %v2981 = vpop.f32.mrb[0].mxu0
      %v2982 = vadd.f32 %v2821, %v2981
      %v2983 = vpop.f32.mrb[0].mxu0
      %v2984 = vpop.f32.mrb[0].mxu0
      %v2985 = vadd.f32 %v2824, %v2984
      %v2986 = vpop.f32.mrb[0].mxu0
      %2987 = vmatprep.mubr.bf16.mxu0 0
      %2988 = vmatmul.mubr.bf16.gmra.mrb[0].mxu0 %v2490
      %v2989 = vpop.f32.mrb[0].mxu0
      %v2990 = vadd.f32 %v2829, %v2989
      %v2991 = vpop.f32.mrb[0].mxu0
      %v2992 = vpop.f32.mrb[0].mxu0
      %v2993 = vadd.f32 %v2832, %v2992
      %v2994 = vpop.f32.mrb[0].mxu0
      %2995 = vmatprep.mubr.bf16.mxu0 0
      %2996 = vmatmul.mubr.bf16.gmra.mrb[0].mxu0 %v2493
      %v2997 = vpop.f32.mrb[0].mxu0
      %v2998 = vadd.f32 %v2837, %v2997
      %v2999 = vpop.f32.mrb[0].mxu0
      %v3000 = vpop.f32.mrb[0].mxu0
      %v3001 = vadd.f32 %v2840, %v3000
      %v3002 = vpop.f32.mrb[0].mxu0
      %3003 = vmatprep.mubr.bf16.mxu0 0
      %3004 = vmatmul.mubr.bf16.gmra.mrb[0].mxu0 %v2496
      %v3005 = vpop.f32.mrb[0].mxu0
      %v3006 = vadd.f32 %v2845, %v3005
      %v3007 = vpop.f32.mrb[0].mxu0
      %v3008 = vpop.f32.mrb[0].mxu0
      %v3009 = vadd.f32 %v2848, %v3008
      %v3010 = vpop.f32.mrb[0].mxu0
      %3011 = vdwg.mxu0
      %v3012 = vadd.f32 %v2416, %v2886
      %v3013 = vadd.f32 %v2417, %v2889
      %v3014 = vadd.f32 %v2418, %v2894
      %v3015 = vadd.f32 %v2419, %v2897
      %v3016 = vadd.f32 %v2420, %v2902
      %v3017 = vadd.f32 %v2421, %v2905
      %v3018 = vadd.f32 %v2422, %v2910
      %v3019 = vadd.f32 %v2423, %v2913
      %v3020 = vadd.f32 %v2424, %v2918
      %v3021 = vadd.f32 %v2425, %v2921
      %v3022 = vadd.f32 %v2426, %v2926
      %v3023 = vadd.f32 %v2427, %v2929
      %v3024 = vadd.f32 %v2428, %v2934
      %v3025 = vadd.f32 %v2429, %v2937
      %v3026 = vadd.f32 %v2430, %v2942
      %v3027 = vadd.f32 %v2431, %v2945
      %v3028 = vadd.f32 %v2432, %v2950
      %v3029 = vadd.f32 %v2433, %v2953
      %v3030 = vadd.f32 %v2434, %v2958
      %v3031 = vadd.f32 %v2435, %v2961
      %v3032 = vadd.f32 %v2436, %v2966
      %v3033 = vadd.f32 %v2437, %v2969
      %v3034 = vadd.f32 %v2438, %v2974
      %v3035 = vadd.f32 %v2439, %v2977
      %v3036 = vadd.f32 %v2440, %v2982
      %v3037 = vadd.f32 %v2441, %v2985
      %v3038 = vadd.f32 %v2442, %v2990
      %v3039 = vadd.f32 %v2443, %v2993
      %v3040 = vadd.f32 %v2444, %v2998
      %v3041 = vadd.f32 %v2445, %v3001
      %v3042 = vadd.f32 %v2446, %v3006
      %v3043 = vadd.f32 %v2447, %v3009
      %3044 = vst [vmem:[#allocation3] sm:$0xff] %v3012
      %3045 = vst [vmem:[#allocation3 + $0x8] sm:$0xff] %v3013
      %3046 = vst [vmem:[#allocation3 + $0x10] sm:$0xff] %v3014
      %3047 = vst [vmem:[#allocation3 + $0x18] sm:$0xff] %v3015
      %3048 = vst [vmem:[#allocation3 + $0x20] sm:$0xff] %v3016
      %3049 = vst [vmem:[#allocation3 + $0x28] sm:$0xff] %v3017
      %3050 = vst [vmem:[#allocation3 + $0x30] sm:$0xff] %v3018
      %3051 = vst [vmem:[#allocation3 + $0x38] sm:$0xff] %v3019
      %3052 = vst [vmem:[#allocation3 + $0x40] sm:$0xff] %v3020
      %3053 = vst [vmem:[#allocation3 + $0x48] sm:$0xff] %v3021
      %3054 = vst [vmem:[#allocation3 + $0x50] sm:$0xff] %v3022
      %3055 = vst [vmem:[#allocation3 + $0x58] sm:$0xff] %v3023
      %3056 = vst [vmem:[#allocation3 + $0x60] sm:$0xff] %v3024
      %3057 = vst [vmem:[#allocation3 + $0x68] sm:$0xff] %v3025
      %3058 = vst [vmem:[#allocation3 + $0x70] sm:$0xff] %v3026
      %3059 = vst [vmem:[#allocation3 + $0x78] sm:$0xff] %v3027
      %3060 = vst [vmem:[#allocation3 + $0x80] sm:$0xff] %v3028
      %3061 = vst [vmem:[#allocation3 + $0x88] sm:$0xff] %v3029
      %3062 = vst [vmem:[#allocation3 + $0x90] sm:$0xff] %v3030
      %3063 = vst [vmem:[#allocation3 + $0x98] sm:$0xff] %v3031
      %3064 = vst [vmem:[#allocation3 + $0xa0] sm:$0xff] %v3032
      %3065 = vst [vmem:[#allocation3 + $0xa8] sm:$0xff] %v3033
      %3066 = vst [vmem:[#allocation3 + $0xb0] sm:$0xff] %v3034
      %3067 = vst [vmem:[#allocation3 + $0xb8] sm:$0xff] %v3035
      %3068 = vst [vmem:[#allocation3 + $0xc0] sm:$0xff] %v3036
      %3069 = vst [vmem:[#allocation3 + $0xc8] sm:$0xff] %v3037
      %3070 = vst [vmem:[#allocation3 + $0xd0] sm:$0xff] %v3038
      %3071 = vst [vmem:[#allocation3 + $0xd8] sm:$0xff] %v3039
      %3072 = vst [vmem:[#allocation3 + $0xe0] sm:$0xff] %v3040
      %3073 = vst [vmem:[#allocation3 + $0xe8] sm:$0xff] %v3041
      %3074 = vst [vmem:[#allocation3 + $0xf0] sm:$0xff] %v3042
      %3075 = vst [vmem:[#allocation3 + $0xf8] sm:$0xff] %v3043
      %v3076 = vld [vmem:[#allocation3] sm:$0xff]
      %v3077 = vld [vmem:[#allocation3 + $0x8] sm:$0xff]
      %v3078 = vld [vmem:[#allocation3 + $0x10] sm:$0xff]
      %v3079 = vld [vmem:[#allocation3 + $0x18] sm:$0xff]
      %v3080 = vld [vmem:[#allocation3 + $0x20] sm:$0xff]
      %v3081 = vld [vmem:[#allocation3 + $0x28] sm:$0xff]
      %v3082 = vld [vmem:[#allocation3 + $0x30] sm:$0xff]
      %v3083 = vld [vmem:[#allocation3 + $0x38] sm:$0xff]
      %v3084 = vld [vmem:[#allocation3 + $0x40] sm:$0xff]
      %v3085 = vld [vmem:[#allocation3 + $0x48] sm:$0xff]
      %v3086 = vld [vmem:[#allocation3 + $0x50] sm:$0xff]
      %v3087 = vld [vmem:[#allocation3 + $0x58] sm:$0xff]
      %v3088 = vld [vmem:[#allocation3 + $0x60] sm:$0xff]
      %v3089 = vld [vmem:[#allocation3 + $0x68] sm:$0xff]
      %v3090 = vld [vmem:[#allocation3 + $0x70] sm:$0xff]
      %v3091 = vld [vmem:[#allocation3 + $0x78] sm:$0xff]
      %v3092 = vld [vmem:[#allocation3 + $0x80] sm:$0xff]
      %v3093 = vld [vmem:[#allocation3 + $0x88] sm:$0xff]
      %v3094 = vld [vmem:[#allocation3 + $0x90] sm:$0xff]
      %v3095 = vld [vmem:[#allocation3 + $0x98] sm:$0xff]
      %v3096 = vld [vmem:[#allocation3 + $0xa0] sm:$0xff]
      %v3097 = vld [vmem:[#allocation3 + $0xa8] sm:$0xff]
      %v3098 = vld [vmem:[#allocation3 + $0xb0] sm:$0xff]
      %v3099 = vld [vmem:[#allocation3 + $0xb8] sm:$0xff]
      %v3100 = vld [vmem:[#allocation3 + $0xc0] sm:$0xff]
      %v3101 = vld [vmem:[#allocation3 + $0xc8] sm:$0xff]
      %v3102 = vld [vmem:[#allocation3 + $0xd0] sm:$0xff]
      %v3103 = vld [vmem:[#allocation3 + $0xd8] sm:$0xff]
      %v3104 = vld [vmem:[#allocation3 + $0xe0] sm:$0xff]
      %v3105 = vld [vmem:[#allocation3 + $0xe8] sm:$0xff]
      %v3106 = vld [vmem:[#allocation3 + $0xf0] sm:$0xff]
      %v3107 = vld [vmem:[#allocation3 + $0xf8] sm:$0xff]
      %v3108 = vld [vmem:[%s5] sm:$0x1]
      %v3110 = vlaneseq
      %v3111 = vshrl.u32 %v3110, 7
      %v3112 = vsub.s32 0, %v3111
      %v3113 = vrot.slane %v3108, %v3112
      %v3115 = vmul.f32 %v3076, %v3113
      %v3116 = vmul.f32 %v3077, %v3113
      %v3117 = vmul.f32 %v3078, %v3113
      %v3118 = vmul.f32 %v3079, %v3113
      %v3119 = vmul.f32 %v3080, %v3113
      %v3120 = vmul.f32 %v3081, %v3113
      %v3121 = vmul.f32 %v3082, %v3113
      %v3122 = vmul.f32 %v3083, %v3113
      %v3123 = vmul.f32 %v3084, %v3113
      %v3124 = vmul.f32 %v3085, %v3113
      %v3125 = vmul.f32 %v3086, %v3113
      %v3126 = vmul.f32 %v3087, %v3113
      %v3127 = vmul.f32 %v3088, %v3113
      %v3128 = vmul.f32 %v3089, %v3113
      %v3129 = vmul.f32 %v3090, %v3113
      %v3130 = vmul.f32 %v3091, %v3113
      %v3131 = vmul.f32 %v3092, %v3113
      %v3132 = vmul.f32 %v3093, %v3113
      %v3133 = vmul.f32 %v3094, %v3113
      %v3134 = vmul.f32 %v3095, %v3113
      %v3135 = vmul.f32 %v3096, %v3113
      %v3136 = vmul.f32 %v3097, %v3113
      %v3137 = vmul.f32 %v3098, %v3113
      %v3138 = vmul.f32 %v3099, %v3113
      %v3139 = vmul.f32 %v3100, %v3113
      %v3140 = vmul.f32 %v3101, %v3113
      %v3141 = vmul.f32 %v3102, %v3113
      %v3142 = vmul.f32 %v3103, %v3113
      %v3143 = vmul.f32 %v3104, %v3113
      %v3144 = vmul.f32 %v3105, %v3113
      %v3145 = vmul.f32 %v3106, %v3113
      %v3146 = vmul.f32 %v3107, %v3113
      %v3147 = vld [vmem:[%s6] sm:$0x1]
      %v3149 = vlaneseq
      %v3150 = vshrl.u32 %v3149, 7
      %v3151 = vsub.s32 0, %v3150
      %v3152 = vrot.slane %v3147, %v3151
      %v3154 = vadd.f32 %v3115, %v3152
      %v3155 = vadd.f32 %v3116, %v3152
      %v3156 = vadd.f32 %v3117, %v3152
      %v3157 = vadd.f32 %v3118, %v3152
      %v3158 = vadd.f32 %v3119, %v3152
      %v3159 = vadd.f32 %v3120, %v3152
      %v3160 = vadd.f32 %v3121, %v3152
      %v3161 = vadd.f32 %v3122, %v3152
      %v3162 = vadd.f32 %v3123, %v3152
      %v3163 = vadd.f32 %v3124, %v3152
      %v3164 = vadd.f32 %v3125, %v3152
      %v3165 = vadd.f32 %v3126, %v3152
      %v3166 = vadd.f32 %v3127, %v3152
      %v3167 = vadd.f32 %v3128, %v3152
      %v3168 = vadd.f32 %v3129, %v3152
      %v3169 = vadd.f32 %v3130, %v3152
      %v3170 = vadd.f32 %v3131, %v3152
      %v3171 = vadd.f32 %v3132, %v3152
      %v3172 = vadd.f32 %v3133, %v3152
      %v3173 = vadd.f32 %v3134, %v3152
      %v3174 = vadd.f32 %v3135, %v3152
      %v3175 = vadd.f32 %v3136, %v3152
      %v3176 = vadd.f32 %v3137, %v3152
      %v3177 = vadd.f32 %v3138, %v3152
      %v3178 = vadd.f32 %v3139, %v3152
      %v3179 = vadd.f32 %v3140, %v3152
      %v3180 = vadd.f32 %v3141, %v3152
      %v3181 = vadd.f32 %v3142, %v3152
      %v3182 = vadd.f32 %v3143, %v3152
      %v3183 = vadd.f32 %v3144, %v3152
      %v3184 = vadd.f32 %v3145, %v3152
      %v3185 = vadd.f32 %v3146, %v3152
      %v3186 = vmax.f32 %v3154, 0.0
      %v3187 = vmax.f32 %v3155, 0.0
      %v3188 = vmax.f32 %v3156, 0.0
      %v3189 = vmax.f32 %v3157, 0.0
      %v3190 = vmax.f32 %v3158, 0.0
      %v3191 = vmax.f32 %v3159, 0.0
      %v3192 = vmax.f32 %v3160, 0.0
      %v3193 = vmax.f32 %v3161, 0.0
      %v3194 = vmax.f32 %v3162, 0.0
      %v3195 = vmax.f32 %v3163, 0.0
      %v3196 = vmax.f32 %v3164, 0.0
      %v3197 = vmax.f32 %v3165, 0.0
      %v3198 = vmax.f32 %v3166, 0.0
      %v3199 = vmax.f32 %v3167, 0.0
      %v3200 = vmax.f32 %v3168, 0.0
      %v3201 = vmax.f32 %v3169, 0.0
      %v3202 = vmax.f32 %v3170, 0.0
      %v3203 = vmax.f32 %v3171, 0.0
      %v3204 = vmax.f32 %v3172, 0.0
      %v3205 = vmax.f32 %v3173, 0.0
      %v3206 = vmax.f32 %v3174, 0.0
      %v3207 = vmax.f32 %v3175, 0.0
      %v3208 = vmax.f32 %v3176, 0.0
      %v3209 = vmax.f32 %v3177, 0.0
      %v3210 = vmax.f32 %v3178, 0.0
      %v3211 = vmax.f32 %v3179, 0.0
      %v3212 = vmax.f32 %v3180, 0.0
      %v3213 = vmax.f32 %v3181, 0.0
      %v3214 = vmax.f32 %v3182, 0.0
      %v3215 = vmax.f32 %v3183, 0.0
      %v3216 = vmax.f32 %v3184, 0.0
      %v3217 = vmax.f32 %v3185, 0.0
      %v3218 = vpack.c.bf16 %v3187, %v3186
      %v3219 = vpack.c.bf16 %v3189, %v3188
      %v3220 = vpack.c.bf16 %v3191, %v3190
      %v3221 = vpack.c.bf16 %v3193, %v3192
      %v3222 = vpack.c.bf16 %v3195, %v3194
      %v3223 = vpack.c.bf16 %v3197, %v3196
      %v3224 = vpack.c.bf16 %v3199, %v3198
      %v3225 = vpack.c.bf16 %v3201, %v3200
      %v3226 = vpack.c.bf16 %v3203, %v3202
      %v3227 = vpack.c.bf16 %v3205, %v3204
      %v3228 = vpack.c.bf16 %v3207, %v3206
      %v3229 = vpack.c.bf16 %v3209, %v3208
      %v3230 = vpack.c.bf16 %v3211, %v3210
      %v3231 = vpack.c.bf16 %v3213, %v3212
      %v3232 = vpack.c.bf16 %v3215, %v3214
      %v3233 = vpack.c.bf16 %v3217, %v3216
      %v3234 = vld [vmem:[%s7] sm:$0xf]
      %v3235 = vld [vmem:[%s7 + $0x4] sm:$0xf]
      %v3236 = vld [vmem:[%s7 + $0x8] sm:$0xf]
      %v3237 = vld [vmem:[%s7 + $0xc] sm:$0xf]
      %v3238 = vld [vmem:[%s7 + $0x10] sm:$0xf]
      %v3239 = vld [vmem:[%s7 + $0x14] sm:$0xf]
      %v3240 = vld [vmem:[%s7 + $0x18] sm:$0xf]
      %v3241 = vld [vmem:[%s7 + $0x1c] sm:$0xf]
      %v3242 = vld [vmem:[%s7 + $0x20] sm:$0xf]
      %v3243 = vld [vmem:[%s7 + $0x24] sm:$0xf]
      %v3244 = vld [vmem:[%s7 + $0x28] sm:$0xf]
      %v3245 = vld [vmem:[%s7 + $0x2c] sm:$0xf]
      %v3246 = vld [vmem:[%s7 + $0x30] sm:$0xf]
      %v3247 = vld [vmem:[%s7 + $0x34] sm:$0xf]
      %v3248 = vld [vmem:[%s7 + $0x38] sm:$0xf]
      %v3249 = vld [vmem:[%s7 + $0x3c] sm:$0xf]
      %v3266 = vunpack.c.l.b16 %v3234
      %v3267 = vunpack.c.l.b16 %v3235
      %v3268 = vunpack.c.l.b16 %v3236
      %v3269 = vunpack.c.l.b16 %v3237
      %v3270 = vunpack.c.l.b16 %v3238
      %v3271 = vunpack.c.l.b16 %v3239
      %v3272 = vunpack.c.l.b16 %v3240
      %v3273 = vunpack.c.l.b16 %v3241
      %v3274 = vunpack.c.l.b16 %v3242
      %v3275 = vunpack.c.l.b16 %v3243
      %v3276 = vunpack.c.l.b16 %v3244
      %v3277 = vunpack.c.l.b16 %v3245
      %v3278 = vunpack.c.l.b16 %v3246
      %v3279 = vunpack.c.l.b16 %v3247
      %v3280 = vunpack.c.l.b16 %v3248
      %v3281 = vunpack.c.l.b16 %v3249
      %v3282 = vpack.c.b16 %v3267, %v3266
      %v3283 = vpack.c.b16 %v3269, %v3268
      %v3284 = vpack.c.b16 %v3271, %v3270
      %v3285 = vpack.c.b16 %v3273, %v3272
      %v3286 = vpack.c.b16 %v3275, %v3274
      %v3287 = vpack.c.b16 %v3277, %v3276
      %v3288 = vpack.c.b16 %v3279, %v3278
      %v3289 = vpack.c.b16 %v3281, %v3280
      %3298 = vmatprep.subr.bf16.mxu0 0
      %3299 = vmatpush1.bf16.msra.mxu0 %v3282
      %3300 = vmatprep.subr.bf16.mxu0 0
      %3301 = vmatpush1.bf16.msra.mxu0 %v3283
      %3302 = vmatprep.subr.bf16.mxu0 0
      %3303 = vmatpush1.bf16.msra.mxu0 %v3284
      %3304 = vmatprep.subr.bf16.mxu0 0
      %3305 = vmatpush1.bf16.msra.mxu0 %v3285
      %3306 = vmatprep.subr.bf16.mxu0 0
      %3307 = vmatpush1.bf16.msra.mxu0 %v3286
      %3308 = vmatprep.subr.bf16.mxu0 0
      %3309 = vmatpush1.bf16.msra.mxu0 %v3287
      %3310 = vmatprep.subr.bf16.mxu0 0
      %3311 = vmatpush1.bf16.msra.mxu0 %v3288
      %3312 = vmatprep.subr.bf16.mxu0 0
      %3313 = vmatpush1.bf16.msra.mxu0 %v3289
      %3314 = vmatprep.subr.bf16.mxu0 0
      %3315 = vmatpush1.bf16.msra.mxu0 0
      %3316 = vmatprep.subr.bf16.mxu0 0
      %3317 = vmatpush1.bf16.msra.mxu0 0
      %3318 = vmatprep.subr.bf16.mxu0 0
      %3319 = vmatpush1.bf16.msra.mxu0 0
      %3320 = vmatprep.subr.bf16.mxu0 0
      %3321 = vmatpush1.bf16.msra.mxu0 0
      %3322 = vmatprep.subr.bf16.mxu0 0
      %3323 = vmatpush1.bf16.msra.mxu0 0
      %3324 = vmatprep.subr.bf16.mxu0 0
      %3325 = vmatpush1.bf16.msra.mxu0 0
      %3326 = vmatprep.subr.bf16.mxu0 0
      %3327 = vmatpush1.bf16.msra.mxu0 0
      %3328 = vmatprep.subr.bf16.mxu0 0
      %3329 = vmatpush1.bf16.msra.mxu0 0
      %3330 = vmatprep.mubr.bf16.mxu0 0
      %3331 = vmatmul.mubr.bf16.gmra.mrb[0].mxu0 %v3218
      %v3332 = vpop.f32.mrb[0].mxu0
      %v3333 = vadd.f32 0.0, %v3332
      %v3334 = vpop.f32.mrb[0].mxu0
      %v3335 = vpop.f32.mrb[0].mxu0
      %v3336 = vadd.f32 0.0, %v3335
      %v3337 = vpop.f32.mrb[0].mxu0
      %3338 = vmatprep.mubr.bf16.mxu0 0
      %3339 = vmatmul.mubr.bf16.gmra.mrb[0].mxu0 %v3219
      %v3340 = vpop.f32.mrb[0].mxu0
      %v3341 = vadd.f32 0.0, %v3340
      %v3342 = vpop.f32.mrb[0].mxu0
      %v3343 = vpop.f32.mrb[0].mxu0
      %v3344 = vadd.f32 0.0, %v3343
      %v3345 = vpop.f32.mrb[0].mxu0
      %3346 = vmatprep.mubr.bf16.mxu0 0
      %3347 = vmatmul.mubr.bf16.gmra.mrb[0].mxu0 %v3220
      %v3348 = vpop.f32.mrb[0].mxu0
      %v3349 = vadd.f32 0.0, %v3348
      %v3350 = vpop.f32.mrb[0].mxu0
      %v3351 = vpop.f32.mrb[0].mxu0
      %v3352 = vadd.f32 0.0, %v3351
      %v3353 = vpop.f32.mrb[0].mxu0
      %3354 = vmatprep.mubr.bf16.mxu0 0
      %3355 = vmatmul.mubr.bf16.gmra.mrb[0].mxu0 %v3221
      %v3356 = vpop.f32.mrb[0].mxu0
      %v3357 = vadd.f32 0.0, %v3356
      %v3358 = vpop.f32.mrb[0].mxu0
      %v3359 = vpop.f32.mrb[0].mxu0
      %v3360 = vadd.f32 0.0, %v3359
      %v3361 = vpop.f32.mrb[0].mxu0
      %3362 = vmatprep.mubr.bf16.mxu0 0
      %3363 = vmatmul.mubr.bf16.gmra.mrb[0].mxu0 %v3222
      %v3364 = vpop.f32.mrb[0].mxu0
      %v3365 = vadd.f32 0.0, %v3364
      %v3366 = vpop.f32.mrb[0].mxu0
      %v3367 = vpop.f32.mrb[0].mxu0
      %v3368 = vadd.f32 0.0, %v3367
      %v3369 = vpop.f32.mrb[0].mxu0
      %3370 = vmatprep.mubr.bf16.mxu0 0
      %3371 = vmatmul.mubr.bf16.gmra.mrb[0].mxu0 %v3223
      %v3372 = vpop.f32.mrb[0].mxu0
      %v3373 = vadd.f32 0.0, %v3372
      %v3374 = vpop.f32.mrb[0].mxu0
      %v3375 = vpop.f32.mrb[0].mxu0
      %v3376 = vadd.f32 0.0, %v3375
      %v3377 = vpop.f32.mrb[0].mxu0
      %3378 = vmatprep.mubr.bf16.mxu0 0
      %3379 = vmatmul.mubr.bf16.gmra.mrb[0].mxu0 %v3224
      %v3380 = vpop.f32.mrb[0].mxu0
      %v3381 = vadd.f32 0.0, %v3380
      %v3382 = vpop.f32.mrb[0].mxu0
      %v3383 = vpop.f32.mrb[0].mxu0
      %v3384 = vadd.f32 0.0, %v3383
      %v3385 = vpop.f32.mrb[0].mxu0
      %3386 = vmatprep.mubr.bf16.mxu0 0
      %3387 = vmatmul.mubr.bf16.gmra.mrb[0].mxu0 %v3225
      %v3388 = vpop.f32.mrb[0].mxu0
      %v3389 = vadd.f32 0.0, %v3388
      %v3390 = vpop.f32.mrb[0].mxu0
      %v3391 = vpop.f32.mrb[0].mxu0
      %v3392 = vadd.f32 0.0, %v3391
      %v3393 = vpop.f32.mrb[0].mxu0
      %3394 = vmatprep.mubr.bf16.mxu0 0
      %3395 = vmatmul.mubr.bf16.gmra.mrb[0].mxu0 %v3226
      %v3396 = vpop.f32.mrb[0].mxu0
      %v3397 = vadd.f32 0.0, %v3396
      %v3398 = vpop.f32.mrb[0].mxu0
      %v3399 = vpop.f32.mrb[0].mxu0
      %v3400 = vadd.f32 0.0, %v3399
      %v3401 = vpop.f32.mrb[0].mxu0
      %3402 = vmatprep.mubr.bf16.mxu0 0
      %3403 = vmatmul.mubr.bf16.gmra.mrb[0].mxu0 %v3227
      %v3404 = vpop.f32.mrb[0].mxu0
      %v3405 = vadd.f32 0.0, %v3404
      %v3406 = vpop.f32.mrb[0].mxu0
      %v3407 = vpop.f32.mrb[0].mxu0
      %v3408 = vadd.f32 0.0, %v3407
      %v3409 = vpop.f32.mrb[0].mxu0
      %3410 = vmatprep.mubr.bf16.mxu0 0
      %3411 = vmatmul.mubr.bf16.gmra.mrb[0].mxu0 %v3228
      %v3412 = vpop.f32.mrb[0].mxu0
      %v3413 = vadd.f32 0.0, %v3412
      %v3414 = vpop.f32.mrb[0].mxu0
      %v3415 = vpop.f32.mrb[0].mxu0
      %v3416 = vadd.f32 0.0, %v3415
      %v3417 = vpop.f32.mrb[0].mxu0
      %3418 = vmatprep.mubr.bf16.mxu0 0
      %3419 = vmatmul.mubr.bf16.gmra.mrb[0].mxu0 %v3229
      %v3420 = vpop.f32.mrb[0].mxu0
      %v3421 = vadd.f32 0.0, %v3420
      %v3422 = vpop.f32.mrb[0].mxu0
      %v3423 = vpop.f32.mrb[0].mxu0
      %v3424 = vadd.f32 0.0, %v3423
      %v3425 = vpop.f32.mrb[0].mxu0
      %3426 = vmatprep.mubr.bf16.mxu0 0
      %3427 = vmatmul.mubr.bf16.gmra.mrb[0].mxu0 %v3230
      %v3428 = vpop.f32.mrb[0].mxu0
      %v3429 = vadd.f32 0.0, %v3428
      %v3430 = vpop.f32.mrb[0].mxu0
      %v3431 = vpop.f32.mrb[0].mxu0
      %v3432 = vadd.f32 0.0, %v3431
      %v3433 = vpop.f32.mrb[0].mxu0
      %3434 = vmatprep.mubr.bf16.mxu0 0
      %3435 = vmatmul.mubr.bf16.gmra.mrb[0].mxu0 %v3231
      %v3436 = vpop.f32.mrb[0].mxu0
      %v3437 = vadd.f32 0.0, %v3436
      %v3438 = vpop.f32.mrb[0].mxu0
      %v3439 = vpop.f32.mrb[0].mxu0
      %v3440 = vadd.f32 0.0, %v3439
      %v3441 = vpop.f32.mrb[0].mxu0
      %3442 = vmatprep.mubr.bf16.mxu0 0
      %3443 = vmatmul.mubr.bf16.gmra.mrb[0].mxu0 %v3232
      %v3444 = vpop.f32.mrb[0].mxu0
      %v3445 = vadd.f32 0.0, %v3444
      %v3446 = vpop.f32.mrb[0].mxu0
      %v3447 = vpop.f32.mrb[0].mxu0
      %v3448 = vadd.f32 0.0, %v3447
      %v3449 = vpop.f32.mrb[0].mxu0
      %3450 = vmatprep.mubr.bf16.mxu0 0
      %3451 = vmatmul.mubr.bf16.gmra.mrb[0].mxu0 %v3233
      %v3452 = vpop.f32.mrb[0].mxu0
      %v3453 = vadd.f32 0.0, %v3452
      %v3454 = vpop.f32.mrb[0].mxu0
      %v3455 = vpop.f32.mrb[0].mxu0
      %v3456 = vadd.f32 0.0, %v3455
      %v3457 = vpop.f32.mrb[0].mxu0
      %3458 = vdwg.mxu0
      %v3459 = vld [vmem:[%s8] sm:$0x1]
      %v3461 = vlaneseq
      %v3462 = vshrl.u32 %v3461, 7
      %v3463 = vsub.s32 0, %v3462
      %v3464 = vrot.slane %v3459, %v3463
      %v3466 = vmul.f32 %v3333, %v3464
      %v3467 = vmul.f32 %v3336, %v3464
      %v3468 = vmul.f32 %v3341, %v3464
      %v3469 = vmul.f32 %v3344, %v3464
      %v3470 = vmul.f32 %v3349, %v3464
      %v3471 = vmul.f32 %v3352, %v3464
      %v3472 = vmul.f32 %v3357, %v3464
      %v3473 = vmul.f32 %v3360, %v3464
      %v3474 = vmul.f32 %v3365, %v3464
      %v3475 = vmul.f32 %v3368, %v3464
      %v3476 = vmul.f32 %v3373, %v3464
      %v3477 = vmul.f32 %v3376, %v3464
      %v3478 = vmul.f32 %v3381, %v3464
      %v3479 = vmul.f32 %v3384, %v3464
      %v3480 = vmul.f32 %v3389, %v3464
      %v3481 = vmul.f32 %v3392, %v3464
      %v3482 = vmul.f32 %v3397, %v3464
      %v3483 = vmul.f32 %v3400, %v3464
      %v3484 = vmul.f32 %v3405, %v3464
      %v3485 = vmul.f32 %v3408, %v3464
      %v3486 = vmul.f32 %v3413, %v3464
      %v3487 = vmul.f32 %v3416, %v3464
      %v3488 = vmul.f32 %v3421, %v3464
      %v3489 = vmul.f32 %v3424, %v3464
      %v3490 = vmul.f32 %v3429, %v3464
      %v3491 = vmul.f32 %v3432, %v3464
      %v3492 = vmul.f32 %v3437, %v3464
      %v3493 = vmul.f32 %v3440, %v3464
      %v3494 = vmul.f32 %v3445, %v3464
      %v3495 = vmul.f32 %v3448, %v3464
      %v3496 = vmul.f32 %v3453, %v3464
      %v3497 = vmul.f32 %v3456, %v3464
      %v3498 = vld [vmem:[%s9] sm:$0x1]
      %v3500 = vlaneseq
      %v3501 = vshrl.u32 %v3500, 7
      %v3502 = vsub.s32 0, %v3501
      %v3503 = vrot.slane %v3498, %v3502
      %v3505 = vadd.f32 %v3466, %v3503
      %v3506 = vadd.f32 %v3467, %v3503
      %v3507 = vadd.f32 %v3468, %v3503
      %v3508 = vadd.f32 %v3469, %v3503
      %v3509 = vadd.f32 %v3470, %v3503
      %v3510 = vadd.f32 %v3471, %v3503
      %v3511 = vadd.f32 %v3472, %v3503
      %v3512 = vadd.f32 %v3473, %v3503
      %v3513 = vadd.f32 %v3474, %v3503
      %v3514 = vadd.f32 %v3475, %v3503
      %v3515 = vadd.f32 %v3476, %v3503
      %v3516 = vadd.f32 %v3477, %v3503
      %v3517 = vadd.f32 %v3478, %v3503
      %v3518 = vadd.f32 %v3479, %v3503
      %v3519 = vadd.f32 %v3480, %v3503
      %v3520 = vadd.f32 %v3481, %v3503
      %v3521 = vadd.f32 %v3482, %v3503
      %v3522 = vadd.f32 %v3483, %v3503
      %v3523 = vadd.f32 %v3484, %v3503
      %v3524 = vadd.f32 %v3485, %v3503
      %v3525 = vadd.f32 %v3486, %v3503
      %v3526 = vadd.f32 %v3487, %v3503
      %v3527 = vadd.f32 %v3488, %v3503
      %v3528 = vadd.f32 %v3489, %v3503
      %v3529 = vadd.f32 %v3490, %v3503
      %v3530 = vadd.f32 %v3491, %v3503
      %v3531 = vadd.f32 %v3492, %v3503
      %v3532 = vadd.f32 %v3493, %v3503
      %v3533 = vadd.f32 %v3494, %v3503
      %v3534 = vadd.f32 %v3495, %v3503
      %v3535 = vadd.f32 %v3496, %v3503
      %v3536 = vadd.f32 %v3497, %v3503
      %v3537 = vadd.f32 %v3505, %v361
      %v3538 = vadd.f32 %v3506, %v362
      %v3539 = vadd.f32 %v3507, %v363
      %v3540 = vadd.f32 %v3508, %v364
      %v3541 = vadd.f32 %v3509, %v365
      %v3542 = vadd.f32 %v3510, %v366
      %v3543 = vadd.f32 %v3511, %v367
      %v3544 = vadd.f32 %v3512, %v368
      %v3545 = vadd.f32 %v3513, %v369
      %v3546 = vadd.f32 %v3514, %v370
      %v3547 = vadd.f32 %v3515, %v371
      %v3548 = vadd.f32 %v3516, %v372
      %v3549 = vadd.f32 %v3517, %v373
      %v3550 = vadd.f32 %v3518, %v374
      %v3551 = vadd.f32 %v3519, %v375
      %v3552 = vadd.f32 %v3520, %v376
      %v3553 = vadd.f32 %v3521, %v377
      %v3554 = vadd.f32 %v3522, %v378
      %v3555 = vadd.f32 %v3523, %v379
      %v3556 = vadd.f32 %v3524, %v380
      %v3557 = vadd.f32 %v3525, %v381
      %v3558 = vadd.f32 %v3526, %v382
      %v3559 = vadd.f32 %v3527, %v383
      %v3560 = vadd.f32 %v3528, %v384
      %v3561 = vadd.f32 %v3529, %v385
      %v3562 = vadd.f32 %v3530, %v386
      %v3563 = vadd.f32 %v3531, %v387
      %v3564 = vadd.f32 %v3532, %v388
      %v3565 = vadd.f32 %v3533, %v389
      %v3566 = vadd.f32 %v3534, %v390
      %v3567 = vadd.f32 %v3535, %v391
      %v3568 = vadd.f32 %v3536, %v392
      %v3569 = vmax.f32 %v3537, 0.0
      %v3570 = vmax.f32 %v3538, 0.0
      %v3571 = vmax.f32 %v3539, 0.0
      %v3572 = vmax.f32 %v3540, 0.0
      %v3573 = vmax.f32 %v3541, 0.0
      %v3574 = vmax.f32 %v3542, 0.0
      %v3575 = vmax.f32 %v3543, 0.0
      %v3576 = vmax.f32 %v3544, 0.0
      %v3577 = vmax.f32 %v3545, 0.0
      %v3578 = vmax.f32 %v3546, 0.0
      %v3579 = vmax.f32 %v3547, 0.0
      %v3580 = vmax.f32 %v3548, 0.0
      %v3581 = vmax.f32 %v3549, 0.0
      %v3582 = vmax.f32 %v3550, 0.0
      %v3583 = vmax.f32 %v3551, 0.0
      %v3584 = vmax.f32 %v3552, 0.0
      %v3585 = vmax.f32 %v3553, 0.0
      %v3586 = vmax.f32 %v3554, 0.0
      %v3587 = vmax.f32 %v3555, 0.0
      %v3588 = vmax.f32 %v3556, 0.0
      %v3589 = vmax.f32 %v3557, 0.0
      %v3590 = vmax.f32 %v3558, 0.0
      %v3591 = vmax.f32 %v3559, 0.0
      %v3592 = vmax.f32 %v3560, 0.0
      %v3593 = vmax.f32 %v3561, 0.0
      %v3594 = vmax.f32 %v3562, 0.0
      %v3595 = vmax.f32 %v3563, 0.0
      %v3596 = vmax.f32 %v3564, 0.0
      %v3597 = vmax.f32 %v3565, 0.0
      %v3598 = vmax.f32 %v3566, 0.0
      %v3599 = vmax.f32 %v3567, 0.0
      %v3600 = vmax.f32 %v3568, 0.0
      %3601 = vst [vmem:[%s359] sm:$0xff] %v3569
      %3602 = vst [vmem:[%s359 + $0x8] sm:$0xff] %v3570
      %3603 = vst [vmem:[%s359 + $0x10] sm:$0xff] %v3571
      %3604 = vst [vmem:[%s359 + $0x18] sm:$0xff] %v3572
      %3605 = vst [vmem:[%s359 + $0x20] sm:$0xff] %v3573
      %3606 = vst [vmem:[%s359 + $0x28] sm:$0xff] %v3574
      %3607 = vst [vmem:[%s359 + $0x30] sm:$0xff] %v3575
      %3608 = vst [vmem:[%s359 + $0x38] sm:$0xff] %v3576
      %3609 = vst [vmem:[%s359 + $0x40] sm:$0xff] %v3577
      %3610 = vst [vmem:[%s359 + $0x48] sm:$0xff] %v3578
      %3611 = vst [vmem:[%s359 + $0x50] sm:$0xff] %v3579
      %3612 = vst [vmem:[%s359 + $0x58] sm:$0xff] %v3580
      %3613 = vst [vmem:[%s359 + $0x60] sm:$0xff] %v3581
      %3614 = vst [vmem:[%s359 + $0x68] sm:$0xff] %v3582
      %3615 = vst [vmem:[%s359 + $0x70] sm:$0xff] %v3583
      %3616 = vst [vmem:[%s359 + $0x78] sm:$0xff] %v3584
      %3617 = vst [vmem:[%s359 + $0x80] sm:$0xff] %v3585
      %3618 = vst [vmem:[%s359 + $0x88] sm:$0xff] %v3586
      %3619 = vst [vmem:[%s359 + $0x90] sm:$0xff] %v3587
      %3620 = vst [vmem:[%s359 + $0x98] sm:$0xff] %v3588
      %3621 = vst [vmem:[%s359 + $0xa0] sm:$0xff] %v3589
      %3622 = vst [vmem:[%s359 + $0xa8] sm:$0xff] %v3590
      %3623 = vst [vmem:[%s359 + $0xb0] sm:$0xff] %v3591
      %3624 = vst [vmem:[%s359 + $0xb8] sm:$0xff] %v3592
      %3625 = vst [vmem:[%s359 + $0xc0] sm:$0xff] %v3593
      %3626 = vst [vmem:[%s359 + $0xc8] sm:$0xff] %v3594
      %3627 = vst [vmem:[%s359 + $0xd0] sm:$0xff] %v3595
      %3628 = vst [vmem:[%s359 + $0xd8] sm:$0xff] %v3596
      %3629 = vst [vmem:[%s359 + $0xe0] sm:$0xff] %v3597
      %3630 = vst [vmem:[%s359 + $0xe8] sm:$0xff] %v3598
      %3631 = vst [vmem:[%s359 + $0xf0] sm:$0xff] %v3599
      %3632 = vst [vmem:[%s359 + $0xf8] sm:$0xff] %v3600
      %p3633 = scmp.lt.s32.totalorder %s21, 1
      %s3634 = scalar_select %p3633, %s21, 1
      %s3635 = smul.addr %s3634, 32
      %s3636 = smul.addr %s3635, 8
      %s3637 = scalar_lea.vmem %s10, %s3636
      // Predicated region
      $region61: #{bottleneck_forward.1} parent=59 // pred_check
        %p3638 = pneg %p254
      $region62: #{bottleneck_forward.1} parent=59 // pred_check_branch
        %3640 = sbr.rel (%p3638) target = $region64
      $region63: #{bottleneck_forward.1} parent=59 // pred_region
        _
      $region64: #{bottleneck_forward.1} parent=59 // pred_fallthru
        _
    $region60: #{bottleneck_forward.1} parent=5 // pred_fallthru
      _
    %p3641 = scmp.le.s32.totalorder 2, %s16
    // Predicated region
    $region65: #{bottleneck_forward.1} parent=5 // pred_check
      %p3642 = pneg %p3641
    $region66: #{bottleneck_forward.1} parent=5 // pred_check_branch
      %3644 = sbr.rel (%p3642) target = $region68
    $region67: #{bottleneck_forward.1} parent=5 // pred_region
      %s3645 = ssub.s32 %s16, 2
      // Predicated region
      $region69: #{bottleneck_forward.1} parent=67 // pred_check
        %p3646 = pneg %p260
      $region70: #{bottleneck_forward.1} parent=67 // pred_check_branch
        %3648 = sbr.rel (%p3646) target = $region72
      $region71: #{bottleneck_forward.1} parent=67 // pred_region
        %p3649 = scmp.lt.s32.totalorder %s22, 1
        %s3650 = scalar_select %p3649, %s22, 1
        %s3651 = smul.addr %s3650, 32
        %s3652 = smul.addr %s3651, 8
        %s3653 = scalar_lea.vmem %s10, %s3652
      $region72: #{bottleneck_forward.1} parent=67 // pred_fallthru
        _
    $region68: #{bottleneck_forward.1} parent=5 // pred_fallthru
      _
  $region6: #{bottleneck_forward.1} parent=0 // loop_footer
    %s20 = sadd.s32 1, %s16
  $region7: #{bottleneck_forward.1} parent=0 // loop_footer_branch
    %15 = sbr.rel target = $region3
  $region8: #{bottleneck_forward.1} parent=0 // loop_exit
    _

</llo_original>
